<compile_context>
chip_gen: v7x
topology: tpu7x:2x2x1
jax: 0.10.0
libtpu: 0.0.40
codegen_flags: <defaults>
</compile_context>

<pallas_src>
import functools

import jax
import jax.numpy as jnp
from jax import lax
from jax.experimental import pallas as pl
from jax.experimental.pallas import tpu as pltpu


# ----------------------------- Pallas kernels --------------------------------

def _gelu_exact(x):
    # Matches torch.nn.functional.gelu default (erf form).
    return 0.5 * x * (1.0 + lax.erf(x * jnp.float32(0.7071067811865476)))


def _pw_kernel(x_ref, w_ref, b_ref, o_ref, *, apply_gelu):
    # x_ref: (C_in, TS)   w_ref: (C_out, C_in)   b_ref: (C_out, 1)   o_ref: (C_out, TS)
    h = jnp.dot(w_ref[...], x_ref[...], preferred_element_type=jnp.float32)
    h = h + b_ref[...]
    if apply_gelu:
        h = _gelu_exact(h)
    o_ref[...] = h.astype(o_ref.dtype)


def _pw_res_kernel(x_ref, r_ref, w_ref, b_ref, o_ref, *, apply_gelu):
    # Same as above, fused with a residual add (the spectral-conv branch).
    h = jnp.dot(w_ref[...], x_ref[...], preferred_element_type=jnp.float32)
    h = h + b_ref[...] + r_ref[...]
    if apply_gelu:
        h = _gelu_exact(h)
    o_ref[...] = h.astype(o_ref.dtype)


# ------------------------------ Pallas wrapper --------------------------------

def _round_up(v, m):
    return (v + m - 1) // m * m


def _choose_tile_s(s):
    # Lane-dense spatial tile: multiple of 128, as big as reasonable (<= 1024).
    s128 = _round_up(s, 128)
    return s128 if s128 <= 1024 else 512


def pointwise_channel_mix(x, w, b, residual=None, apply_gelu=False):
    """Fused channels-first pointwise layer.

    x        : (B, C_in, S) float32
    w        : (C_out, C_in) float32
    b        : (C_out,) float32
    residual : optional (B, C_out, S) float32
    returns  : (B, C_out, S) = [gelu]( w @ x + b [+ residual] )
    """
    x = x.astype(jnp.float32)
    w = w.astype(jnp.float32)
    B, Ci, S = x.shape
    Co = w.shape[0]

    ts = _choose_tile_s(S)
    S_pad = _round_up(S, ts)
    if S_pad != S:
        x = jnp.pad(x, ((0, 0), (0, 0), (0, S_pad - S)))
        if residual is not None:
            residual = jnp.pad(residual, ((0, 0), (0, 0), (0, S_pad - S)))
    n_s = S_pad // ts

    b_col = b.reshape(Co, 1).astype(jnp.float32)

    x_spec = pl.BlockSpec((None, Ci, ts), lambda bi, si: (bi, 0, si))
    w_spec = pl.BlockSpec((Co, Ci), lambda bi, si: (0, 0))
    b_spec = pl.BlockSpec((Co, 1), lambda bi, si: (0, 0))
    o_spec = pl.BlockSpec((None, Co, ts), lambda bi, si: (bi, 0, si))

    if residual is None:
        kernel = functools.partial(_pw_kernel, apply_gelu=apply_gelu)
        in_specs = [x_spec, w_spec, b_spec]
        args = (x, w, b_col)
    else:
        residual = residual.astype(jnp.float32)
        kernel = functools.partial(_pw_res_kernel, apply_gelu=apply_gelu)
        r_spec = pl.BlockSpec((None, Co, ts), lambda bi, si: (bi, 0, si))
        in_specs = [x_spec, r_spec, w_spec, b_spec]
        args = (x, residual, w, b_col)

    out = pl.pallas_call(
        kernel,
        out_shape=jax.ShapeDtypeStruct((B, Co, S_pad), jnp.float32),
        grid_spec=pltpu.PrefetchScalarGridSpec(
            num_scalar_prefetch=0,
            grid=(B, n_s),
            in_specs=in_specs,
            out_specs=o_spec,
        ),
        compiler_params=pltpu.CompilerParams(
            dimension_semantics=("parallel", "parallel"),
            vmem_limit_bytes=32 * 1024 * 1024,
        ),
    )(*args)
    return out[:, :, :S]


# -------------------------- SpectralConv3d (plain JAX) ------------------------
# FFT + complex mode mixing have no clean Pallas equivalent (no complex dtype in
# Mosaic); done with XLA's FFT + complex einsum.

def spectral_conv3d(x, weights, modes):
    m1, m2, m3 = modes
    w1, w2, w3, w4 = weights
    B, Ci, Dx, Dy, Dz = x.shape
    Co = w1.shape[1]

    x_ft = jnp.fft.rfftn(x, axes=(-3, -2, -1))              # (B, Ci, Dx, Dy, Dz//2+1)

    def mul(inp, w):
        return jnp.einsum('bixyz,ioxyz->boxyz', inp, w)

    out_ft = jnp.zeros((B, Co, Dx, Dy, Dz // 2 + 1), dtype=x_ft.dtype)
    out_ft = out_ft.at[:, :, :m1, :m2, :m3].set(mul(x_ft[:, :, :m1, :m2, :m3], w1))
    out_ft = out_ft.at[:, :, -m1:, :m2, :m3].set(mul(x_ft[:, :, -m1:, :m2, :m3], w2))
    out_ft = out_ft.at[:, :, :m1, -m2:, :m3].set(mul(x_ft[:, :, :m1, -m2:, :m3], w3))
    out_ft = out_ft.at[:, :, -m1:, -m2:, :m3].set(mul(x_ft[:, :, -m1:, -m2:, :m3], w4))

    return jnp.fft.irfftn(out_ft, s=(Dx, Dy, Dz), axes=(-3, -2, -1)).astype(jnp.float32)


# ------------------------------- FNO3d forward --------------------------------

def fno3d_forward(x, grid, params, *, modes, padding):
    """x: (B, X, Y, T, C0*initial_step); grid: (B, X, Y, T, 3).
    Returns (B, X, Y, T, 1, num_channels), matching FNO3d.forward."""
    B, Dx, Dy, Dt, _ = x.shape
    xg = jnp.concatenate([x, grid], axis=-1)                        # (B,X,Y,T,Cin)
    Cin = xg.shape[-1]
    width = params["fc0_w"].shape[0]

    # fc0, producing channels-first layout directly (one input transpose only).
    x_cf = jnp.transpose(xg, (0, 4, 1, 2, 3)).reshape(B, Cin, Dx * Dy * Dt)
    h = pointwise_channel_mix(x_cf, params["fc0_w"], params["fc0_b"])
    h = h.reshape(B, width, Dx, Dy, Dt)

    # pad the time axis on the right (F.pad(x, [0, padding]))
    h = jnp.pad(h, ((0, 0), (0, 0), (0, 0), (0, 0), (0, padding)))
    Tp = Dt + padding
    S = Dx * Dy * Tp

    # 4 Fourier layers: gelu(spectral(x) + W x + b)   (no gelu after the last)
    for layer in range(4):
        spec = spectral_conv3d(h, params[f"conv{layer}"], modes)    # (B,width,X,Y,Tp)
        h = pointwise_channel_mix(
            h.reshape(B, width, S),
            params[f"w{layer}_w"], params[f"w{layer}_b"],
            residual=spec.reshape(B, width, S),
            apply_gelu=(layer < 3),
        ).reshape(B, width, Dx, Dy, Tp)

    h = h[..., :Dt]                                                 # unpad
    S1 = Dx * Dy * Dt

    # fc1 + GELU and fc2, still channels-first (no NCDHW<->NDHWC round trip).
    h = pointwise_channel_mix(h.reshape(B, width, S1),
                              params["fc1_w"], params["fc1_b"], apply_gelu=True)
    out = pointwise_channel_mix(h, params["fc2_w"], params["fc2_b"])
    C0 = params["fc2_w"].shape[0]
    out = out.reshape(B, C0, Dx, Dy, Dt)
    out = jnp.transpose(out, (0, 2, 3, 4, 1))                       # channels-last
    return out[..., None, :]                                        # unsqueeze(-2)


# ------------------------------ pure-JAX reference -----------------------------

def fno3d_reference(x, grid, params, *, modes, padding):
    hp = lax.Precision.HIGHEST
    Dt = x.shape[3]
    xg = jnp.concatenate([x, grid], axis=-1)
    h = jnp.einsum('bxytc,oc->bxyto', xg, params["fc0_w"], precision=hp) + params["fc0_b"]
    h = jnp.transpose(h, (0, 4, 1, 2, 3))
    h = jnp.pad(h, ((0, 0), (0, 0), (0, 0), (0, 0), (0, padding)))
    for layer in range(4):
        x1 = spectral_conv3d(h, params[f"conv{layer}"], modes)
        x2 = (jnp.einsum('bixyz,oi->boxyz', h, params[f"w{layer}_w"], precision=hp)
              + params[f"w{layer}_b"][None, :, None, None, None])
        h = x1 + x2
        if layer < 3:
            h = jax.nn.gelu(h, approximate=False)
    h = h[..., :Dt]
    h = jnp.transpose(h, (0, 2, 3, 4, 1))
    h = jax.nn.gelu(jnp.einsum('bxytc,oc->bxyto', h, params["fc1_w"], precision=hp)
                    + params["fc1_b"], approximate=False)
    h = jnp.einsum('bxytc,oc->bxyto', h, params["fc2_w"], precision=hp) + params["fc2_b"]
    return h[..., None, :]


# ----------------------------------- main --------------------------------------

if __name__ == "__main__":
    # Small shapes consistent with the module:
    # batch=2, x=y=8, t=8, num_channels=4, initial_step=10 -> fc0 input 43 channels,
    # width=20, modes=(4,4,4), padding=6.
    B, Dx, Dy, Dt = 2, 8, 8, 8
    num_channels, initial_step = 4, 10
    width, modes, padding = 20, (4, 4, 4), 6
    m1, m2, m3 = modes
    Cin = initial_step * num_channels + 3

    key = jax.random.PRNGKey(0)
    ks = jax.random.split(key, 32)

    x = jax.random.normal(ks[0], (B, Dx, Dy, Dt, initial_step * num_channels), jnp.float32)
    grid = jax.random.uniform(ks[1], (B, Dx, Dy, Dt, 3), jnp.float32)

    def cplx(k, shape, scale):
        k1, k2 = jax.random.split(k)
        re = jax.random.uniform(k1, shape, jnp.float32)
        im = jax.random.uniform(k2, shape, jnp.float32)
        return (scale * (re + 1j * im)).astype(jnp.complex64)

    spec_scale = 1.0 / (width * width)
    params = {
        "fc0_w": jax.random.normal(ks[2], (width, Cin), jnp.float32) * 0.1,
        "fc0_b": jax.random.normal(ks[3], (width,), jnp.float32) * 0.1,
        "fc1_w": jax.random.normal(ks[4], (128, width), jnp.float32) * 0.1,
        "fc1_b": jax.random.normal(ks[5], (128,), jnp.float32) * 0.1,
        "fc2_w": jax.random.normal(ks[6], (num_channels, 128), jnp.float32) * 0.1,
        "fc2_b": jax.random.normal(ks[7], (num_channels,), jnp.float32) * 0.1,
    }
    for layer in range(4):
        base = 8 + 5 * layer
        params[f"conv{layer}"] = tuple(
            cplx(ks[base + j], (width, width, m1, m2, m3), spec_scale) for j in range(4))
        params[f"w{layer}_w"] = jax.random.normal(ks[base + 4], (width, width), jnp.float32) * 0.1
        params[f"w{layer}_b"] = jax.random.normal(
            jax.random.fold_in(ks[base + 4], 1), (width,), jnp.float32) * 0.1

    fwd = jax.jit(functools.partial(fno3d_forward, modes=modes, padding=padding))
    y = jax.block_until_ready(fwd(x, grid, params))

    ref = fno3d_reference(x, grid, params, modes=modes, padding=padding)

    assert y.shape == (B, Dx, Dy, Dt, 1, num_channels), y.shape
    max_err = float(jnp.max(jnp.abs(y - ref)))
    assert jnp.allclose(y, ref, rtol=2e-3, atol=2e-3), max_err

    print("KERNEL_OK")
</pallas_src>

<mosaic_0001>
module attributes {stable_mosaic.version = 11 : i64} {
  func.func @_pw_kernel(%arg0: i32, %arg1: i32, %arg2: memref<1x43x512xf32, #tpu.memory_space<vmem>>, %arg3: memref<20x43xf32, #tpu.memory_space<vmem>>, %arg4: memref<20x1xf32, #tpu.memory_space<vmem>>, %arg5: memref<1x20x512xf32, #tpu.memory_space<vmem>>) attributes {dimension_semantics = [#tpu.dimension_semantics<parallel>, #tpu.dimension_semantics<parallel>], iteration_bounds = array<i64: 2, 1>, scalar_prefetch = 0 : i64, scratch_operands = 0 : i64, tpu.core_type = #tpu.core_type<tc>, window_params = [{transform_indices = @transform_0, window_bounds = array<i64: 1, 43, 512>}, {pipeline_mode = #tpu.pipeline_mode<synchronous>, transform_indices = @transform_1, window_bounds = array<i64: 20, 43>}, {pipeline_mode = #tpu.pipeline_mode<synchronous>, transform_indices = @transform_2, window_bounds = array<i64: 20, 1>}, {transform_indices = @transform_3, window_bounds = array<i64: 1, 20, 512>}]} {
    %c0 = arith.constant 0 : index
    %c0_0 = arith.constant 0 : index
    %0 = vector.load %arg3[%c0, %c0_0] : memref<20x43xf32, #tpu.memory_space<vmem>>, vector<20x43xf32>
    %c0_1 = arith.constant 0 : index
    %c0_2 = arith.constant 0 : index
    %c0_3 = arith.constant 0 : index
    %1 = vector.load %arg2[%c0_1, %c0_2, %c0_3] : memref<1x43x512xf32, #tpu.memory_space<vmem>>, vector<1x43x512xf32>
    %2 = vector.shape_cast %1 : vector<1x43x512xf32> to vector<43x512xf32>
    %cst = arith.constant dense<0.000000e+00> : vector<20x512xf32>
    %3 = tpu.matmul %0, %2, %cst {dimension_numbers = #tpu.dot_dimension_numbers<[1], [0], [0], [1], [0, 0, 1, 1], [], []>} : vector<20x43xf32>, vector<43x512xf32>, vector<20x512xf32> -> vector<20x512xf32>
    %c0_4 = arith.constant 0 : index
    %c0_5 = arith.constant 0 : index
    %4 = vector.load %arg4[%c0_4, %c0_5] : memref<20x1xf32, #tpu.memory_space<vmem>>, vector<20x1xf32>
    %5 = vector.broadcast %4 : vector<20x1xf32> to vector<20x512xf32>
    %6 = arith.addf %3, %5 : vector<20x512xf32>
    %c0_6 = arith.constant 0 : index
    %c0_7 = arith.constant 0 : index
    %c0_8 = arith.constant 0 : index
    %7 = vector.load %arg5[%c0_6, %c0_7, %c0_8] : memref<1x20x512xf32, #tpu.memory_space<vmem>>, vector<1x20x512xf32>
    %8 = vector.shape_cast %7 : vector<1x20x512xf32> to vector<20x512xf32>
    %9 = vector.shape_cast %6 : vector<20x512xf32> to vector<1x20x512xf32>
    tpu.vector_store %arg5[%c0_6, %c0_7, %c0_8], %9 {strides = array<i32>} : memref<1x20x512xf32, #tpu.memory_space<vmem>>, vector<1x20x512xf32>,
    return
  }
  func.func @transform_0(%arg0: i32, %arg1: i32) -> (i32, i32, i32) {
    %c0_i32 = arith.constant 0 : i32
    %c0_i32_0 = arith.constant 0 : i32
    return %arg0, %c0_i32, %arg1 : i32, i32, i32
  }
  func.func @transform_1(%arg0: i32, %arg1: i32) -> (i32, i32) {
    %c0_i32 = arith.constant 0 : i32
    %c0_i32_0 = arith.constant 0 : i32
    %c0_i32_1 = arith.constant 0 : i32
    return %c0_i32, %c0_i32_0 : i32, i32
  }
  func.func @transform_2(%arg0: i32, %arg1: i32) -> (i32, i32) {
    %c0_i32 = arith.constant 0 : i32
    %c0_i32_0 = arith.constant 0 : i32
    %c0_i32_1 = arith.constant 0 : i32
    return %c0_i32, %c0_i32_0 : i32, i32
  }
  func.func @transform_3(%arg0: i32, %arg1: i32) -> (i32, i32, i32) {
    %c0_i32 = arith.constant 0 : i32
    %c0_i32_0 = arith.constant 0 : i32
    return %arg0, %c0_i32, %arg1 : i32, i32, i32
  }
}

module attributes {stable_mosaic.version = 11 : i64} {
  func.func @_pw_res_kernel(%arg0: i32, %arg1: i32, %arg2: memref<1x20x896xf32, #tpu.memory_space<vmem>>, %arg3: memref<1x20x896xf32, #tpu.memory_space<vmem>>, %arg4: memref<20x20xf32, #tpu.memory_space<vmem>>, %arg5: memref<20x1xf32, #tpu.memory_space<vmem>>, %arg6: memref<1x20x896xf32, #tpu.memory_space<vmem>>) attributes {dimension_semantics = [#tpu.dimension_semantics<parallel>, #tpu.dimension_semantics<parallel>], iteration_bounds = array<i64: 2, 1>, scalar_prefetch = 0 : i64, scratch_operands = 0 : i64, tpu.core_type = #tpu.core_type<tc>, window_params = [{transform_indices = @transform_0, window_bounds = array<i64: 1, 20, 896>}, {transform_indices = @transform_1, window_bounds = array<i64: 1, 20, 896>}, {pipeline_mode = #tpu.pipeline_mode<synchronous>, transform_indices = @transform_2, window_bounds = array<i64: 20, 20>}, {pipeline_mode = #tpu.pipeline_mode<synchronous>, transform_indices = @transform_3, window_bounds = array<i64: 20, 1>}, {transform_indices = @transform_4, window_bounds = array<i64: 1, 20, 896>}]} {
    %c0 = arith.constant 0 : index
    %c0_0 = arith.constant 0 : index
    %0 = vector.load %arg4[%c0, %c0_0] : memref<20x20xf32, #tpu.memory_space<vmem>>, vector<20x20xf32>
    %c0_1 = arith.constant 0 : index
    %c0_2 = arith.constant 0 : index
    %c0_3 = arith.constant 0 : index
    %1 = vector.load %arg2[%c0_1, %c0_2, %c0_3] : memref<1x20x896xf32, #tpu.memory_space<vmem>>, vector<1x20x896xf32>
    %2 = vector.shape_cast %1 : vector<1x20x896xf32> to vector<20x896xf32>
    %cst = arith.constant dense<0.000000e+00> : vector<20x896xf32>
    %3 = tpu.matmul %0, %2, %cst {dimension_numbers = #tpu.dot_dimension_numbers<[1], [0], [0], [1], [0, 0, 1, 1], [], []>} : vector<20x20xf32>, vector<20x896xf32>, vector<20x896xf32> -> vector<20x896xf32>
    %c0_4 = arith.constant 0 : index
    %c0_5 = arith.constant 0 : index
    %4 = vector.load %arg5[%c0_4, %c0_5] : memref<20x1xf32, #tpu.memory_space<vmem>>, vector<20x1xf32>
    %5 = vector.broadcast %4 : vector<20x1xf32> to vector<20x896xf32>
    %6 = arith.addf %3, %5 : vector<20x896xf32>
    %c0_6 = arith.constant 0 : index
    %c0_7 = arith.constant 0 : index
    %c0_8 = arith.constant 0 : index
    %7 = vector.load %arg3[%c0_6, %c0_7, %c0_8] : memref<1x20x896xf32, #tpu.memory_space<vmem>>, vector<1x20x896xf32>
    %8 = vector.shape_cast %7 : vector<1x20x896xf32> to vector<20x896xf32>
    %9 = arith.addf %6, %8 : vector<20x896xf32>
    %cst_9 = arith.constant 5.000000e-01 : f32
    %10 = vector.broadcast %cst_9 : f32 to vector<20x896xf32>
    %11 = arith.mulf %10, %9 : vector<20x896xf32>
    %cst_10 = arith.constant 0.707106769 : f32
    %12 = vector.broadcast %cst_10 : f32 to vector<20x896xf32>
    %13 = arith.mulf %9, %12 : vector<20x896xf32>
    %14 = math.erf %13 : vector<20x896xf32>
    %cst_11 = arith.constant 1.000000e+00 : f32
    %15 = vector.broadcast %cst_11 : f32 to vector<20x896xf32>
    %16 = arith.addf %15, %14 : vector<20x896xf32>
    %17 = arith.mulf %11, %16 : vector<20x896xf32>
    %c0_12 = arith.constant 0 : index
    %c0_13 = arith.constant 0 : index
    %c0_14 = arith.constant 0 : index
    %18 = vector.load %arg6[%c0_12, %c0_13, %c0_14] : memref<1x20x896xf32, #tpu.memory_space<vmem>>, vector<1x20x896xf32>
    %19 = vector.shape_cast %18 : vector<1x20x896xf32> to vector<20x896xf32>
    %20 = vector.shape_cast %17 : vector<20x896xf32> to vector<1x20x896xf32>
    tpu.vector_store %arg6[%c0_12, %c0_13, %c0_14], %20 {strides = array<i32>} : memref<1x20x896xf32, #tpu.memory_space<vmem>>, vector<1x20x896xf32>,
    return
  }
  func.func @transform_0(%arg0: i32, %arg1: i32) -> (i32, i32, i32) {
    %c0_i32 = arith.constant 0 : i32
    %c0_i32_0 = arith.constant 0 : i32
    return %arg0, %c0_i32, %arg1 : i32, i32, i32
  }
  func.func @transform_1(%arg0: i32, %arg1: i32) -> (i32, i32, i32) {
    %c0_i32 = arith.constant 0 : i32
    %c0_i32_0 = arith.constant 0 : i32
    return %arg0, %c0_i32, %arg1 : i32, i32, i32
  }
  func.func @transform_2(%arg0: i32, %arg1: i32) -> (i32, i32) {
    %c0_i32 = arith.constant 0 : i32
    %c0_i32_0 = arith.constant 0 : i32
    %c0_i32_1 = arith.constant 0 : i32
    return %c0_i32, %c0_i32_0 : i32, i32
  }
  func.func @transform_3(%arg0: i32, %arg1: i32) -> (i32, i32) {
    %c0_i32 = arith.constant 0 : i32
    %c0_i32_0 = arith.constant 0 : i32
    %c0_i32_1 = arith.constant 0 : i32
    return %c0_i32, %c0_i32_0 : i32, i32
  }
  func.func @transform_4(%arg0: i32, %arg1: i32) -> (i32, i32, i32) {
    %c0_i32 = arith.constant 0 : i32
    %c0_i32_0 = arith.constant 0 : i32
    return %arg0, %c0_i32, %arg1 : i32, i32, i32
  }
}

module attributes {stable_mosaic.version = 11 : i64} {
  func.func @_pw_res_kernel(%arg0: i32, %arg1: i32, %arg2: memref<1x20x896xf32, #tpu.memory_space<vmem>>, %arg3: memref<1x20x896xf32, #tpu.memory_space<vmem>>, %arg4: memref<20x20xf32, #tpu.memory_space<vmem>>, %arg5: memref<20x1xf32, #tpu.memory_space<vmem>>, %arg6: memref<1x20x896xf32, #tpu.memory_space<vmem>>) attributes {dimension_semantics = [#tpu.dimension_semantics<parallel>, #tpu.dimension_semantics<parallel>], iteration_bounds = array<i64: 2, 1>, scalar_prefetch = 0 : i64, scratch_operands = 0 : i64, tpu.core_type = #tpu.core_type<tc>, window_params = [{transform_indices = @transform_0, window_bounds = array<i64: 1, 20, 896>}, {transform_indices = @transform_1, window_bounds = array<i64: 1, 20, 896>}, {pipeline_mode = #tpu.pipeline_mode<synchronous>, transform_indices = @transform_2, window_bounds = array<i64: 20, 20>}, {pipeline_mode = #tpu.pipeline_mode<synchronous>, transform_indices = @transform_3, window_bounds = array<i64: 20, 1>}, {transform_indices = @transform_4, window_bounds = array<i64: 1, 20, 896>}]} {
    %c0 = arith.constant 0 : index
    %c0_0 = arith.constant 0 : index
    %0 = vector.load %arg4[%c0, %c0_0] : memref<20x20xf32, #tpu.memory_space<vmem>>, vector<20x20xf32>
    %c0_1 = arith.constant 0 : index
    %c0_2 = arith.constant 0 : index
    %c0_3 = arith.constant 0 : index
    %1 = vector.load %arg2[%c0_1, %c0_2, %c0_3] : memref<1x20x896xf32, #tpu.memory_space<vmem>>, vector<1x20x896xf32>
    %2 = vector.shape_cast %1 : vector<1x20x896xf32> to vector<20x896xf32>
    %cst = arith.constant dense<0.000000e+00> : vector<20x896xf32>
    %3 = tpu.matmul %0, %2, %cst {dimension_numbers = #tpu.dot_dimension_numbers<[1], [0], [0], [1], [0, 0, 1, 1], [], []>} : vector<20x20xf32>, vector<20x896xf32>, vector<20x896xf32> -> vector<20x896xf32>
    %c0_4 = arith.constant 0 : index
    %c0_5 = arith.constant 0 : index
    %4 = vector.load %arg5[%c0_4, %c0_5] : memref<20x1xf32, #tpu.memory_space<vmem>>, vector<20x1xf32>
    %5 = vector.broadcast %4 : vector<20x1xf32> to vector<20x896xf32>
    %6 = arith.addf %3, %5 : vector<20x896xf32>
    %c0_6 = arith.constant 0 : index
    %c0_7 = arith.constant 0 : index
    %c0_8 = arith.constant 0 : index
    %7 = vector.load %arg3[%c0_6, %c0_7, %c0_8] : memref<1x20x896xf32, #tpu.memory_space<vmem>>, vector<1x20x896xf32>
    %8 = vector.shape_cast %7 : vector<1x20x896xf32> to vector<20x896xf32>
    %9 = arith.addf %6, %8 : vector<20x896xf32>
    %c0_9 = arith.constant 0 : index
    %c0_10 = arith.constant 0 : index
    %c0_11 = arith.constant 0 : index
    %10 = vector.load %arg6[%c0_9, %c0_10, %c0_11] : memref<1x20x896xf32, #tpu.memory_space<vmem>>, vector<1x20x896xf32>
    %11 = vector.shape_cast %10 : vector<1x20x896xf32> to vector<20x896xf32>
    %12 = vector.shape_cast %9 : vector<20x896xf32> to vector<1x20x896xf32>
    tpu.vector_store %arg6[%c0_9, %c0_10, %c0_11], %12 {strides = array<i32>} : memref<1x20x896xf32, #tpu.memory_space<vmem>>, vector<1x20x896xf32>,
    return
  }
  func.func @transform_0(%arg0: i32, %arg1: i32) -> (i32, i32, i32) {
    %c0_i32 = arith.constant 0 : i32
    %c0_i32_0 = arith.constant 0 : i32
    return %arg0, %c0_i32, %arg1 : i32, i32, i32
  }
  func.func @transform_1(%arg0: i32, %arg1: i32) -> (i32, i32, i32) {
    %c0_i32 = arith.constant 0 : i32
    %c0_i32_0 = arith.constant 0 : i32
    return %arg0, %c0_i32, %arg1 : i32, i32, i32
  }
  func.func @transform_2(%arg0: i32, %arg1: i32) -> (i32, i32) {
    %c0_i32 = arith.constant 0 : i32
    %c0_i32_0 = arith.constant 0 : i32
    %c0_i32_1 = arith.constant 0 : i32
    return %c0_i32, %c0_i32_0 : i32, i32
  }
  func.func @transform_3(%arg0: i32, %arg1: i32) -> (i32, i32) {
    %c0_i32 = arith.constant 0 : i32
    %c0_i32_0 = arith.constant 0 : i32
    %c0_i32_1 = arith.constant 0 : i32
    return %c0_i32, %c0_i32_0 : i32, i32
  }
  func.func @transform_4(%arg0: i32, %arg1: i32) -> (i32, i32, i32) {
    %c0_i32 = arith.constant 0 : i32
    %c0_i32_0 = arith.constant 0 : i32
    return %arg0, %c0_i32, %arg1 : i32, i32, i32
  }
}

module attributes {stable_mosaic.version = 11 : i64} {
  func.func @_pw_kernel(%arg0: i32, %arg1: i32, %arg2: memref<1x20x512xf32, #tpu.memory_space<vmem>>, %arg3: memref<128x20xf32, #tpu.memory_space<vmem>>, %arg4: memref<128x1xf32, #tpu.memory_space<vmem>>, %arg5: memref<1x128x512xf32, #tpu.memory_space<vmem>>) attributes {dimension_semantics = [#tpu.dimension_semantics<parallel>, #tpu.dimension_semantics<parallel>], iteration_bounds = array<i64: 2, 1>, scalar_prefetch = 0 : i64, scratch_operands = 0 : i64, tpu.core_type = #tpu.core_type<tc>, window_params = [{transform_indices = @transform_0, window_bounds = array<i64: 1, 20, 512>}, {pipeline_mode = #tpu.pipeline_mode<synchronous>, transform_indices = @transform_1, window_bounds = array<i64: 128, 20>}, {pipeline_mode = #tpu.pipeline_mode<synchronous>, transform_indices = @transform_2, window_bounds = array<i64: 128, 1>}, {transform_indices = @transform_3, window_bounds = array<i64: 1, 128, 512>}]} {
    %c0 = arith.constant 0 : index
    %c0_0 = arith.constant 0 : index
    %0 = vector.load %arg3[%c0, %c0_0] : memref<128x20xf32, #tpu.memory_space<vmem>>, vector<128x20xf32>
    %c0_1 = arith.constant 0 : index
    %c0_2 = arith.constant 0 : index
    %c0_3 = arith.constant 0 : index
    %1 = vector.load %arg2[%c0_1, %c0_2, %c0_3] : memref<1x20x512xf32, #tpu.memory_space<vmem>>, vector<1x20x512xf32>
    %2 = vector.shape_cast %1 : vector<1x20x512xf32> to vector<20x512xf32>
    %cst = arith.constant dense<0.000000e+00> : vector<128x512xf32>
    %3 = tpu.matmul %0, %2, %cst {dimension_numbers = #tpu.dot_dimension_numbers<[1], [0], [0], [1], [0, 0, 1, 1], [], []>} : vector<128x20xf32>, vector<20x512xf32>, vector<128x512xf32> -> vector<128x512xf32>
    %c0_4 = arith.constant 0 : index
    %c0_5 = arith.constant 0 : index
    %4 = vector.load %arg4[%c0_4, %c0_5] : memref<128x1xf32, #tpu.memory_space<vmem>>, vector<128x1xf32>
    %5 = vector.broadcast %4 : vector<128x1xf32> to vector<128x512xf32>
    %6 = arith.addf %3, %5 : vector<128x512xf32>
    %cst_6 = arith.constant 5.000000e-01 : f32
    %7 = vector.broadcast %cst_6 : f32 to vector<128x512xf32>
    %8 = arith.mulf %7, %6 : vector<128x512xf32>
    %cst_7 = arith.constant 0.707106769 : f32
    %9 = vector.broadcast %cst_7 : f32 to vector<128x512xf32>
    %10 = arith.mulf %6, %9 : vector<128x512xf32>
    %11 = math.erf %10 : vector<128x512xf32>
    %cst_8 = arith.constant 1.000000e+00 : f32
    %12 = vector.broadcast %cst_8 : f32 to vector<128x512xf32>
    %13 = arith.addf %12, %11 : vector<128x512xf32>
    %14 = arith.mulf %8, %13 : vector<128x512xf32>
    %c0_9 = arith.constant 0 : index
    %c0_10 = arith.constant 0 : index
    %c0_11 = arith.constant 0 : index
    %15 = vector.load %arg5[%c0_9, %c0_10, %c0_11] : memref<1x128x512xf32, #tpu.memory_space<vmem>>, vector<1x128x512xf32>
    %16 = vector.shape_cast %15 : vector<1x128x512xf32> to vector<128x512xf32>
    %17 = vector.shape_cast %14 : vector<128x512xf32> to vector<1x128x512xf32>
    tpu.vector_store %arg5[%c0_9, %c0_10, %c0_11], %17 {strides = array<i32>} : memref<1x128x512xf32, #tpu.memory_space<vmem>>, vector<1x128x512xf32>,
    return
  }
  func.func @transform_0(%arg0: i32, %arg1: i32) -> (i32, i32, i32) {
    %c0_i32 = arith.constant 0 : i32
    %c0_i32_0 = arith.constant 0 : i32
    return %arg0, %c0_i32, %arg1 : i32, i32, i32
  }
  func.func @transform_1(%arg0: i32, %arg1: i32) -> (i32, i32) {
    %c0_i32 = arith.constant 0 : i32
    %c0_i32_0 = arith.constant 0 : i32
    %c0_i32_1 = arith.constant 0 : i32
    return %c0_i32, %c0_i32_0 : i32, i32
  }
  func.func @transform_2(%arg0: i32, %arg1: i32) -> (i32, i32) {
    %c0_i32 = arith.constant 0 : i32
    %c0_i32_0 = arith.constant 0 : i32
    %c0_i32_1 = arith.constant 0 : i32
    return %c0_i32, %c0_i32_0 : i32, i32
  }
  func.func @transform_3(%arg0: i32, %arg1: i32) -> (i32, i32, i32) {
    %c0_i32 = arith.constant 0 : i32
    %c0_i32_0 = arith.constant 0 : i32
    return %arg0, %c0_i32, %arg1 : i32, i32, i32
  }
}

module attributes {stable_mosaic.version = 11 : i64} {
  func.func @_pw_kernel(%arg0: i32, %arg1: i32, %arg2: memref<1x128x512xf32, #tpu.memory_space<vmem>>, %arg3: memref<4x128xf32, #tpu.memory_space<vmem>>, %arg4: memref<4x1xf32, #tpu.memory_space<vmem>>, %arg5: memref<1x4x512xf32, #tpu.memory_space<vmem>>) attributes {dimension_semantics = [#tpu.dimension_semantics<parallel>, #tpu.dimension_semantics<parallel>], iteration_bounds = array<i64: 2, 1>, scalar_prefetch = 0 : i64, scratch_operands = 0 : i64, tpu.core_type = #tpu.core_type<tc>, window_params = [{transform_indices = @transform_0, window_bounds = array<i64: 1, 128, 512>}, {pipeline_mode = #tpu.pipeline_mode<synchronous>, transform_indices = @transform_1, window_bounds = array<i64: 4, 128>}, {pipeline_mode = #tpu.pipeline_mode<synchronous>, transform_indices = @transform_2, window_bounds = array<i64: 4, 1>}, {transform_indices = @transform_3, window_bounds = array<i64: 1, 4, 512>}]} {
    %c0 = arith.constant 0 : index
    %c0_0 = arith.constant 0 : index
    %0 = vector.load %arg3[%c0, %c0_0] : memref<4x128xf32, #tpu.memory_space<vmem>>, vector<4x128xf32>
    %c0_1 = arith.constant 0 : index
    %c0_2 = arith.constant 0 : index
    %c0_3 = arith.constant 0 : index
    %1 = vector.load %arg2[%c0_1, %c0_2, %c0_3] : memref<1x128x512xf32, #tpu.memory_space<vmem>>, vector<1x128x512xf32>
    %2 = vector.shape_cast %1 : vector<1x128x512xf32> to vector<128x512xf32>
    %cst = arith.constant dense<0.000000e+00> : vector<4x512xf32>
    %3 = tpu.matmul %0, %2, %cst {dimension_numbers = #tpu.dot_dimension_numbers<[1], [0], [0], [1], [0, 0, 1, 1], [], []>} : vector<4x128xf32>, vector<128x512xf32>, vector<4x512xf32> -> vector<4x512xf32>
    %c0_4 = arith.constant 0 : index
    %c0_5 = arith.constant 0 : index
    %4 = vector.load %arg4[%c0_4, %c0_5] : memref<4x1xf32, #tpu.memory_space<vmem>>, vector<4x1xf32>
    %5 = vector.broadcast %4 : vector<4x1xf32> to vector<4x512xf32>
    %6 = arith.addf %3, %5 : vector<4x512xf32>
    %c0_6 = arith.constant 0 : index
    %c0_7 = arith.constant 0 : index
    %c0_8 = arith.constant 0 : index
    %7 = vector.load %arg5[%c0_6, %c0_7, %c0_8] : memref<1x4x512xf32, #tpu.memory_space<vmem>>, vector<1x4x512xf32>
    %8 = vector.shape_cast %7 : vector<1x4x512xf32> to vector<4x512xf32>
    %9 = vector.shape_cast %6 : vector<4x512xf32> to vector<1x4x512xf32>
    tpu.vector_store %arg5[%c0_6, %c0_7, %c0_8], %9 {strides = array<i32>} : memref<1x4x512xf32, #tpu.memory_space<vmem>>, vector<1x4x512xf32>,
    return
  }
  func.func @transform_0(%arg0: i32, %arg1: i32) -> (i32, i32, i32) {
    %c0_i32 = arith.constant 0 : i32
    %c0_i32_0 = arith.constant 0 : i32
    return %arg0, %c0_i32, %arg1 : i32, i32, i32
  }
  func.func @transform_1(%arg0: i32, %arg1: i32) -> (i32, i32) {
    %c0_i32 = arith.constant 0 : i32
    %c0_i32_0 = arith.constant 0 : i32
    %c0_i32_1 = arith.constant 0 : i32
    return %c0_i32, %c0_i32_0 : i32, i32
  }
  func.func @transform_2(%arg0: i32, %arg1: i32) -> (i32, i32) {
    %c0_i32 = arith.constant 0 : i32
    %c0_i32_0 = arith.constant 0 : i32
    %c0_i32_1 = arith.constant 0 : i32
    return %c0_i32, %c0_i32_0 : i32, i32
  }
  func.func @transform_3(%arg0: i32, %arg1: i32) -> (i32, i32, i32) {
    %c0_i32 = arith.constant 0 : i32
    %c0_i32_0 = arith.constant 0 : i32
    return %arg0, %c0_i32, %arg1 : i32, i32, i32
  }
}

</mosaic_0001>

<llo_original>
// kernel: fno3d_forward.7
$region0: #{fno3d_forward.7}
  #allocation0 [shape = 'u32[]', space=smem, size = 0x4, offset = 0x4, fixed_abs, tag = 'smem constant byte address 0x4 - core index']
  #allocation1 [shape = 'u32[144,128]{1,0:T(1,128)}', space=vmem, size = 0x12000, scoped, tag = 'internal scratch']
  %s0 = inlined_call_operand.vmem [shape: f32[2,43,512], index: 0, kind: input, shape index: {}]
  %s1 = inlined_call_operand.vmem [shape: f32[20,43], index: 1, kind: input, shape index: {}]
  %s2 = inlined_call_operand.vmem [shape: f32[20,1], index: 2, kind: input, shape index: {}]
  %s3 = inlined_call_operand.vmem [shape: f32[2,20,512], index: 3, kind: output, shape index: {}]
  %s4 = sld [smem:[#allocation0]]
  $region45: #{fno3d_forward.7} parent=0
    _
  %s6 = ssub.s32 1, %s4
  %s7 = scalar_select 0, %s6, %s4
  loop: start=0, step=1, limit=4
  $region2: #{fno3d_forward.7} parent=0 // loop_pre_header
    _
  $region3: #{fno3d_forward.7} parent=0 // loop_header
    %s9 = sphi 0, %s13
    %p10 = scmp.ge.s32.totalorder %s9, 4
    %s16 = sphi 0, %s28
    %s17 = sphi 0, %s24
    %s18 = sphi 0, %s16
    %s19 = sphi 0, %s17
    %s20 = sphi 0, %s18
    %s21 = sphi 0, %s19
    %s33 = sphi 0, %s35
    %s36 = sphi 0, %s33
    %s37 = sphi 0, %s36
    %s53 = sphi 0, %s37
    %s57 = sphi 0, %s57
    %s59 = sphi 0, %s57
    %s60 = sphi 0, %s59
    %s74 = sphi 0, %s60
    %s78 = sphi 0, %s78
    %s80 = sphi 0, %s78
    %s81 = sphi 0, %s80
    %s95 = sphi 0, %s81
    %s103 = sphi 0, %s105
    %s106 = sphi 0, %s103
    %s107 = sphi 0, %s106
    %s123 = sphi 0, %s107
  $region4: #{fno3d_forward.7} parent=0 // loop_header_branch
    %12 = sbr.rel (%p10) target = $region8
  $region5: #{fno3d_forward.7} parent=0 // loop_body
    %s14 = ssub.s32 %s9, 1
    %s15 = ssub.s32 %s9, 2
    %s22 = sadd.s32 1, %s17
    %p23 = scmp.ge.s32.totalorder %s22, 1
    %s24 = scalar_select %p23, 0, %s22
    %s25 = sadd.s32 1, %s16
    %s26 = scalar_select %p23, %s25, %s16
    %p27 = scmp.ge.s32.totalorder %s26, 2
    %s28 = scalar_select %p27, 0, %s26
    %s29 = ssub.s32 %s16, %s28
    %s30 = ssub.s32 %s17, %s24
    %s31 = sor.u32 %s29, %s30
    %p32 = scmp.eq.s32.totalorder %s31, 0
    %s34 = sadd.s32 %s33, 1
    %s35 = scalar_select %p32, %s33, %s34
    %p38 = pneg %p32
    %p39 = scmp.eq.s32.totalorder %s9, 1
    %p40 = por %p38, %p39
    %p41 = scmp.ne.s32.totalorder %s33, %s36
    %p42 = scmp.eq.s32.totalorder %s9, 0
    %p43 = por %p41, %p42
    %p44 = scmp.ne.s32.totalorder %s33, %s36
    %p45 = scmp.eq.s32.totalorder %s14, 1
    %p46 = por %p44, %p45
    %p47 = scmp.ne.s32.totalorder %s36, %s37
    %p48 = scmp.eq.s32.totalorder %s14, 0
    %p49 = por %p47, %p48
    %p50 = scmp.ne.s32.totalorder %s36, %s37
    %p51 = scmp.eq.s32.totalorder %s15, 1
    %p52 = por %p50, %p51
    %p54 = scmp.ne.s32.totalorder %s37, %s53
    %p55 = scmp.eq.s32.totalorder %s15, 0
    %p56 = por %p54, %p55
    %s58 = sadd.s32 %s57, 1
    %p61 = scmp.eq.s32.totalorder %s9, 1
    %p62 = scmp.ne.s32.totalorder %s57, %s59
    %p63 = scmp.eq.s32.totalorder %s9, 0
    %p64 = por %p62, %p63
    %p65 = scmp.ne.s32.totalorder %s57, %s59
    %p66 = scmp.eq.s32.totalorder %s14, 1
    %p67 = por %p65, %p66
    %p68 = scmp.ne.s32.totalorder %s59, %s60
    %p69 = scmp.eq.s32.totalorder %s14, 0
    %p70 = por %p68, %p69
    %p71 = scmp.ne.s32.totalorder %s59, %s60
    %p72 = scmp.eq.s32.totalorder %s15, 1
    %p73 = por %p71, %p72
    %p75 = scmp.ne.s32.totalorder %s60, %s74
    %p76 = scmp.eq.s32.totalorder %s15, 0
    %p77 = por %p75, %p76
    %s79 = sadd.s32 %s78, 1
    %p82 = scmp.eq.s32.totalorder %s9, 1
    %p83 = scmp.ne.s32.totalorder %s78, %s80
    %p84 = scmp.eq.s32.totalorder %s9, 0
    %p85 = por %p83, %p84
    %p86 = scmp.ne.s32.totalorder %s78, %s80
    %p87 = scmp.eq.s32.totalorder %s14, 1
    %p88 = por %p86, %p87
    %p89 = scmp.ne.s32.totalorder %s80, %s81
    %p90 = scmp.eq.s32.totalorder %s14, 0
    %p91 = por %p89, %p90
    %p92 = scmp.ne.s32.totalorder %s80, %s81
    %p93 = scmp.eq.s32.totalorder %s15, 1
    %p94 = por %p92, %p93
    %p96 = scmp.ne.s32.totalorder %s81, %s95
    %p97 = scmp.eq.s32.totalorder %s15, 0
    %p98 = por %p96, %p97
    %s99 = ssub.s32 %s16, %s28
    %s100 = ssub.s32 %s17, %s24
    %s101 = sor.u32 %s99, %s100
    %p102 = scmp.eq.s32.totalorder %s101, 0
    %s104 = sadd.s32 %s103, 1
    %s105 = scalar_select %p102, %s103, %s104
    %p108 = pneg %p102
    %p109 = scmp.eq.s32.totalorder %s9, 1
    %p110 = por %p108, %p109
    %p111 = scmp.ne.s32.totalorder %s103, %s106
    %p112 = scmp.eq.s32.totalorder %s9, 0
    %p113 = por %p111, %p112
    %p114 = scmp.ne.s32.totalorder %s103, %s106
    %p115 = scmp.eq.s32.totalorder %s14, 1
    %p116 = por %p114, %p115
    %p117 = scmp.ne.s32.totalorder %s106, %s107
    %p118 = scmp.eq.s32.totalorder %s14, 0
    %p119 = por %p117, %p118
    %p120 = scmp.ne.s32.totalorder %s106, %s107
    %p121 = scmp.eq.s32.totalorder %s15, 1
    %p122 = por %p120, %p121
    %p124 = scmp.ne.s32.totalorder %s107, %s123
    %p125 = scmp.eq.s32.totalorder %s15, 0
    %p126 = por %p124, %p125
    %p127 = scmp.le.s32.totalorder 1, %s9
    %p128 = scmp.lt.s32.totalorder %s9, 3
    %p129 = pnand %p127, %p128
    %p130 = pneg %p129
    // Predicated region
    $region9: #{fno3d_forward.7} parent=5 // pred_check
      _
    $region10: #{fno3d_forward.7} parent=5 // pred_check_branch
      %132 = sbr.rel (%p129) target = $region12
    $region11: #{fno3d_forward.7} parent=5 // pred_region
      %s133 = ssub.s32 %s9, 1
      // Predicated region
      $region13: #{fno3d_forward.7} parent=11 // pred_check
        %p134 = pneg %p70
      $region14: #{fno3d_forward.7} parent=11 // pred_check_branch
        %136 = sbr.rel (%p134) target = $region16
      $region15: #{fno3d_forward.7} parent=11 // pred_region
        _
      $region16: #{fno3d_forward.7} parent=11 // pred_fallthru
        _
      // Predicated region
      $region17: #{fno3d_forward.7} parent=11 // pred_check
        %p137 = pneg %p91
      $region18: #{fno3d_forward.7} parent=11 // pred_check_branch
        %139 = sbr.rel (%p137) target = $region20
      $region19: #{fno3d_forward.7} parent=11 // pred_region
        _
      $region20: #{fno3d_forward.7} parent=11 // pred_fallthru
        _
    $region12: #{fno3d_forward.7} parent=5 // pred_fallthru
      _
    %p140 = scmp.lt.s32.totalorder %s9, 2
    // Predicated region
    $region21: #{fno3d_forward.7} parent=5 // pred_check
      %p141 = pneg %p140
    $region22: #{fno3d_forward.7} parent=5 // pred_check_branch
      %143 = sbr.rel (%p141) target = $region24
    $region23: #{fno3d_forward.7} parent=5 // pred_region
      // Predicated region
      $region25: #{fno3d_forward.7} parent=23 // pred_check
        %p144 = pneg %p43
      $region26: #{fno3d_forward.7} parent=23 // pred_check_branch
        %146 = sbr.rel (%p144) target = $region28
      $region27: #{fno3d_forward.7} parent=23 // pred_region
        %s147 = smul.u32 4, %s17
        %p148 = scmp.lt.s32.totalorder %s16, 1
        %s149 = scalar_select %p148, %s16, 1
        %p150 = scmp.lt.s32.totalorder %s147, 3
        %s151 = scalar_select %p150, %s147, 3
        %s152 = smul.addr %s149, 24
        %s153 = sadd.s32 %s151, %s152
        %s154 = smul.addr %s153, 8
        %s155 = scalar_lea.vmem %s0, %s154
        %s156 = smul.u32 4, %s17
      $region28: #{fno3d_forward.7} parent=23 // pred_fallthru
        _
    $region24: #{fno3d_forward.7} parent=5 // pred_fallthru
      _
    %p157 = scmp.le.s32.totalorder 1, %s9
    %p158 = scmp.lt.s32.totalorder %s9, 3
    %p159 = pnand %p157, %p158
    %p160 = pneg %p159
    // Predicated region
    $region29: #{fno3d_forward.7} parent=5 // pred_check
      _
    $region30: #{fno3d_forward.7} parent=5 // pred_check_branch
      %162 = sbr.rel (%p159) target = $region32
    $region31: #{fno3d_forward.7} parent=5 // pred_region
      %s163 = ssub.s32 %s9, 1
      %s164 = smul.u32 4, %s19
      %p165 = scmp.lt.s32.totalorder %s18, 1
      %s166 = scalar_select %p165, %s18, 1
      %p167 = scmp.lt.s32.totalorder %s164, 3
      %s168 = scalar_select %p167, %s164, 3
      %s169 = smul.addr %s166, 24
      %s170 = sadd.s32 %s168, %s169
      %s171 = smul.addr %s170, 8
      %s172 = scalar_lea.vmem %s0, %s171
      %p173 = pneg %p49
      %p174 = pneg %p46
      %p175 = pneg %p70
      %p176 = pneg %p67
      %p177 = pneg %p91
      %p178 = pneg %p88
      %p179 = pneg %p119
      %p180 = pneg %p116
      %s181 = smul.u32 4, %s19
      %p182 = scmp.lt.s32.totalorder %s18, 1
      %s183 = scalar_select %p182, %s18, 1
      %p184 = scmp.lt.s32.totalorder %s181, 3
      %s185 = scalar_select %p184, %s181, 3
      %s186 = smul.addr %s183, 12
      %s187 = sadd.s32 %s185, %s186
      %s188 = smul.addr %s187, 8
      %s189 = scalar_lea.vmem %s3, %s188
      %s190 = smul.u32 4, %s19
      %p191 = scmp.lt.s32.totalorder %s18, 1
      %s192 = scalar_select %p191, %s18, 1
      %p193 = scmp.lt.s32.totalorder %s190, 3
      %s194 = scalar_select %p193, %s190, 3
      %s195 = smul.addr %s192, 24
      %s196 = sadd.s32 %s194, %s195
      %s197 = smul.addr %s196, 8
      %s198 = scalar_lea.vmem %s0, %s197
      %s199 = smul.u32 4, %s19
      %s200 = smul.u32 4, %s19
      %p201 = scmp.lt.s32.totalorder %s18, 1
      %s202 = scalar_select %p201, %s18, 1
      %p203 = scmp.lt.s32.totalorder %s200, 3
      %s204 = scalar_select %p203, %s200, 3
      %s205 = smul.addr %s202, 12
      %s206 = sadd.s32 %s204, %s205
      %s207 = smul.addr %s206, 8
      %s208 = scalar_lea.vmem %s3, %s207
      %s209 = smul.u32 4, %s19
      %v210 = vld [vmem:[%s1] sm:$0xff]
      %v211 = vld [vmem:[%s1 + $0x8] sm:$0xff]
      %v212 = vld [vmem:[%s1 + $0x10] sm:$0xf]
      %v213 = vld [vmem:[%s198] sm:$0xff]
      %v214 = vld [vmem:[%s198 + $0x8] sm:$0xff]
      %v215 = vld [vmem:[%s198 + $0x10] sm:$0xff]
      %v216 = vld [vmem:[%s198 + $0x18] sm:$0xff]
      %v217 = vld [vmem:[%s198 + $0x20] sm:$0xff]
      %v218 = vld [vmem:[%s198 + $0x28] sm:$0xff]
      %v219 = vld [vmem:[%s198 + $0x30] sm:$0xff]
      %v220 = vld [vmem:[%s198 + $0x38] sm:$0xff]
      %v221 = vld [vmem:[%s198 + $0x40] sm:$0xff]
      %v222 = vld [vmem:[%s198 + $0x48] sm:$0xff]
      %v223 = vld [vmem:[%s198 + $0x50] sm:$0xff]
      %v224 = vld [vmem:[%s198 + $0x58] sm:$0xff]
      %v225 = vld [vmem:[%s198 + $0x60] sm:$0xff]
      %v226 = vld [vmem:[%s198 + $0x68] sm:$0xff]
      %v227 = vld [vmem:[%s198 + $0x70] sm:$0xff]
      %v228 = vld [vmem:[%s198 + $0x78] sm:$0xff]
      %v229 = vld [vmem:[%s198 + $0x80] sm:$0xff]
      %v230 = vld [vmem:[%s198 + $0x88] sm:$0xff]
      %v231 = vld [vmem:[%s198 + $0x90] sm:$0xff]
      %v232 = vld [vmem:[%s198 + $0x98] sm:$0xff]
      %v233 = vld [vmem:[%s198 + $0xa0] sm:$0x7]
      %v234 = vld [vmem:[%s198 + $0xa8] sm:$0x7]
      %v235 = vld [vmem:[%s198 + $0xb0] sm:$0x7]
      %v236 = vld [vmem:[%s198 + $0xb8] sm:$0x7]
      %v237 = vld [vmem:[%s2] sm:$0xff]
      %v238 = vld [vmem:[%s2 + $0x8] sm:$0xff]
      %v239 = vld [vmem:[%s2 + $0x10] sm:$0xf]
      %241 = vset.pattern.permute.xlu0 0
      %242 = vperm.xlu0 %241, %v237
      %v243 = vpop.permute.xlu0 %242
      %246 = vset.pattern.permute.xlu0 0
      %247 = vperm.xlu0 %246, %v238
      %v248 = vpop.permute.xlu0 %247
      %251 = vset.pattern.permute.xlu0 0
      %252 = vperm.xlu0 %251, %v239
      %v253 = vpop.permute.xlu0 %252
      %vm255 = vcmask 351232
      %v257 = vsel %vm255, %v210, 0
      %v260 = vsel %vm255, %v211, 0
      %v263 = vsel %vm255, %v212, 0
      %vm265 = vcmask 1042432
      %v267 = vsel %vm265, %v233, 0
      %v270 = vsel %vm265, %v234, 0
      %v273 = vsel %vm265, %v235, 0
      %v276 = vsel %vm265, %v236, 0
      %278 = vmatprep.subr.mxu0 %v214
      %279 = vmatpush1.msra.mxu0 %v213
      %280 = vmatprep.subr.mxu0 %v218
      %281 = vmatpush1.msra.mxu0 %v217
      %282 = vmatprep.subr.mxu0 %v222
      %283 = vmatpush1.msra.mxu0 %v221
      %284 = vmatprep.subr.mxu0 %v226
      %285 = vmatpush1.msra.mxu0 %v225
      %286 = vmatprep.subr.mxu0 %v230
      %287 = vmatpush1.msra.mxu0 %v229
      %288 = vmatprep.subr.mxu0 %v270
      %289 = vmatpush1.msra.mxu0 %v267
      %290 = vmatprep.subr.mxu0 0.0
      %291 = vmatpush1.msra.mxu0 0.0
      %292 = vmatprep.subr.mxu0 0.0
      %293 = vmatpush1.msra.mxu0 0.0
      %294 = vmatprep.subr.mxu0 0.0
      %295 = vmatpush1.msra.mxu0 0.0
      %296 = vmatprep.subr.mxu0 0.0
      %297 = vmatpush1.msra.mxu0 0.0
      %298 = vmatprep.subr.mxu0 0.0
      %299 = vmatpush1.msra.mxu0 0.0
      %300 = vmatprep.subr.mxu0 0.0
      %301 = vmatpush1.msra.mxu0 0.0
      %302 = vmatprep.subr.mxu0 0.0
      %303 = vmatpush1.msra.mxu0 0.0
      %304 = vmatprep.subr.mxu0 0.0
      %305 = vmatpush1.msra.mxu0 0.0
      %306 = vmatprep.subr.mxu0 0.0
      %307 = vmatpush1.msra.mxu0 0.0
      %308 = vmatprep.subr.mxu0 0.0
      %309 = vmatpush1.msra.mxu0 0.0
      %310 = vmatprep.subr.mxu0 0.0
      %311 = vmatpush1.msra.mxu0 0.0
      %312 = vmatprep.subr.mxu0 0.0
      %313 = vmatpush1.msra.mxu0 0.0
      %314 = vmatprep.subr.mxu0 0.0
      %315 = vmatpush1.msra.mxu0 0.0
      %316 = vmatprep.subr.mxu0 0.0
      %317 = vmatpush1.msra.mxu0 0.0
      %318 = vmatprep.subr.mxu0 0.0
      %319 = vmatpush1.msra.mxu0 0.0
      %320 = vmatprep.subr.mxu0 0.0
      %321 = vmatpush1.msra.mxu0 0.0
      %322 = vmatprep.subr.mxu0 0.0
      %323 = vmatpush1.msra.mxu0 0.0
      %324 = vmatprep.subr.mxu0 0.0
      %325 = vmatpush1.msra.mxu0 0.0
      %326 = vmatprep.subr.mxu0 0.0
      %327 = vmatpush1.msra.mxu0 0.0
      %328 = vmatprep.subr.mxu0 0.0
      %329 = vmatpush1.msra.mxu0 0.0
      %330 = vmatprep.subr.mxu0 0.0
      %331 = vmatpush1.msra.mxu0 0.0
      %332 = vmatprep.subr.mxu0 0.0
      %333 = vmatpush1.msra.mxu0 0.0
      %334 = vmatprep.subr.mxu0 0.0
      %335 = vmatpush1.msra.mxu0 0.0
      %336 = vmatprep.subr.mxu0 0.0
      %337 = vmatpush1.msra.mxu0 0.0
      %338 = vmatprep.subr.mxu0 0.0
      %339 = vmatpush1.msra.mxu0 0.0
      %340 = vmatprep.subr.mxu0 0.0
      %341 = vmatpush1.msra.mxu0 0.0
      %342 = vmatprep.mubr.f32.mxu0 0.0
      %343 = vmatmul.mubr.f32.gmra.mrb[0].mxu0 %v257
      %v344 = vpop.f32.mrb[0].mxu0
      %v345 = vadd.f32 %v243, %v344
      %v346 = vpop.f32.mrb[0].mxu0
      %v347 = vadd.f32 %v243, %v346
      %348 = vmatprep.mubr.f32.mxu0 0.0
      %349 = vmatmul.mubr.f32.gmra.mrb[0].mxu0 %v260
      %v350 = vpop.f32.mrb[0].mxu0
      %v351 = vadd.f32 %v248, %v350
      %v352 = vpop.f32.mrb[0].mxu0
      %v353 = vadd.f32 %v248, %v352
      %354 = vmatprep.mubr.f32.mxu0 0.0
      %355 = vmatmul.mubr.f32.gmra.mrb[0].mxu0 %v263
      %v356 = vpop.f32.mrb[0].mxu0
      %v357 = vadd.f32 %v253, %v356
      %v358 = vpop.f32.mrb[0].mxu0
      %v359 = vadd.f32 %v253, %v358
      %360 = vdwg.mxu0
      %361 = vmatprep.subr.mxu0 %v216
      %362 = vmatpush1.msra.mxu0 %v215
      %363 = vmatprep.subr.mxu0 %v220
      %364 = vmatpush1.msra.mxu0 %v219
      %365 = vmatprep.subr.mxu0 %v224
      %366 = vmatpush1.msra.mxu0 %v223
      %367 = vmatprep.subr.mxu0 %v228
      %368 = vmatpush1.msra.mxu0 %v227
      %369 = vmatprep.subr.mxu0 %v232
      %370 = vmatpush1.msra.mxu0 %v231
      %371 = vmatprep.subr.mxu0 %v276
      %372 = vmatpush1.msra.mxu0 %v273
      %373 = vmatprep.subr.mxu0 0.0
      %374 = vmatpush1.msra.mxu0 0.0
      %375 = vmatprep.subr.mxu0 0.0
      %376 = vmatpush1.msra.mxu0 0.0
      %377 = vmatprep.subr.mxu0 0.0
      %378 = vmatpush1.msra.mxu0 0.0
      %379 = vmatprep.subr.mxu0 0.0
      %380 = vmatpush1.msra.mxu0 0.0
      %381 = vmatprep.subr.mxu0 0.0
      %382 = vmatpush1.msra.mxu0 0.0
      %383 = vmatprep.subr.mxu0 0.0
      %384 = vmatpush1.msra.mxu0 0.0
      %385 = vmatprep.subr.mxu0 0.0
      %386 = vmatpush1.msra.mxu0 0.0
      %387 = vmatprep.subr.mxu0 0.0
      %388 = vmatpush1.msra.mxu0 0.0
      %389 = vmatprep.subr.mxu0 0.0
      %390 = vmatpush1.msra.mxu0 0.0
      %391 = vmatprep.subr.mxu0 0.0
      %392 = vmatpush1.msra.mxu0 0.0
      %393 = vmatprep.subr.mxu0 0.0
      %394 = vmatpush1.msra.mxu0 0.0
      %395 = vmatprep.subr.mxu0 0.0
      %396 = vmatpush1.msra.mxu0 0.0
      %397 = vmatprep.subr.mxu0 0.0
      %398 = vmatpush1.msra.mxu0 0.0
      %399 = vmatprep.subr.mxu0 0.0
      %400 = vmatpush1.msra.mxu0 0.0
      %401 = vmatprep.subr.mxu0 0.0
      %402 = vmatpush1.msra.mxu0 0.0
      %403 = vmatprep.subr.mxu0 0.0
      %404 = vmatpush1.msra.mxu0 0.0
      %405 = vmatprep.subr.mxu0 0.0
      %406 = vmatpush1.msra.mxu0 0.0
      %407 = vmatprep.subr.mxu0 0.0
      %408 = vmatpush1.msra.mxu0 0.0
      %409 = vmatprep.subr.mxu0 0.0
      %410 = vmatpush1.msra.mxu0 0.0
      %411 = vmatprep.subr.mxu0 0.0
      %412 = vmatpush1.msra.mxu0 0.0
      %413 = vmatprep.subr.mxu0 0.0
      %414 = vmatpush1.msra.mxu0 0.0
      %415 = vmatprep.subr.mxu0 0.0
      %416 = vmatpush1.msra.mxu0 0.0
      %417 = vmatprep.subr.mxu0 0.0
      %418 = vmatpush1.msra.mxu0 0.0
      %419 = vmatprep.subr.mxu0 0.0
      %420 = vmatpush1.msra.mxu0 0.0
      %421 = vmatprep.subr.mxu0 0.0
      %422 = vmatpush1.msra.mxu0 0.0
      %423 = vmatprep.subr.mxu0 0.0
      %424 = vmatpush1.msra.mxu0 0.0
      %425 = vmatprep.mubr.f32.mxu0 0.0
      %426 = vmatmul.mubr.f32.gmra.mrb[0].mxu0 %v257
      %v427 = vpop.f32.mrb[0].mxu0
      %v428 = vadd.f32 %v243, %v427
      %v429 = vpop.f32.mrb[0].mxu0
      %v430 = vadd.f32 %v243, %v429
      %431 = vmatprep.mubr.f32.mxu0 0.0
      %432 = vmatmul.mubr.f32.gmra.mrb[0].mxu0 %v260
      %v433 = vpop.f32.mrb[0].mxu0
      %v434 = vadd.f32 %v248, %v433
      %v435 = vpop.f32.mrb[0].mxu0
      %v436 = vadd.f32 %v248, %v435
      %437 = vmatprep.mubr.f32.mxu0 0.0
      %438 = vmatmul.mubr.f32.gmra.mrb[0].mxu0 %v263
      %v439 = vpop.f32.mrb[0].mxu0
      %v440 = vadd.f32 %v253, %v439
      %v441 = vpop.f32.mrb[0].mxu0
      %v442 = vadd.f32 %v253, %v441
      %443 = vdwg.mxu0
      %444 = vst [vmem:[%s208] sm:$0xff] %v345
      %445 = vst [vmem:[%s208 + $0x8] sm:$0xff] %v347
      %446 = vst [vmem:[%s208 + $0x10] sm:$0xff] %v428
      %447 = vst [vmem:[%s208 + $0x18] sm:$0xff] %v430
      %448 = vst [vmem:[%s208 + $0x20] sm:$0xff] %v351
      %449 = vst [vmem:[%s208 + $0x28] sm:$0xff] %v353
      %450 = vst [vmem:[%s208 + $0x30] sm:$0xff] %v434
      %451 = vst [vmem:[%s208 + $0x38] sm:$0xff] %v436
      %452 = vst [vmem:[%s208 + $0x40] sm:$0xf] %v357
      %453 = vst [vmem:[%s208 + $0x48] sm:$0xf] %v359
      %454 = vst [vmem:[%s208 + $0x50] sm:$0xf] %v440
      %455 = vst [vmem:[%s208 + $0x58] sm:$0xf] %v442
      %s456 = smul.u32 4, %s19
      %p457 = scmp.lt.s32.totalorder %s18, 1
      %s458 = scalar_select %p457, %s18, 1
      %p459 = scmp.lt.s32.totalorder %s456, 3
      %s460 = scalar_select %p459, %s456, 3
      %s461 = smul.addr %s458, 12
      %s462 = sadd.s32 %s460, %s461
      %s463 = smul.addr %s462, 8
      %s464 = scalar_lea.vmem %s3, %s463
      // Predicated region
      $region33: #{fno3d_forward.7} parent=31 // pred_check
        %p465 = pneg %p116
      $region34: #{fno3d_forward.7} parent=31 // pred_check_branch
        %467 = sbr.rel (%p465) target = $region36
      $region35: #{fno3d_forward.7} parent=31 // pred_region
        %s468 = smul.u32 4, %s19
      $region36: #{fno3d_forward.7} parent=31 // pred_fallthru
        _
    $region32: #{fno3d_forward.7} parent=5 // pred_fallthru
      _
    %p469 = scmp.le.s32.totalorder 2, %s9
    // Predicated region
    $region37: #{fno3d_forward.7} parent=5 // pred_check
      %p470 = pneg %p469
    $region38: #{fno3d_forward.7} parent=5 // pred_check_branch
      %472 = sbr.rel (%p470) target = $region40
    $region39: #{fno3d_forward.7} parent=5 // pred_region
      %s473 = ssub.s32 %s9, 2
      // Predicated region
      $region41: #{fno3d_forward.7} parent=39 // pred_check
        %p474 = pneg %p122
      $region42: #{fno3d_forward.7} parent=39 // pred_check_branch
        %476 = sbr.rel (%p474) target = $region44
      $region43: #{fno3d_forward.7} parent=39 // pred_region
        %s477 = smul.u32 4, %s21
        %p478 = scmp.lt.s32.totalorder %s20, 1
        %s479 = scalar_select %p478, %s20, 1
        %p480 = scmp.lt.s32.totalorder %s477, 3
        %s481 = scalar_select %p480, %s477, 3
        %s482 = smul.addr %s479, 12
        %s483 = sadd.s32 %s481, %s482
        %s484 = smul.addr %s483, 8
        %s485 = scalar_lea.vmem %s3, %s484
      $region44: #{fno3d_forward.7} parent=39 // pred_fallthru
        _
    $region40: #{fno3d_forward.7} parent=5 // pred_fallthru
      _
  $region6: #{fno3d_forward.7} parent=0 // loop_footer
    %s13 = sadd.s32 1, %s9
  $region7: #{fno3d_forward.7} parent=0 // loop_footer_branch
    %8 = sbr.rel target = $region3
  $region8: #{fno3d_forward.7} parent=0 // loop_exit
    _

// kernel: custom-call
$region0: #{custom-call}
  %s0 = inlined_call_operand.hbm [shape: c64[20,20,4,4,4], index: 0, kind: input, shape index: {}]
  %s1 = inlined_call_operand.vmem [shape: f32[20,20,4,4,4], index: 1, kind: output, shape index: {}]
  $region1: #{custom-call} parent=0
    #allocation0 [shape = 's32[1]{0}', space=sflag, size = 0x4, scoped, tag = 'scoped memory for custom-call']
    %2 = vsyncpa [#allocation0], 0
    %s3 = sshll.u32 %s1, 4
    %s4 = int_to_ptr.vmem [resolvable:$true] %s3
    %6 = dma.hbm_to_vmem [thread:$0]  %s0, 20480, %s4, [#allocation0]
    %7 = dma.done [#allocation0], 20480
    %8 = vsyncpa [#allocation0], 1

// kernel: custom-call.1
$region0: #{custom-call.1}
  %s0 = inlined_call_operand.hbm [shape: c64[20,20,4,4,4], index: 0, kind: input, shape index: {}]
  %s1 = inlined_call_operand.vmem [shape: f32[20,20,4,4,4], index: 1, kind: output, shape index: {}]
  %s2 = scalar_lea.hbm %s0, 20480
  $region1: #{custom-call.1} parent=0
    #allocation0 [shape = 's32[1]{0}', space=sflag, size = 0x4, scoped, tag = 'scoped memory for custom-call.1']
    %3 = vsyncpa [#allocation0], 0
    %s4 = sshll.u32 %s1, 4
    %s5 = int_to_ptr.vmem [resolvable:$true] %s4
    %7 = dma.hbm_to_vmem [thread:$0]  %s2, 20480, %s5, [#allocation0]
    %8 = dma.done [#allocation0], 20480
    %9 = vsyncpa [#allocation0], 1

// kernel: reverse.8
$region0: #{reverse.8}
  #allocation0 [shape = 's32[1]{0}', space=sflag, size = 0x4, scoped, tag = 'scoped memory for reverse.8']
  %s0 = inlined_call_operand.vmem [shape: f32[2,20,8,8,6], index: 0, kind: input, shape index: {}]
  %s1 = inlined_call_operand.vmem [shape: f32[2,20,8,8,6], index: 1, kind: output, shape index: {}]
  %s2 = scalar_lea.vmem %s0, 320
  %v3 = vld [vmem:[%s2] sm:$0xff]
  %4 = vst [vmem:[%s1] sm:$0xff] %v3
  %s5 = scalar_lea.vmem %s0, 704
  %v6 = vld [vmem:[%s5] sm:$0xff]
  %s7 = scalar_lea.vmem %s1, 384
  %8 = vst [vmem:[%s7] sm:$0xff] %v6
  %s9 = scalar_lea.vmem %s0, 256
  %v10 = vld [vmem:[%s9] sm:$0xff]
  %s11 = scalar_lea.vmem %s1, 64
  %12 = vst [vmem:[%s11] sm:$0xff] %v10
  %s13 = scalar_lea.vmem %s0, 640
  %v14 = vld [vmem:[%s13] sm:$0xff]
  %s15 = scalar_lea.vmem %s1, 448
  %16 = vst [vmem:[%s15] sm:$0xff] %v14
  %s17 = scalar_lea.vmem %s0, 192
  %v18 = vld [vmem:[%s17] sm:$0xff]
  %s19 = scalar_lea.vmem %s1, 128
  %20 = vst [vmem:[%s19] sm:$0xff] %v18
  %s21 = scalar_lea.vmem %s0, 576
  %v22 = vld [vmem:[%s21] sm:$0xff]
  %s23 = scalar_lea.vmem %s1, 512
  %24 = vst [vmem:[%s23] sm:$0xff] %v22
  %s25 = scalar_lea.vmem %s0, 128
  %v26 = vld [vmem:[%s25] sm:$0xff]
  %s27 = scalar_lea.vmem %s1, 192
  %28 = vst [vmem:[%s27] sm:$0xff] %v26
  %s29 = scalar_lea.vmem %s0, 512
  %v30 = vld [vmem:[%s29] sm:$0xff]
  %s31 = scalar_lea.vmem %s1, 576
  %32 = vst [vmem:[%s31] sm:$0xff] %v30
  %s33 = scalar_lea.vmem %s0, 64
  %v34 = vld [vmem:[%s33] sm:$0xff]
  %s35 = scalar_lea.vmem %s1, 256
  %36 = vst [vmem:[%s35] sm:$0xff] %v34
  %s37 = scalar_lea.vmem %s0, 448
  %v38 = vld [vmem:[%s37] sm:$0xff]
  %s39 = scalar_lea.vmem %s1, 640
  %40 = vst [vmem:[%s39] sm:$0xff] %v38
  %v41 = vld [vmem:[%s0] sm:$0xff]
  %s42 = scalar_lea.vmem %s1, 320
  %43 = vst [vmem:[%s42] sm:$0xff] %v41
  %s44 = scalar_lea.vmem %s0, 384
  %v45 = vld [vmem:[%s44] sm:$0xff]
  %s46 = scalar_lea.vmem %s1, 704
  %47 = vst [vmem:[%s46] sm:$0xff] %v45
  %s48 = scalar_lea.vmem %s0, 328
  %v49 = vld [vmem:[%s48] sm:$0xff]
  %s50 = scalar_lea.vmem %s1, 8
  %51 = vst [vmem:[%s50] sm:$0xff] %v49
  %s52 = scalar_lea.vmem %s0, 712
  %v53 = vld [vmem:[%s52] sm:$0xff]
  %s54 = scalar_lea.vmem %s1, 392
  %55 = vst [vmem:[%s54] sm:$0xff] %v53
  %s56 = scalar_lea.vmem %s0, 264
  %v57 = vld [vmem:[%s56] sm:$0xff]
  %s58 = scalar_lea.vmem %s1, 72
  %59 = vst [vmem:[%s58] sm:$0xff] %v57
  %s60 = scalar_lea.vmem %s0, 648
  %v61 = vld [vmem:[%s60] sm:$0xff]
  %s62 = scalar_lea.vmem %s1, 456
  %63 = vst [vmem:[%s62] sm:$0xff] %v61
  %s64 = scalar_lea.vmem %s0, 200
  %v65 = vld [vmem:[%s64] sm:$0xff]
  %s66 = scalar_lea.vmem %s1, 136
  %67 = vst [vmem:[%s66] sm:$0xff] %v65
  %s68 = scalar_lea.vmem %s0, 584
  %v69 = vld [vmem:[%s68] sm:$0xff]
  %s70 = scalar_lea.vmem %s1, 520
  %71 = vst [vmem:[%s70] sm:$0xff] %v69
  %s72 = scalar_lea.vmem %s0, 136
  %v73 = vld [vmem:[%s72] sm:$0xff]
  %s74 = scalar_lea.vmem %s1, 200
  %75 = vst [vmem:[%s74] sm:$0xff] %v73
  %s76 = scalar_lea.vmem %s0, 520
  %v77 = vld [vmem:[%s76] sm:$0xff]
  %s78 = scalar_lea.vmem %s1, 584
  %79 = vst [vmem:[%s78] sm:$0xff] %v77
  %s80 = scalar_lea.vmem %s0, 72
  %v81 = vld [vmem:[%s80] sm:$0xff]
  %s82 = scalar_lea.vmem %s1, 264
  %83 = vst [vmem:[%s82] sm:$0xff] %v81
  %s84 = scalar_lea.vmem %s0, 456
  %v85 = vld [vmem:[%s84] sm:$0xff]
  %s86 = scalar_lea.vmem %s1, 648
  %87 = vst [vmem:[%s86] sm:$0xff] %v85
  %s88 = scalar_lea.vmem %s0, 8
  %v89 = vld [vmem:[%s88] sm:$0xff]
  %s90 = scalar_lea.vmem %s1, 328
  %91 = vst [vmem:[%s90] sm:$0xff] %v89
  %s92 = scalar_lea.vmem %s0, 392
  %v93 = vld [vmem:[%s92] sm:$0xff]
  %s94 = scalar_lea.vmem %s1, 712
  %95 = vst [vmem:[%s94] sm:$0xff] %v93
  %s96 = scalar_lea.vmem %s0, 336
  %v97 = vld [vmem:[%s96] sm:$0xff]
  %s98 = scalar_lea.vmem %s1, 16
  %99 = vst [vmem:[%s98] sm:$0xff] %v97
  %s100 = scalar_lea.vmem %s0, 720
  %v101 = vld [vmem:[%s100] sm:$0xff]
  %s102 = scalar_lea.vmem %s1, 400
  %103 = vst [vmem:[%s102] sm:$0xff] %v101
  %s104 = scalar_lea.vmem %s0, 272
  %v105 = vld [vmem:[%s104] sm:$0xff]
  %s106 = scalar_lea.vmem %s1, 80
  %107 = vst [vmem:[%s106] sm:$0xff] %v105
  %s108 = scalar_lea.vmem %s0, 656
  %v109 = vld [vmem:[%s108] sm:$0xff]
  %s110 = scalar_lea.vmem %s1, 464
  %111 = vst [vmem:[%s110] sm:$0xff] %v109
  %s112 = scalar_lea.vmem %s0, 208
  %v113 = vld [vmem:[%s112] sm:$0xff]
  %s114 = scalar_lea.vmem %s1, 144
  %115 = vst [vmem:[%s114] sm:$0xff] %v113
  %s116 = scalar_lea.vmem %s0, 592
  %v117 = vld [vmem:[%s116] sm:$0xff]
  %s118 = scalar_lea.vmem %s1, 528
  %119 = vst [vmem:[%s118] sm:$0xff] %v117
  %s120 = scalar_lea.vmem %s0, 144
  %v121 = vld [vmem:[%s120] sm:$0xff]
  %s122 = scalar_lea.vmem %s1, 208
  %123 = vst [vmem:[%s122] sm:$0xff] %v121
  %s124 = scalar_lea.vmem %s0, 528
  %v125 = vld [vmem:[%s124] sm:$0xff]
  %s126 = scalar_lea.vmem %s1, 592
  %127 = vst [vmem:[%s126] sm:$0xff] %v125
  %s128 = scalar_lea.vmem %s0, 80
  %v129 = vld [vmem:[%s128] sm:$0xff]
  %s130 = scalar_lea.vmem %s1, 272
  %131 = vst [vmem:[%s130] sm:$0xff] %v129
  %s132 = scalar_lea.vmem %s0, 464
  %v133 = vld [vmem:[%s132] sm:$0xff]
  %s134 = scalar_lea.vmem %s1, 656
  %135 = vst [vmem:[%s134] sm:$0xff] %v133
  %s136 = scalar_lea.vmem %s0, 16
  %v137 = vld [vmem:[%s136] sm:$0xff]
  %s138 = scalar_lea.vmem %s1, 336
  %139 = vst [vmem:[%s138] sm:$0xff] %v137
  %s140 = scalar_lea.vmem %s0, 400
  %v141 = vld [vmem:[%s140] sm:$0xff]
  %s142 = scalar_lea.vmem %s1, 720
  %143 = vst [vmem:[%s142] sm:$0xff] %v141
  %s144 = scalar_lea.vmem %s0, 344
  %v145 = vld [vmem:[%s144] sm:$0xff]
  %s146 = scalar_lea.vmem %s1, 24
  %147 = vst [vmem:[%s146] sm:$0xff] %v145
  %s148 = scalar_lea.vmem %s0, 728
  %v149 = vld [vmem:[%s148] sm:$0xff]
  %s150 = scalar_lea.vmem %s1, 408
  %151 = vst [vmem:[%s150] sm:$0xff] %v149
  %s152 = scalar_lea.vmem %s0, 280
  %v153 = vld [vmem:[%s152] sm:$0xff]
  %s154 = scalar_lea.vmem %s1, 88
  %155 = vst [vmem:[%s154] sm:$0xff] %v153
  %s156 = scalar_lea.vmem %s0, 664
  %v157 = vld [vmem:[%s156] sm:$0xff]
  %s158 = scalar_lea.vmem %s1, 472
  %159 = vst [vmem:[%s158] sm:$0xff] %v157
  %s160 = scalar_lea.vmem %s0, 216
  %v161 = vld [vmem:[%s160] sm:$0xff]
  %s162 = scalar_lea.vmem %s1, 152
  %163 = vst [vmem:[%s162] sm:$0xff] %v161
  %s164 = scalar_lea.vmem %s0, 600
  %v165 = vld [vmem:[%s164] sm:$0xff]
  %s166 = scalar_lea.vmem %s1, 536
  %167 = vst [vmem:[%s166] sm:$0xff] %v165
  %s168 = scalar_lea.vmem %s0, 152
  %v169 = vld [vmem:[%s168] sm:$0xff]
  %s170 = scalar_lea.vmem %s1, 216
  %171 = vst [vmem:[%s170] sm:$0xff] %v169
  %s172 = scalar_lea.vmem %s0, 536
  %v173 = vld [vmem:[%s172] sm:$0xff]
  %s174 = scalar_lea.vmem %s1, 600
  %175 = vst [vmem:[%s174] sm:$0xff] %v173
  %s176 = scalar_lea.vmem %s0, 88
  %v177 = vld [vmem:[%s176] sm:$0xff]
  %s178 = scalar_lea.vmem %s1, 280
  %179 = vst [vmem:[%s178] sm:$0xff] %v177
  %s180 = scalar_lea.vmem %s0, 472
  %v181 = vld [vmem:[%s180] sm:$0xff]
  %s182 = scalar_lea.vmem %s1, 664
  %183 = vst [vmem:[%s182] sm:$0xff] %v181
  %s184 = scalar_lea.vmem %s0, 24
  %v185 = vld [vmem:[%s184] sm:$0xff]
  %s186 = scalar_lea.vmem %s1, 344
  %187 = vst [vmem:[%s186] sm:$0xff] %v185
  %s188 = scalar_lea.vmem %s0, 408
  %v189 = vld [vmem:[%s188] sm:$0xff]
  %s190 = scalar_lea.vmem %s1, 728
  %191 = vst [vmem:[%s190] sm:$0xff] %v189
  %s192 = scalar_lea.vmem %s0, 352
  %v193 = vld [vmem:[%s192] sm:$0xff]
  %s194 = scalar_lea.vmem %s1, 32
  %195 = vst [vmem:[%s194] sm:$0xff] %v193
  %s196 = scalar_lea.vmem %s0, 736
  %v197 = vld [vmem:[%s196] sm:$0xff]
  %s198 = scalar_lea.vmem %s1, 416
  %199 = vst [vmem:[%s198] sm:$0xff] %v197
  %s200 = scalar_lea.vmem %s0, 288
  %v201 = vld [vmem:[%s200] sm:$0xff]
  %s202 = scalar_lea.vmem %s1, 96
  %203 = vst [vmem:[%s202] sm:$0xff] %v201
  %s204 = scalar_lea.vmem %s0, 672
  %v205 = vld [vmem:[%s204] sm:$0xff]
  %s206 = scalar_lea.vmem %s1, 480
  %207 = vst [vmem:[%s206] sm:$0xff] %v205
  %s208 = scalar_lea.vmem %s0, 224
  %v209 = vld [vmem:[%s208] sm:$0xff]
  %s210 = scalar_lea.vmem %s1, 160
  %211 = vst [vmem:[%s210] sm:$0xff] %v209
  %s212 = scalar_lea.vmem %s0, 608
  %v213 = vld [vmem:[%s212] sm:$0xff]
  %s214 = scalar_lea.vmem %s1, 544
  %215 = vst [vmem:[%s214] sm:$0xff] %v213
  %s216 = scalar_lea.vmem %s0, 160
  %v217 = vld [vmem:[%s216] sm:$0xff]
  %s218 = scalar_lea.vmem %s1, 224
  %219 = vst [vmem:[%s218] sm:$0xff] %v217
  %s220 = scalar_lea.vmem %s0, 544
  %v221 = vld [vmem:[%s220] sm:$0xff]
  %s222 = scalar_lea.vmem %s1, 608
  %223 = vst [vmem:[%s222] sm:$0xff] %v221
  %s224 = scalar_lea.vmem %s0, 96
  %v225 = vld [vmem:[%s224] sm:$0xff]
  %s226 = scalar_lea.vmem %s1, 288
  %227 = vst [vmem:[%s226] sm:$0xff] %v225
  %s228 = scalar_lea.vmem %s0, 480
  %v229 = vld [vmem:[%s228] sm:$0xff]
  %s230 = scalar_lea.vmem %s1, 672
  %231 = vst [vmem:[%s230] sm:$0xff] %v229
  %s232 = scalar_lea.vmem %s0, 32
  %v233 = vld [vmem:[%s232] sm:$0xff]
  %s234 = scalar_lea.vmem %s1, 352
  %235 = vst [vmem:[%s234] sm:$0xff] %v233
  %s236 = scalar_lea.vmem %s0, 416
  %v237 = vld [vmem:[%s236] sm:$0xff]
  %s238 = scalar_lea.vmem %s1, 736
  %239 = vst [vmem:[%s238] sm:$0xff] %v237
  %s240 = scalar_lea.vmem %s0, 360
  %v241 = vld [vmem:[%s240] sm:$0xff]
  %s242 = scalar_lea.vmem %s1, 40
  %243 = vst [vmem:[%s242] sm:$0xff] %v241
  %s244 = scalar_lea.vmem %s0, 744
  %v245 = vld [vmem:[%s244] sm:$0xff]
  %s246 = scalar_lea.vmem %s1, 424
  %247 = vst [vmem:[%s246] sm:$0xff] %v245
  %s248 = scalar_lea.vmem %s0, 296
  %v249 = vld [vmem:[%s248] sm:$0xff]
  %s250 = scalar_lea.vmem %s1, 104
  %251 = vst [vmem:[%s250] sm:$0xff] %v249
  %s252 = scalar_lea.vmem %s0, 680
  %v253 = vld [vmem:[%s252] sm:$0xff]
  %s254 = scalar_lea.vmem %s1, 488
  %255 = vst [vmem:[%s254] sm:$0xff] %v253
  %s256 = scalar_lea.vmem %s0, 232
  %v257 = vld [vmem:[%s256] sm:$0xff]
  %s258 = scalar_lea.vmem %s1, 168
  %259 = vst [vmem:[%s258] sm:$0xff] %v257
  %s260 = scalar_lea.vmem %s0, 616
  %v261 = vld [vmem:[%s260] sm:$0xff]
  %s262 = scalar_lea.vmem %s1, 552
  %263 = vst [vmem:[%s262] sm:$0xff] %v261
  %s264 = scalar_lea.vmem %s0, 168
  %v265 = vld [vmem:[%s264] sm:$0xff]
  %s266 = scalar_lea.vmem %s1, 232
  %267 = vst [vmem:[%s266] sm:$0xff] %v265
  %s268 = scalar_lea.vmem %s0, 552
  %v269 = vld [vmem:[%s268] sm:$0xff]
  %s270 = scalar_lea.vmem %s1, 616
  %271 = vst [vmem:[%s270] sm:$0xff] %v269
  %s272 = scalar_lea.vmem %s0, 104
  %v273 = vld [vmem:[%s272] sm:$0xff]
  %s274 = scalar_lea.vmem %s1, 296
  %275 = vst [vmem:[%s274] sm:$0xff] %v273
  %s276 = scalar_lea.vmem %s0, 488
  %v277 = vld [vmem:[%s276] sm:$0xff]
  %s278 = scalar_lea.vmem %s1, 680
  %279 = vst [vmem:[%s278] sm:$0xff] %v277
  %s280 = scalar_lea.vmem %s0, 40
  %v281 = vld [vmem:[%s280] sm:$0xff]
  %s282 = scalar_lea.vmem %s1, 360
  %283 = vst [vmem:[%s282] sm:$0xff] %v281
  %s284 = scalar_lea.vmem %s0, 424
  %v285 = vld [vmem:[%s284] sm:$0xff]
  %s286 = scalar_lea.vmem %s1, 744
  %287 = vst [vmem:[%s286] sm:$0xff] %v285
  %s288 = scalar_lea.vmem %s0, 368
  %v289 = vld [vmem:[%s288] sm:$0xff]
  %s290 = scalar_lea.vmem %s1, 48
  %291 = vst [vmem:[%s290] sm:$0xff] %v289
  %s292 = scalar_lea.vmem %s0, 752
  %v293 = vld [vmem:[%s292] sm:$0xff]
  %s294 = scalar_lea.vmem %s1, 432
  %295 = vst [vmem:[%s294] sm:$0xff] %v293
  %s296 = scalar_lea.vmem %s0, 304
  %v297 = vld [vmem:[%s296] sm:$0xff]
  %s298 = scalar_lea.vmem %s1, 112
  %299 = vst [vmem:[%s298] sm:$0xff] %v297
  %s300 = scalar_lea.vmem %s0, 688
  %v301 = vld [vmem:[%s300] sm:$0xff]
  %s302 = scalar_lea.vmem %s1, 496
  %303 = vst [vmem:[%s302] sm:$0xff] %v301
  %s304 = scalar_lea.vmem %s0, 240
  %v305 = vld [vmem:[%s304] sm:$0xff]
  %s306 = scalar_lea.vmem %s1, 176
  %307 = vst [vmem:[%s306] sm:$0xff] %v305
  %s308 = scalar_lea.vmem %s0, 624
  %v309 = vld [vmem:[%s308] sm:$0xff]
  %s310 = scalar_lea.vmem %s1, 560
  %311 = vst [vmem:[%s310] sm:$0xff] %v309
  %s312 = scalar_lea.vmem %s0, 176
  %v313 = vld [vmem:[%s312] sm:$0xff]
  %s314 = scalar_lea.vmem %s1, 240
  %315 = vst [vmem:[%s314] sm:$0xff] %v313
  %s316 = scalar_lea.vmem %s0, 560
  %v317 = vld [vmem:[%s316] sm:$0xff]
  %s318 = scalar_lea.vmem %s1, 624
  %319 = vst [vmem:[%s318] sm:$0xff] %v317
  %s320 = scalar_lea.vmem %s0, 112
  %v321 = vld [vmem:[%s320] sm:$0xff]
  %s322 = scalar_lea.vmem %s1, 304
  %323 = vst [vmem:[%s322] sm:$0xff] %v321
  %s324 = scalar_lea.vmem %s0, 496
  %v325 = vld [vmem:[%s324] sm:$0xff]
  %s326 = scalar_lea.vmem %s1, 688
  %327 = vst [vmem:[%s326] sm:$0xff] %v325
  %s328 = scalar_lea.vmem %s0, 48
  %v329 = vld [vmem:[%s328] sm:$0xff]
  %s330 = scalar_lea.vmem %s1, 368
  %331 = vst [vmem:[%s330] sm:$0xff] %v329
  %s332 = scalar_lea.vmem %s0, 432
  %v333 = vld [vmem:[%s332] sm:$0xff]
  %s334 = scalar_lea.vmem %s1, 752
  %335 = vst [vmem:[%s334] sm:$0xff] %v333
  %s336 = scalar_lea.vmem %s0, 376
  %v337 = vld [vmem:[%s336] sm:$0xff]
  %s338 = scalar_lea.vmem %s1, 56
  %339 = vst [vmem:[%s338] sm:$0xff] %v337
  %s340 = scalar_lea.vmem %s0, 760
  %v341 = vld [vmem:[%s340] sm:$0xff]
  %s342 = scalar_lea.vmem %s1, 440
  %343 = vst [vmem:[%s342] sm:$0xff] %v341
  %s344 = scalar_lea.vmem %s0, 312
  %v345 = vld [vmem:[%s344] sm:$0xff]
  %s346 = scalar_lea.vmem %s1, 120
  %347 = vst [vmem:[%s346] sm:$0xff] %v345
  %s348 = scalar_lea.vmem %s0, 696
  %v349 = vld [vmem:[%s348] sm:$0xff]
  %s350 = scalar_lea.vmem %s1, 504
  %351 = vst [vmem:[%s350] sm:$0xff] %v349
  %s352 = scalar_lea.vmem %s0, 248
  %v353 = vld [vmem:[%s352] sm:$0xff]
  %s354 = scalar_lea.vmem %s1, 184
  %355 = vst [vmem:[%s354] sm:$0xff] %v353
  %s356 = scalar_lea.vmem %s0, 632
  %v357 = vld [vmem:[%s356] sm:$0xff]
  %s358 = scalar_lea.vmem %s1, 568
  %359 = vst [vmem:[%s358] sm:$0xff] %v357
  %s360 = scalar_lea.vmem %s0, 184
  %v361 = vld [vmem:[%s360] sm:$0xff]
  %s362 = scalar_lea.vmem %s1, 248
  %363 = vst [vmem:[%s362] sm:$0xff] %v361
  %s364 = scalar_lea.vmem %s0, 568
  %v365 = vld [vmem:[%s364] sm:$0xff]
  %s366 = scalar_lea.vmem %s1, 632
  %367 = vst [vmem:[%s366] sm:$0xff] %v365
  %s368 = scalar_lea.vmem %s0, 120
  %v369 = vld [vmem:[%s368] sm:$0xff]
  %s370 = scalar_lea.vmem %s1, 312
  %371 = vst [vmem:[%s370] sm:$0xff] %v369
  %s372 = scalar_lea.vmem %s0, 504
  %v373 = vld [vmem:[%s372] sm:$0xff]
  %s374 = scalar_lea.vmem %s1, 696
  %375 = vst [vmem:[%s374] sm:$0xff] %v373
  %s376 = scalar_lea.vmem %s0, 56
  %v377 = vld [vmem:[%s376] sm:$0xff]
  %s378 = scalar_lea.vmem %s1, 376
  %379 = vst [vmem:[%s378] sm:$0xff] %v377
  %s380 = scalar_lea.vmem %s0, 440
  %v381 = vld [vmem:[%s380] sm:$0xff]
  %s382 = scalar_lea.vmem %s1, 760
  %383 = vst [vmem:[%s382] sm:$0xff] %v381

// kernel: fno3d_forward.8
$region0: #{fno3d_forward.8}
  #allocation0 [shape = 'u32[]', space=smem, size = 0x4, offset = 0x4, fixed_abs, tag = 'smem constant byte address 0x4 - core index']
  #allocation1 [shape = 'u32[144,128]{1,0:T(1,128)}', space=vmem, size = 0x12000, scoped, tag = 'internal scratch']
  %s0 = inlined_call_operand.vmem [shape: f32[2,20,896], index: 0, kind: input, shape index: {}]
  %s1 = inlined_call_operand.vmem [shape: f32[2,20,896], index: 1, kind: input, shape index: {}]
  %s2 = inlined_call_operand.vmem [shape: f32[20,20], index: 2, kind: input, shape index: {}]
  %s3 = inlined_call_operand.vmem [shape: f32[20,1], index: 3, kind: input, shape index: {}]
  %s4 = inlined_call_operand.vmem [shape: f32[2,20,896], index: 4, kind: output, shape index: {}]
  %s5 = sld [smem:[#allocation0]]
  $region49: #{fno3d_forward.8} parent=0
    _
  %s7 = ssub.s32 1, %s5
  %s8 = scalar_select 0, %s7, %s5
  loop: start=0, step=1, limit=4
  $region2: #{fno3d_forward.8} parent=0 // loop_pre_header
    _
  $region3: #{fno3d_forward.8} parent=0 // loop_header
    %s10 = sphi 0, %s14
    %p11 = scmp.ge.s32.totalorder %s10, 4
    %s17 = sphi 0, %s29
    %s18 = sphi 0, %s25
    %s19 = sphi 0, %s17
    %s20 = sphi 0, %s18
    %s21 = sphi 0, %s19
    %s22 = sphi 0, %s20
    %s34 = sphi 0, %s36
    %s37 = sphi 0, %s34
    %s38 = sphi 0, %s37
    %s54 = sphi 0, %s38
    %s62 = sphi 0, %s64
    %s65 = sphi 0, %s62
    %s66 = sphi 0, %s65
    %s82 = sphi 0, %s66
    %s86 = sphi 0, %s86
    %s88 = sphi 0, %s86
    %s89 = sphi 0, %s88
    %s103 = sphi 0, %s89
    %s107 = sphi 0, %s107
    %s109 = sphi 0, %s107
    %s110 = sphi 0, %s109
    %s124 = sphi 0, %s110
    %s132 = sphi 0, %s134
    %s135 = sphi 0, %s132
    %s136 = sphi 0, %s135
    %s152 = sphi 0, %s136
  $region4: #{fno3d_forward.8} parent=0 // loop_header_branch
    %13 = sbr.rel (%p11) target = $region8
  $region5: #{fno3d_forward.8} parent=0 // loop_body
    %s15 = ssub.s32 %s10, 1
    %s16 = ssub.s32 %s10, 2
    %s23 = sadd.s32 1, %s18
    %p24 = scmp.ge.s32.totalorder %s23, 1
    %s25 = scalar_select %p24, 0, %s23
    %s26 = sadd.s32 1, %s17
    %s27 = scalar_select %p24, %s26, %s17
    %p28 = scmp.ge.s32.totalorder %s27, 2
    %s29 = scalar_select %p28, 0, %s27
    %s30 = ssub.s32 %s17, %s29
    %s31 = ssub.s32 %s18, %s25
    %s32 = sor.u32 %s30, %s31
    %p33 = scmp.eq.s32.totalorder %s32, 0
    %s35 = sadd.s32 %s34, 1
    %s36 = scalar_select %p33, %s34, %s35
    %p39 = pneg %p33
    %p40 = scmp.eq.s32.totalorder %s10, 1
    %p41 = por %p39, %p40
    %p42 = scmp.ne.s32.totalorder %s34, %s37
    %p43 = scmp.eq.s32.totalorder %s10, 0
    %p44 = por %p42, %p43
    %p45 = scmp.ne.s32.totalorder %s34, %s37
    %p46 = scmp.eq.s32.totalorder %s15, 1
    %p47 = por %p45, %p46
    %p48 = scmp.ne.s32.totalorder %s37, %s38
    %p49 = scmp.eq.s32.totalorder %s15, 0
    %p50 = por %p48, %p49
    %p51 = scmp.ne.s32.totalorder %s37, %s38
    %p52 = scmp.eq.s32.totalorder %s16, 1
    %p53 = por %p51, %p52
    %p55 = scmp.ne.s32.totalorder %s38, %s54
    %p56 = scmp.eq.s32.totalorder %s16, 0
    %p57 = por %p55, %p56
    %s58 = ssub.s32 %s17, %s29
    %s59 = ssub.s32 %s18, %s25
    %s60 = sor.u32 %s58, %s59
    %p61 = scmp.eq.s32.totalorder %s60, 0
    %s63 = sadd.s32 %s62, 1
    %s64 = scalar_select %p61, %s62, %s63
    %p67 = pneg %p61
    %p68 = scmp.eq.s32.totalorder %s10, 1
    %p69 = por %p67, %p68
    %p70 = scmp.ne.s32.totalorder %s62, %s65
    %p71 = scmp.eq.s32.totalorder %s10, 0
    %p72 = por %p70, %p71
    %p73 = scmp.ne.s32.totalorder %s62, %s65
    %p74 = scmp.eq.s32.totalorder %s15, 1
    %p75 = por %p73, %p74
    %p76 = scmp.ne.s32.totalorder %s65, %s66
    %p77 = scmp.eq.s32.totalorder %s15, 0
    %p78 = por %p76, %p77
    %p79 = scmp.ne.s32.totalorder %s65, %s66
    %p80 = scmp.eq.s32.totalorder %s16, 1
    %p81 = por %p79, %p80
    %p83 = scmp.ne.s32.totalorder %s66, %s82
    %p84 = scmp.eq.s32.totalorder %s16, 0
    %p85 = por %p83, %p84
    %s87 = sadd.s32 %s86, 1
    %p90 = scmp.eq.s32.totalorder %s10, 1
    %p91 = scmp.ne.s32.totalorder %s86, %s88
    %p92 = scmp.eq.s32.totalorder %s10, 0
    %p93 = por %p91, %p92
    %p94 = scmp.ne.s32.totalorder %s86, %s88
    %p95 = scmp.eq.s32.totalorder %s15, 1
    %p96 = por %p94, %p95
    %p97 = scmp.ne.s32.totalorder %s88, %s89
    %p98 = scmp.eq.s32.totalorder %s15, 0
    %p99 = por %p97, %p98
    %p100 = scmp.ne.s32.totalorder %s88, %s89
    %p101 = scmp.eq.s32.totalorder %s16, 1
    %p102 = por %p100, %p101
    %p104 = scmp.ne.s32.totalorder %s89, %s103
    %p105 = scmp.eq.s32.totalorder %s16, 0
    %p106 = por %p104, %p105
    %s108 = sadd.s32 %s107, 1
    %p111 = scmp.eq.s32.totalorder %s10, 1
    %p112 = scmp.ne.s32.totalorder %s107, %s109
    %p113 = scmp.eq.s32.totalorder %s10, 0
    %p114 = por %p112, %p113
    %p115 = scmp.ne.s32.totalorder %s107, %s109
    %p116 = scmp.eq.s32.totalorder %s15, 1
    %p117 = por %p115, %p116
    %p118 = scmp.ne.s32.totalorder %s109, %s110
    %p119 = scmp.eq.s32.totalorder %s15, 0
    %p120 = por %p118, %p119
    %p121 = scmp.ne.s32.totalorder %s109, %s110
    %p122 = scmp.eq.s32.totalorder %s16, 1
    %p123 = por %p121, %p122
    %p125 = scmp.ne.s32.totalorder %s110, %s124
    %p126 = scmp.eq.s32.totalorder %s16, 0
    %p127 = por %p125, %p126
    %s128 = ssub.s32 %s17, %s29
    %s129 = ssub.s32 %s18, %s25
    %s130 = sor.u32 %s128, %s129
    %p131 = scmp.eq.s32.totalorder %s130, 0
    %s133 = sadd.s32 %s132, 1
    %s134 = scalar_select %p131, %s132, %s133
    %p137 = pneg %p131
    %p138 = scmp.eq.s32.totalorder %s10, 1
    %p139 = por %p137, %p138
    %p140 = scmp.ne.s32.totalorder %s132, %s135
    %p141 = scmp.eq.s32.totalorder %s10, 0
    %p142 = por %p140, %p141
    %p143 = scmp.ne.s32.totalorder %s132, %s135
    %p144 = scmp.eq.s32.totalorder %s15, 1
    %p145 = por %p143, %p144
    %p146 = scmp.ne.s32.totalorder %s135, %s136
    %p147 = scmp.eq.s32.totalorder %s15, 0
    %p148 = por %p146, %p147
    %p149 = scmp.ne.s32.totalorder %s135, %s136
    %p150 = scmp.eq.s32.totalorder %s16, 1
    %p151 = por %p149, %p150
    %p153 = scmp.ne.s32.totalorder %s136, %s152
    %p154 = scmp.eq.s32.totalorder %s16, 0
    %p155 = por %p153, %p154
    %p156 = scmp.le.s32.totalorder 1, %s10
    %p157 = scmp.lt.s32.totalorder %s10, 3
    %p158 = pnand %p156, %p157
    %p159 = pneg %p158
    // Predicated region
    $region9: #{fno3d_forward.8} parent=5 // pred_check
      _
    $region10: #{fno3d_forward.8} parent=5 // pred_check_branch
      %161 = sbr.rel (%p158) target = $region12
    $region11: #{fno3d_forward.8} parent=5 // pred_region
      %s162 = ssub.s32 %s10, 1
      // Predicated region
      $region13: #{fno3d_forward.8} parent=11 // pred_check
        %p163 = pneg %p99
      $region14: #{fno3d_forward.8} parent=11 // pred_check_branch
        %165 = sbr.rel (%p163) target = $region16
      $region15: #{fno3d_forward.8} parent=11 // pred_region
        _
      $region16: #{fno3d_forward.8} parent=11 // pred_fallthru
        _
      // Predicated region
      $region17: #{fno3d_forward.8} parent=11 // pred_check
        %p166 = pneg %p120
      $region18: #{fno3d_forward.8} parent=11 // pred_check_branch
        %168 = sbr.rel (%p166) target = $region20
      $region19: #{fno3d_forward.8} parent=11 // pred_region
        _
      $region20: #{fno3d_forward.8} parent=11 // pred_fallthru
        _
    $region12: #{fno3d_forward.8} parent=5 // pred_fallthru
      _
    %p169 = scmp.lt.s32.totalorder %s10, 2
    // Predicated region
    $region21: #{fno3d_forward.8} parent=5 // pred_check
      %p170 = pneg %p169
    $region22: #{fno3d_forward.8} parent=5 // pred_check_branch
      %172 = sbr.rel (%p170) target = $region24
    $region23: #{fno3d_forward.8} parent=5 // pred_region
      // Predicated region
      $region25: #{fno3d_forward.8} parent=23 // pred_check
        %p173 = pneg %p44
      $region26: #{fno3d_forward.8} parent=23 // pred_check_branch
        %175 = sbr.rel (%p173) target = $region28
      $region27: #{fno3d_forward.8} parent=23 // pred_region
        %s176 = smul.u32 7, %s18
        %p177 = scmp.lt.s32.totalorder %s17, 1
        %s178 = scalar_select %p177, %s17, 1
        %p179 = scmp.lt.s32.totalorder %s176, 6
        %s180 = scalar_select %p179, %s176, 6
        %s181 = smul.addr %s178, 21
        %s182 = sadd.s32 %s180, %s181
        %s183 = smul.addr %s182, 8
        %s184 = scalar_lea.vmem %s0, %s183
        %s185 = smul.u32 7, %s18
      $region28: #{fno3d_forward.8} parent=23 // pred_fallthru
        _
      // Predicated region
      $region29: #{fno3d_forward.8} parent=23 // pred_check
        %p186 = pneg %p72
      $region30: #{fno3d_forward.8} parent=23 // pred_check_branch
        %188 = sbr.rel (%p186) target = $region32
      $region31: #{fno3d_forward.8} parent=23 // pred_region
        %s189 = smul.u32 7, %s18
        %p190 = scmp.lt.s32.totalorder %s17, 1
        %s191 = scalar_select %p190, %s17, 1
        %p192 = scmp.lt.s32.totalorder %s189, 6
        %s193 = scalar_select %p192, %s189, 6
        %s194 = smul.addr %s191, 21
        %s195 = sadd.s32 %s193, %s194
        %s196 = smul.addr %s195, 8
        %s197 = scalar_lea.vmem %s1, %s196
        %s198 = smul.u32 7, %s18
      $region32: #{fno3d_forward.8} parent=23 // pred_fallthru
        _
    $region24: #{fno3d_forward.8} parent=5 // pred_fallthru
      _
    %p199 = scmp.le.s32.totalorder 1, %s10
    %p200 = scmp.lt.s32.totalorder %s10, 3
    %p201 = pnand %p199, %p200
    %p202 = pneg %p201
    // Predicated region
    $region33: #{fno3d_forward.8} parent=5 // pred_check
      _
    $region34: #{fno3d_forward.8} parent=5 // pred_check_branch
      %204 = sbr.rel (%p201) target = $region36
    $region35: #{fno3d_forward.8} parent=5 // pred_region
      %s205 = ssub.s32 %s10, 1
      %s206 = smul.u32 7, %s20
      %p207 = scmp.lt.s32.totalorder %s19, 1
      %s208 = scalar_select %p207, %s19, 1
      %p209 = scmp.lt.s32.totalorder %s206, 6
      %s210 = scalar_select %p209, %s206, 6
      %s211 = smul.addr %s208, 21
      %s212 = sadd.s32 %s210, %s211
      %s213 = smul.addr %s212, 8
      %s214 = scalar_lea.vmem %s0, %s213
      %p215 = pneg %p50
      %p216 = pneg %p47
      %s217 = smul.u32 7, %s20
      %p218 = scmp.lt.s32.totalorder %s19, 1
      %s219 = scalar_select %p218, %s19, 1
      %p220 = scmp.lt.s32.totalorder %s217, 6
      %s221 = scalar_select %p220, %s217, 6
      %s222 = smul.addr %s219, 21
      %s223 = sadd.s32 %s221, %s222
      %s224 = smul.addr %s223, 8
      %s225 = scalar_lea.vmem %s1, %s224
      %p226 = pneg %p78
      %p227 = pneg %p75
      %p228 = pneg %p99
      %p229 = pneg %p96
      %p230 = pneg %p120
      %p231 = pneg %p117
      %p232 = pneg %p148
      %p233 = pneg %p145
      %s234 = smul.u32 7, %s20
      %p235 = scmp.lt.s32.totalorder %s19, 1
      %s236 = scalar_select %p235, %s19, 1
      %p237 = scmp.lt.s32.totalorder %s234, 6
      %s238 = scalar_select %p237, %s234, 6
      %s239 = smul.addr %s236, 21
      %s240 = sadd.s32 %s238, %s239
      %s241 = smul.addr %s240, 8
      %s242 = scalar_lea.vmem %s4, %s241
      %s243 = smul.u32 7, %s20
      %p244 = scmp.lt.s32.totalorder %s19, 1
      %s245 = scalar_select %p244, %s19, 1
      %p246 = scmp.lt.s32.totalorder %s243, 6
      %s247 = scalar_select %p246, %s243, 6
      %s248 = smul.addr %s245, 21
      %s249 = sadd.s32 %s247, %s248
      %s250 = smul.addr %s249, 8
      %s251 = scalar_lea.vmem %s0, %s250
      %s252 = smul.u32 7, %s20
      %s253 = smul.u32 7, %s20
      %p254 = scmp.lt.s32.totalorder %s19, 1
      %s255 = scalar_select %p254, %s19, 1
      %p256 = scmp.lt.s32.totalorder %s253, 6
      %s257 = scalar_select %p256, %s253, 6
      %s258 = smul.addr %s255, 21
      %s259 = sadd.s32 %s257, %s258
      %s260 = smul.addr %s259, 8
      %s261 = scalar_lea.vmem %s1, %s260
      %s262 = smul.u32 7, %s20
      %s263 = smul.u32 7, %s20
      %p264 = scmp.lt.s32.totalorder %s19, 1
      %s265 = scalar_select %p264, %s19, 1
      %p266 = scmp.lt.s32.totalorder %s263, 6
      %s267 = scalar_select %p266, %s263, 6
      %s268 = smul.addr %s265, 21
      %s269 = sadd.s32 %s267, %s268
      %s270 = smul.addr %s269, 8
      %s271 = scalar_lea.vmem %s4, %s270
      %s272 = smul.u32 7, %s20
      %v273 = vld [vmem:[%s2] sm:$0xff]
      %v274 = vld [vmem:[%s2 + $0x8] sm:$0xff]
      %v275 = vld [vmem:[%s2 + $0x10] sm:$0xf]
      %v276 = vld [vmem:[%s251] sm:$0xff]
      %v277 = vld [vmem:[%s251 + $0x8] sm:$0xff]
      %v278 = vld [vmem:[%s251 + $0x10] sm:$0xff]
      %v279 = vld [vmem:[%s251 + $0x18] sm:$0xff]
      %v280 = vld [vmem:[%s251 + $0x20] sm:$0xff]
      %v281 = vld [vmem:[%s251 + $0x28] sm:$0xff]
      %v282 = vld [vmem:[%s251 + $0x30] sm:$0xff]
      %v283 = vld [vmem:[%s251 + $0x38] sm:$0xff]
      %v284 = vld [vmem:[%s251 + $0x40] sm:$0xff]
      %v285 = vld [vmem:[%s251 + $0x48] sm:$0xff]
      %v286 = vld [vmem:[%s251 + $0x50] sm:$0xff]
      %v287 = vld [vmem:[%s251 + $0x58] sm:$0xff]
      %v288 = vld [vmem:[%s251 + $0x60] sm:$0xff]
      %v289 = vld [vmem:[%s251 + $0x68] sm:$0xff]
      %v290 = vld [vmem:[%s251 + $0x70] sm:$0xf]
      %v291 = vld [vmem:[%s251 + $0x78] sm:$0xf]
      %v292 = vld [vmem:[%s251 + $0x80] sm:$0xf]
      %v293 = vld [vmem:[%s251 + $0x88] sm:$0xf]
      %v294 = vld [vmem:[%s251 + $0x90] sm:$0xf]
      %v295 = vld [vmem:[%s251 + $0x98] sm:$0xf]
      %v296 = vld [vmem:[%s251 + $0xa0] sm:$0xf]
      %v297 = vld [vmem:[%s3] sm:$0xff]
      %v298 = vld [vmem:[%s3 + $0x8] sm:$0xff]
      %v299 = vld [vmem:[%s3 + $0x10] sm:$0xf]
      %301 = vset.pattern.permute.xlu0 0
      %302 = vperm.xlu0 %301, %v297
      %v303 = vpop.permute.xlu0 %302
      %306 = vset.pattern.permute.xlu0 0
      %307 = vperm.xlu0 %306, %v298
      %v308 = vpop.permute.xlu0 %307
      %311 = vset.pattern.permute.xlu0 0
      %312 = vperm.xlu0 %311, %v299
      %v313 = vpop.permute.xlu0 %312
      %vm315 = vcmask 162816
      %v317 = vsel %vm315, %v273, 0
      %v320 = vsel %vm315, %v274, 0
      %v323 = vsel %vm315, %v275, 0
      %vm325 = vcmask 1043456
      %v327 = vsel %vm325, %v290, 0
      %v330 = vsel %vm325, %v291, 0
      %v333 = vsel %vm325, %v292, 0
      %v336 = vsel %vm325, %v293, 0
      %v339 = vsel %vm325, %v294, 0
      %v342 = vsel %vm325, %v295, 0
      %v345 = vsel %vm325, %v296, 0
      %347 = vmatprep.subr.mxu0 %v277
      %348 = vmatpush1.msra.mxu0 %v276
      %349 = vmatprep.subr.mxu0 %v284
      %350 = vmatpush1.msra.mxu0 %v283
      %351 = vmatprep.subr.mxu0 %v330
      %352 = vmatpush1.msra.mxu0 %v327
      %353 = vmatprep.subr.mxu0 0.0
      %354 = vmatpush1.msra.mxu0 0.0
      %355 = vmatprep.subr.mxu0 0.0
      %356 = vmatpush1.msra.mxu0 0.0
      %357 = vmatprep.subr.mxu0 0.0
      %358 = vmatpush1.msra.mxu0 0.0
      %359 = vmatprep.subr.mxu0 0.0
      %360 = vmatpush1.msra.mxu0 0.0
      %361 = vmatprep.subr.mxu0 0.0
      %362 = vmatpush1.msra.mxu0 0.0
      %363 = vmatprep.subr.mxu0 0.0
      %364 = vmatpush1.msra.mxu0 0.0
      %365 = vmatprep.subr.mxu0 0.0
      %366 = vmatpush1.msra.mxu0 0.0
      %367 = vmatprep.subr.mxu0 0.0
      %368 = vmatpush1.msra.mxu0 0.0
      %369 = vmatprep.subr.mxu0 0.0
      %370 = vmatpush1.msra.mxu0 0.0
      %371 = vmatprep.subr.mxu0 0.0
      %372 = vmatpush1.msra.mxu0 0.0
      %373 = vmatprep.subr.mxu0 0.0
      %374 = vmatpush1.msra.mxu0 0.0
      %375 = vmatprep.subr.mxu0 0.0
      %376 = vmatpush1.msra.mxu0 0.0
      %377 = vmatprep.subr.mxu0 0.0
      %378 = vmatpush1.msra.mxu0 0.0
      %379 = vmatprep.subr.mxu0 0.0
      %380 = vmatpush1.msra.mxu0 0.0
      %381 = vmatprep.subr.mxu0 0.0
      %382 = vmatpush1.msra.mxu0 0.0
      %383 = vmatprep.subr.mxu0 0.0
      %384 = vmatpush1.msra.mxu0 0.0
      %385 = vmatprep.subr.mxu0 0.0
      %386 = vmatpush1.msra.mxu0 0.0
      %387 = vmatprep.subr.mxu0 0.0
      %388 = vmatpush1.msra.mxu0 0.0
      %389 = vmatprep.subr.mxu0 0.0
      %390 = vmatpush1.msra.mxu0 0.0
      %391 = vmatprep.subr.mxu0 0.0
      %392 = vmatpush1.msra.mxu0 0.0
      %393 = vmatprep.subr.mxu0 0.0
      %394 = vmatpush1.msra.mxu0 0.0
      %395 = vmatprep.subr.mxu0 0.0
      %396 = vmatpush1.msra.mxu0 0.0
      %397 = vmatprep.subr.mxu0 0.0
      %398 = vmatpush1.msra.mxu0 0.0
      %399 = vmatprep.subr.mxu0 0.0
      %400 = vmatpush1.msra.mxu0 0.0
      %401 = vmatprep.subr.mxu0 0.0
      %402 = vmatpush1.msra.mxu0 0.0
      %403 = vmatprep.subr.mxu0 0.0
      %404 = vmatpush1.msra.mxu0 0.0
      %405 = vmatprep.subr.mxu0 0.0
      %406 = vmatpush1.msra.mxu0 0.0
      %407 = vmatprep.subr.mxu0 0.0
      %408 = vmatpush1.msra.mxu0 0.0
      %409 = vmatprep.subr.mxu0 0.0
      %410 = vmatpush1.msra.mxu0 0.0
      %411 = vmatprep.mubr.f32.mxu0 0.0
      %412 = vmatmul.mubr.f32.gmra.mrb[0].mxu0 %v317
      %v413 = vpop.f32.mrb[0].mxu0
      %v414 = vadd.f32 %v303, %v413
      %v415 = vpop.f32.mrb[0].mxu0
      %v416 = vadd.f32 %v303, %v415
      %417 = vmatprep.mubr.f32.mxu0 0.0
      %418 = vmatmul.mubr.f32.gmra.mrb[0].mxu0 %v320
      %v419 = vpop.f32.mrb[0].mxu0
      %v420 = vadd.f32 %v308, %v419
      %v421 = vpop.f32.mrb[0].mxu0
      %v422 = vadd.f32 %v308, %v421
      %423 = vmatprep.mubr.f32.mxu0 0.0
      %424 = vmatmul.mubr.f32.gmra.mrb[0].mxu0 %v323
      %v425 = vpop.f32.mrb[0].mxu0
      %v426 = vadd.f32 %v313, %v425
      %v427 = vpop.f32.mrb[0].mxu0
      %v428 = vadd.f32 %v313, %v427
      %429 = vdwg.mxu0
      %430 = vmatprep.subr.mxu0 %v279
      %431 = vmatpush1.msra.mxu0 %v278
      %432 = vmatprep.subr.mxu0 %v286
      %433 = vmatpush1.msra.mxu0 %v285
      %434 = vmatprep.subr.mxu0 %v336
      %435 = vmatpush1.msra.mxu0 %v333
      %436 = vmatprep.subr.mxu0 0.0
      %437 = vmatpush1.msra.mxu0 0.0
      %438 = vmatprep.subr.mxu0 0.0
      %439 = vmatpush1.msra.mxu0 0.0
      %440 = vmatprep.subr.mxu0 0.0
      %441 = vmatpush1.msra.mxu0 0.0
      %442 = vmatprep.subr.mxu0 0.0
      %443 = vmatpush1.msra.mxu0 0.0
      %444 = vmatprep.subr.mxu0 0.0
      %445 = vmatpush1.msra.mxu0 0.0
      %446 = vmatprep.subr.mxu0 0.0
      %447 = vmatpush1.msra.mxu0 0.0
      %448 = vmatprep.subr.mxu0 0.0
      %449 = vmatpush1.msra.mxu0 0.0
      %450 = vmatprep.subr.mxu0 0.0
      %451 = vmatpush1.msra.mxu0 0.0
      %452 = vmatprep.subr.mxu0 0.0
      %453 = vmatpush1.msra.mxu0 0.0
      %454 = vmatprep.subr.mxu0 0.0
      %455 = vmatpush1.msra.mxu0 0.0
      %456 = vmatprep.subr.mxu0 0.0
      %457 = vmatpush1.msra.mxu0 0.0
      %458 = vmatprep.subr.mxu0 0.0
      %459 = vmatpush1.msra.mxu0 0.0
      %460 = vmatprep.subr.mxu0 0.0
      %461 = vmatpush1.msra.mxu0 0.0
      %462 = vmatprep.subr.mxu0 0.0
      %463 = vmatpush1.msra.mxu0 0.0
      %464 = vmatprep.subr.mxu0 0.0
      %465 = vmatpush1.msra.mxu0 0.0
      %466 = vmatprep.subr.mxu0 0.0
      %467 = vmatpush1.msra.mxu0 0.0
      %468 = vmatprep.subr.mxu0 0.0
      %469 = vmatpush1.msra.mxu0 0.0
      %470 = vmatprep.subr.mxu0 0.0
      %471 = vmatpush1.msra.mxu0 0.0
      %472 = vmatprep.subr.mxu0 0.0
      %473 = vmatpush1.msra.mxu0 0.0
      %474 = vmatprep.subr.mxu0 0.0
      %475 = vmatpush1.msra.mxu0 0.0
      %476 = vmatprep.subr.mxu0 0.0
      %477 = vmatpush1.msra.mxu0 0.0
      %478 = vmatprep.subr.mxu0 0.0
      %479 = vmatpush1.msra.mxu0 0.0
      %480 = vmatprep.subr.mxu0 0.0
      %481 = vmatpush1.msra.mxu0 0.0
      %482 = vmatprep.subr.mxu0 0.0
      %483 = vmatpush1.msra.mxu0 0.0
      %484 = vmatprep.subr.mxu0 0.0
      %485 = vmatpush1.msra.mxu0 0.0
      %486 = vmatprep.subr.mxu0 0.0
      %487 = vmatpush1.msra.mxu0 0.0
      %488 = vmatprep.subr.mxu0 0.0
      %489 = vmatpush1.msra.mxu0 0.0
      %490 = vmatprep.subr.mxu0 0.0
      %491 = vmatpush1.msra.mxu0 0.0
      %492 = vmatprep.subr.mxu0 0.0
      %493 = vmatpush1.msra.mxu0 0.0
      %494 = vmatprep.mubr.f32.mxu0 0.0
      %495 = vmatmul.mubr.f32.gmra.mrb[0].mxu0 %v317
      %v496 = vpop.f32.mrb[0].mxu0
      %v497 = vadd.f32 %v303, %v496
      %v498 = vpop.f32.mrb[0].mxu0
      %v499 = vadd.f32 %v303, %v498
      %500 = vmatprep.mubr.f32.mxu0 0.0
      %501 = vmatmul.mubr.f32.gmra.mrb[0].mxu0 %v320
      %v502 = vpop.f32.mrb[0].mxu0
      %v503 = vadd.f32 %v308, %v502
      %v504 = vpop.f32.mrb[0].mxu0
      %v505 = vadd.f32 %v308, %v504
      %506 = vmatprep.mubr.f32.mxu0 0.0
      %507 = vmatmul.mubr.f32.gmra.mrb[0].mxu0 %v323
      %v508 = vpop.f32.mrb[0].mxu0
      %v509 = vadd.f32 %v313, %v508
      %v510 = vpop.f32.mrb[0].mxu0
      %v511 = vadd.f32 %v313, %v510
      %512 = vdwg.mxu0
      %513 = vmatprep.subr.mxu0 %v281
      %514 = vmatpush1.msra.mxu0 %v280
      %515 = vmatprep.subr.mxu0 %v288
      %516 = vmatpush1.msra.mxu0 %v287
      %517 = vmatprep.subr.mxu0 %v342
      %518 = vmatpush1.msra.mxu0 %v339
      %519 = vmatprep.subr.mxu0 0.0
      %520 = vmatpush1.msra.mxu0 0.0
      %521 = vmatprep.subr.mxu0 0.0
      %522 = vmatpush1.msra.mxu0 0.0
      %523 = vmatprep.subr.mxu0 0.0
      %524 = vmatpush1.msra.mxu0 0.0
      %525 = vmatprep.subr.mxu0 0.0
      %526 = vmatpush1.msra.mxu0 0.0
      %527 = vmatprep.subr.mxu0 0.0
      %528 = vmatpush1.msra.mxu0 0.0
      %529 = vmatprep.subr.mxu0 0.0
      %530 = vmatpush1.msra.mxu0 0.0
      %531 = vmatprep.subr.mxu0 0.0
      %532 = vmatpush1.msra.mxu0 0.0
      %533 = vmatprep.subr.mxu0 0.0
      %534 = vmatpush1.msra.mxu0 0.0
      %535 = vmatprep.subr.mxu0 0.0
      %536 = vmatpush1.msra.mxu0 0.0
      %537 = vmatprep.subr.mxu0 0.0
      %538 = vmatpush1.msra.mxu0 0.0
      %539 = vmatprep.subr.mxu0 0.0
      %540 = vmatpush1.msra.mxu0 0.0
      %541 = vmatprep.subr.mxu0 0.0
      %542 = vmatpush1.msra.mxu0 0.0
      %543 = vmatprep.subr.mxu0 0.0
      %544 = vmatpush1.msra.mxu0 0.0
      %545 = vmatprep.subr.mxu0 0.0
      %546 = vmatpush1.msra.mxu0 0.0
      %547 = vmatprep.subr.mxu0 0.0
      %548 = vmatpush1.msra.mxu0 0.0
      %549 = vmatprep.subr.mxu0 0.0
      %550 = vmatpush1.msra.mxu0 0.0
      %551 = vmatprep.subr.mxu0 0.0
      %552 = vmatpush1.msra.mxu0 0.0
      %553 = vmatprep.subr.mxu0 0.0
      %554 = vmatpush1.msra.mxu0 0.0
      %555 = vmatprep.subr.mxu0 0.0
      %556 = vmatpush1.msra.mxu0 0.0
      %557 = vmatprep.subr.mxu0 0.0
      %558 = vmatpush1.msra.mxu0 0.0
      %559 = vmatprep.subr.mxu0 0.0
      %560 = vmatpush1.msra.mxu0 0.0
      %561 = vmatprep.subr.mxu0 0.0
      %562 = vmatpush1.msra.mxu0 0.0
      %563 = vmatprep.subr.mxu0 0.0
      %564 = vmatpush1.msra.mxu0 0.0
      %565 = vmatprep.subr.mxu0 0.0
      %566 = vmatpush1.msra.mxu0 0.0
      %567 = vmatprep.subr.mxu0 0.0
      %568 = vmatpush1.msra.mxu0 0.0
      %569 = vmatprep.subr.mxu0 0.0
      %570 = vmatpush1.msra.mxu0 0.0
      %571 = vmatprep.subr.mxu0 0.0
      %572 = vmatpush1.msra.mxu0 0.0
      %573 = vmatprep.subr.mxu0 0.0
      %574 = vmatpush1.msra.mxu0 0.0
      %575 = vmatprep.subr.mxu0 0.0
      %576 = vmatpush1.msra.mxu0 0.0
      %577 = vmatprep.mubr.f32.mxu0 0.0
      %578 = vmatmul.mubr.f32.gmra.mrb[0].mxu0 %v317
      %v579 = vpop.f32.mrb[0].mxu0
      %v580 = vadd.f32 %v303, %v579
      %v581 = vpop.f32.mrb[0].mxu0
      %v582 = vadd.f32 %v303, %v581
      %583 = vmatprep.mubr.f32.mxu0 0.0
      %584 = vmatmul.mubr.f32.gmra.mrb[0].mxu0 %v320
      %v585 = vpop.f32.mrb[0].mxu0
      %v586 = vadd.f32 %v308, %v585
      %v587 = vpop.f32.mrb[0].mxu0
      %v588 = vadd.f32 %v308, %v587
      %589 = vmatprep.mubr.f32.mxu0 0.0
      %590 = vmatmul.mubr.f32.gmra.mrb[0].mxu0 %v323
      %v591 = vpop.f32.mrb[0].mxu0
      %v592 = vadd.f32 %v313, %v591
      %v593 = vpop.f32.mrb[0].mxu0
      %v594 = vadd.f32 %v313, %v593
      %595 = vdwg.mxu0
      %596 = vmatprep.subr.mxu0 0.0
      %597 = vmatpush1.msra.mxu0 %v282
      %598 = vmatprep.subr.mxu0 0.0
      %599 = vmatpush1.msra.mxu0 %v289
      %600 = vmatprep.subr.mxu0 0.0
      %601 = vmatpush1.msra.mxu0 %v345
      %602 = vmatprep.subr.mxu0 0.0
      %603 = vmatpush1.msra.mxu0 0.0
      %604 = vmatprep.subr.mxu0 0.0
      %605 = vmatpush1.msra.mxu0 0.0
      %606 = vmatprep.subr.mxu0 0.0
      %607 = vmatpush1.msra.mxu0 0.0
      %608 = vmatprep.subr.mxu0 0.0
      %609 = vmatpush1.msra.mxu0 0.0
      %610 = vmatprep.subr.mxu0 0.0
      %611 = vmatpush1.msra.mxu0 0.0
      %612 = vmatprep.subr.mxu0 0.0
      %613 = vmatpush1.msra.mxu0 0.0
      %614 = vmatprep.subr.mxu0 0.0
      %615 = vmatpush1.msra.mxu0 0.0
      %616 = vmatprep.subr.mxu0 0.0
      %617 = vmatpush1.msra.mxu0 0.0
      %618 = vmatprep.subr.mxu0 0.0
      %619 = vmatpush1.msra.mxu0 0.0
      %620 = vmatprep.subr.mxu0 0.0
      %621 = vmatpush1.msra.mxu0 0.0
      %622 = vmatprep.subr.mxu0 0.0
      %623 = vmatpush1.msra.mxu0 0.0
      %624 = vmatprep.subr.mxu0 0.0
      %625 = vmatpush1.msra.mxu0 0.0
      %626 = vmatprep.subr.mxu0 0.0
      %627 = vmatpush1.msra.mxu0 0.0
      %628 = vmatprep.subr.mxu0 0.0
      %629 = vmatpush1.msra.mxu0 0.0
      %630 = vmatprep.subr.mxu0 0.0
      %631 = vmatpush1.msra.mxu0 0.0
      %632 = vmatprep.subr.mxu0 0.0
      %633 = vmatpush1.msra.mxu0 0.0
      %634 = vmatprep.subr.mxu0 0.0
      %635 = vmatpush1.msra.mxu0 0.0
      %636 = vmatprep.subr.mxu0 0.0
      %637 = vmatpush1.msra.mxu0 0.0
      %638 = vmatprep.subr.mxu0 0.0
      %639 = vmatpush1.msra.mxu0 0.0
      %640 = vmatprep.subr.mxu0 0.0
      %641 = vmatpush1.msra.mxu0 0.0
      %642 = vmatprep.subr.mxu0 0.0
      %643 = vmatpush1.msra.mxu0 0.0
      %644 = vmatprep.subr.mxu0 0.0
      %645 = vmatpush1.msra.mxu0 0.0
      %646 = vmatprep.subr.mxu0 0.0
      %647 = vmatpush1.msra.mxu0 0.0
      %648 = vmatprep.subr.mxu0 0.0
      %649 = vmatpush1.msra.mxu0 0.0
      %650 = vmatprep.subr.mxu0 0.0
      %651 = vmatpush1.msra.mxu0 0.0
      %652 = vmatprep.subr.mxu0 0.0
      %653 = vmatpush1.msra.mxu0 0.0
      %654 = vmatprep.subr.mxu0 0.0
      %655 = vmatpush1.msra.mxu0 0.0
      %656 = vmatprep.subr.mxu0 0.0
      %657 = vmatpush1.msra.mxu0 0.0
      %658 = vmatprep.subr.mxu0 0.0
      %659 = vmatpush1.msra.mxu0 0.0
      %660 = vmatprep.mubr.f32.mxu0 0.0
      %661 = vmatmul.mubr.f32.gmra.mrb[0].mxu0 %v317
      %v662 = vpop.f32.mrb[0].mxu0
      %v663 = vadd.f32 %v303, %v662
      %v664 = vpop.f32.mrb[0].mxu0
      %665 = vmatprep.mubr.f32.mxu0 0.0
      %666 = vmatmul.mubr.f32.gmra.mrb[0].mxu0 %v320
      %v667 = vpop.f32.mrb[0].mxu0
      %v668 = vadd.f32 %v308, %v667
      %v669 = vpop.f32.mrb[0].mxu0
      %670 = vmatprep.mubr.f32.mxu0 0.0
      %671 = vmatmul.mubr.f32.gmra.mrb[0].mxu0 %v323
      %v672 = vpop.f32.mrb[0].mxu0
      %v673 = vadd.f32 %v313, %v672
      %v674 = vpop.f32.mrb[0].mxu0
      %675 = vdwg.mxu0
      %v676 = vld [vmem:[%s261] sm:$0xff]
      %v677 = vld [vmem:[%s261 + $0x8] sm:$0xff]
      %v678 = vld [vmem:[%s261 + $0x10] sm:$0xff]
      %v679 = vld [vmem:[%s261 + $0x18] sm:$0xff]
      %v680 = vld [vmem:[%s261 + $0x20] sm:$0xff]
      %v681 = vld [vmem:[%s261 + $0x28] sm:$0xff]
      %v682 = vld [vmem:[%s261 + $0x30] sm:$0xff]
      %v683 = vld [vmem:[%s261 + $0x38] sm:$0xff]
      %v684 = vld [vmem:[%s261 + $0x40] sm:$0xff]
      %v685 = vld [vmem:[%s261 + $0x48] sm:$0xff]
      %v686 = vld [vmem:[%s261 + $0x50] sm:$0xff]
      %v687 = vld [vmem:[%s261 + $0x58] sm:$0xff]
      %v688 = vld [vmem:[%s261 + $0x60] sm:$0xff]
      %v689 = vld [vmem:[%s261 + $0x68] sm:$0xff]
      %v690 = vld [vmem:[%s261 + $0x70] sm:$0xf]
      %v691 = vld [vmem:[%s261 + $0x78] sm:$0xf]
      %v692 = vld [vmem:[%s261 + $0x80] sm:$0xf]
      %v693 = vld [vmem:[%s261 + $0x88] sm:$0xf]
      %v694 = vld [vmem:[%s261 + $0x90] sm:$0xf]
      %v695 = vld [vmem:[%s261 + $0x98] sm:$0xf]
      %v696 = vld [vmem:[%s261 + $0xa0] sm:$0xf]
      %v697 = vadd.f32 %v414, %v676
      %v698 = vadd.f32 %v416, %v677
      %v699 = vadd.f32 %v497, %v678
      %v700 = vadd.f32 %v499, %v679
      %v701 = vadd.f32 %v580, %v680
      %v702 = vadd.f32 %v582, %v681
      %v703 = vadd.f32 %v663, %v682
      %v704 = vadd.f32 %v420, %v683
      %v705 = vadd.f32 %v422, %v684
      %v706 = vadd.f32 %v503, %v685
      %v707 = vadd.f32 %v505, %v686
      %v708 = vadd.f32 %v586, %v687
      %v709 = vadd.f32 %v588, %v688
      %v710 = vadd.f32 %v668, %v689
      %v711 = vadd.f32 %v426, %v690
      %v712 = vadd.f32 %v428, %v691
      %v713 = vadd.f32 %v509, %v692
      %v714 = vadd.f32 %v511, %v693
      %v715 = vadd.f32 %v592, %v694
      %v716 = vadd.f32 %v594, %v695
      %v717 = vadd.f32 %v673, %v696
      %v718 = vmul.f32 %v697, 0.5
      %v719 = vmul.f32 %v698, 0.5
      %v720 = vmul.f32 %v699, 0.5
      %v721 = vmul.f32 %v700, 0.5
      %v722 = vmul.f32 %v701, 0.5
      %v723 = vmul.f32 %v702, 0.5
      %v724 = vmul.f32 %v703, 0.5
      %v725 = vmul.f32 %v704, 0.5
      %v726 = vmul.f32 %v705, 0.5
      %v727 = vmul.f32 %v706, 0.5
      %v728 = vmul.f32 %v707, 0.5
      %v729 = vmul.f32 %v708, 0.5
      %v730 = vmul.f32 %v709, 0.5
      %v731 = vmul.f32 %v710, 0.5
      %v732 = vmul.f32 %v711, 0.5
      %v733 = vmul.f32 %v712, 0.5
      %v734 = vmul.f32 %v713, 0.5
      %v735 = vmul.f32 %v714, 0.5
      %v736 = vmul.f32 %v715, 0.5
      %v737 = vmul.f32 %v716, 0.5
      %v738 = vmul.f32 %v717, 0.5
      %v739 = vmul.f32 %v697, 0.70710677
      %v740 = vmul.f32 %v698, 0.70710677
      %v741 = vmul.f32 %v699, 0.70710677
      %v742 = vmul.f32 %v700, 0.70710677
      %v743 = vmul.f32 %v701, 0.70710677
      %v744 = vmul.f32 %v702, 0.70710677
      %v745 = vmul.f32 %v703, 0.70710677
      %v746 = vmul.f32 %v704, 0.70710677
      %v747 = vmul.f32 %v705, 0.70710677
      %v748 = vmul.f32 %v706, 0.70710677
      %v749 = vmul.f32 %v707, 0.70710677
      %v750 = vmul.f32 %v708, 0.70710677
      %v751 = vmul.f32 %v709, 0.70710677
      %v752 = vmul.f32 %v710, 0.70710677
      %v753 = vmul.f32 %v711, 0.70710677
      %v754 = vmul.f32 %v712, 0.70710677
      %v755 = vmul.f32 %v713, 0.70710677
      %v756 = vmul.f32 %v714, 0.70710677
      %v757 = vmul.f32 %v715, 0.70710677
      %v758 = vmul.f32 %v716, 0.70710677
      %v759 = vmul.f32 %v717, 0.70710677
      %v760 = verf.f32.pop %v739
      %v761 = verf.f32.pop %v740
      %v762 = verf.f32.pop %v741
      %v763 = verf.f32.pop %v742
      %v764 = verf.f32.pop %v743
      %v765 = verf.f32.pop %v744
      %v766 = verf.f32.pop %v745
      %v767 = verf.f32.pop %v746
      %v768 = verf.f32.pop %v747
      %v769 = verf.f32.pop %v748
      %v770 = verf.f32.pop %v749
      %v771 = verf.f32.pop %v750
      %v772 = verf.f32.pop %v751
      %v773 = verf.f32.pop %v752
      %v774 = verf.f32.pop %v753
      %v775 = verf.f32.pop %v754
      %v776 = verf.f32.pop %v755
      %v777 = verf.f32.pop %v756
      %v778 = verf.f32.pop %v757
      %v779 = verf.f32.pop %v758
      %v780 = verf.f32.pop %v759
      %v781 = vadd.f32 %v760, 1.0
      %v782 = vadd.f32 %v761, 1.0
      %v783 = vadd.f32 %v762, 1.0
      %v784 = vadd.f32 %v763, 1.0
      %v785 = vadd.f32 %v764, 1.0
      %v786 = vadd.f32 %v765, 1.0
      %v787 = vadd.f32 %v766, 1.0
      %v788 = vadd.f32 %v767, 1.0
      %v789 = vadd.f32 %v768, 1.0
      %v790 = vadd.f32 %v769, 1.0
      %v791 = vadd.f32 %v770, 1.0
      %v792 = vadd.f32 %v771, 1.0
      %v793 = vadd.f32 %v772, 1.0
      %v794 = vadd.f32 %v773, 1.0
      %v795 = vadd.f32 %v774, 1.0
      %v796 = vadd.f32 %v775, 1.0
      %v797 = vadd.f32 %v776, 1.0
      %v798 = vadd.f32 %v777, 1.0
      %v799 = vadd.f32 %v778, 1.0
      %v800 = vadd.f32 %v779, 1.0
      %v801 = vadd.f32 %v780, 1.0
      %v802 = vmul.f32 %v718, %v781
      %v803 = vmul.f32 %v719, %v782
      %v804 = vmul.f32 %v720, %v783
      %v805 = vmul.f32 %v721, %v784
      %v806 = vmul.f32 %v722, %v785
      %v807 = vmul.f32 %v723, %v786
      %v808 = vmul.f32 %v724, %v787
      %v809 = vmul.f32 %v725, %v788
      %v810 = vmul.f32 %v726, %v789
      %v811 = vmul.f32 %v727, %v790
      %v812 = vmul.f32 %v728, %v791
      %v813 = vmul.f32 %v729, %v792
      %v814 = vmul.f32 %v730, %v793
      %v815 = vmul.f32 %v731, %v794
      %v816 = vmul.f32 %v732, %v795
      %v817 = vmul.f32 %v733, %v796
      %v818 = vmul.f32 %v734, %v797
      %v819 = vmul.f32 %v735, %v798
      %v820 = vmul.f32 %v736, %v799
      %v821 = vmul.f32 %v737, %v800
      %v822 = vmul.f32 %v738, %v801
      %823 = vst [vmem:[%s271] sm:$0xff] %v802
      %824 = vst [vmem:[%s271 + $0x8] sm:$0xff] %v803
      %825 = vst [vmem:[%s271 + $0x10] sm:$0xff] %v804
      %826 = vst [vmem:[%s271 + $0x18] sm:$0xff] %v805
      %827 = vst [vmem:[%s271 + $0x20] sm:$0xff] %v806
      %828 = vst [vmem:[%s271 + $0x28] sm:$0xff] %v807
      %829 = vst [vmem:[%s271 + $0x30] sm:$0xff] %v808
      %830 = vst [vmem:[%s271 + $0x38] sm:$0xff] %v809
      %831 = vst [vmem:[%s271 + $0x40] sm:$0xff] %v810
      %832 = vst [vmem:[%s271 + $0x48] sm:$0xff] %v811
      %833 = vst [vmem:[%s271 + $0x50] sm:$0xff] %v812
      %834 = vst [vmem:[%s271 + $0x58] sm:$0xff] %v813
      %835 = vst [vmem:[%s271 + $0x60] sm:$0xff] %v814
      %836 = vst [vmem:[%s271 + $0x68] sm:$0xff] %v815
      %837 = vst [vmem:[%s271 + $0x70] sm:$0xf] %v816
      %838 = vst [vmem:[%s271 + $0x78] sm:$0xf] %v817
      %839 = vst [vmem:[%s271 + $0x80] sm:$0xf] %v818
      %840 = vst [vmem:[%s271 + $0x88] sm:$0xf] %v819
      %841 = vst [vmem:[%s271 + $0x90] sm:$0xf] %v820
      %842 = vst [vmem:[%s271 + $0x98] sm:$0xf] %v821
      %843 = vst [vmem:[%s271 + $0xa0] sm:$0xf] %v822
      %s844 = smul.u32 7, %s20
      %p845 = scmp.lt.s32.totalorder %s19, 1
      %s846 = scalar_select %p845, %s19, 1
      %p847 = scmp.lt.s32.totalorder %s844, 6
      %s848 = scalar_select %p847, %s844, 6
      %s849 = smul.addr %s846, 21
      %s850 = sadd.s32 %s848, %s849
      %s851 = smul.addr %s850, 8
      %s852 = scalar_lea.vmem %s4, %s851
      // Predicated region
      $region37: #{fno3d_forward.8} parent=35 // pred_check
        %p853 = pneg %p145
      $region38: #{fno3d_forward.8} parent=35 // pred_check_branch
        %855 = sbr.rel (%p853) target = $region40
      $region39: #{fno3d_forward.8} parent=35 // pred_region
        %s856 = smul.u32 7, %s20
      $region40: #{fno3d_forward.8} parent=35 // pred_fallthru
        _
    $region36: #{fno3d_forward.8} parent=5 // pred_fallthru
      _
    %p857 = scmp.le.s32.totalorder 2, %s10
    // Predicated region
    $region41: #{fno3d_forward.8} parent=5 // pred_check
      %p858 = pneg %p857
    $region42: #{fno3d_forward.8} parent=5 // pred_check_branch
      %860 = sbr.rel (%p858) target = $region44
    $region43: #{fno3d_forward.8} parent=5 // pred_region
      %s861 = ssub.s32 %s10, 2
      // Predicated region
      $region45: #{fno3d_forward.8} parent=43 // pred_check
        %p862 = pneg %p151
      $region46: #{fno3d_forward.8} parent=43 // pred_check_branch
        %864 = sbr.rel (%p862) target = $region48
      $region47: #{fno3d_forward.8} parent=43 // pred_region
        %s865 = smul.u32 7, %s22
        %p866 = scmp.lt.s32.totalorder %s21, 1
        %s867 = scalar_select %p866, %s21, 1
        %p868 = scmp.lt.s32.totalorder %s865, 6
        %s869 = scalar_select %p868, %s865, 6
        %s870 = smul.addr %s867, 21
        %s871 = sadd.s32 %s869, %s870
        %s872 = smul.addr %s871, 8
        %s873 = scalar_lea.vmem %s4, %s872
      $region48: #{fno3d_forward.8} parent=43 // pred_fallthru
        _
    $region44: #{fno3d_forward.8} parent=5 // pred_fallthru
      _
  $region6: #{fno3d_forward.8} parent=0 // loop_footer
    %s14 = sadd.s32 1, %s10
  $region7: #{fno3d_forward.8} parent=0 // loop_footer_branch
    %9 = sbr.rel target = $region3
  $region8: #{fno3d_forward.8} parent=0 // loop_exit
    _

// kernel: fno3d_forward.11
$region0: #{fno3d_forward.11}
  #allocation0 [shape = 'u32[]', space=smem, size = 0x4, offset = 0x4, fixed_abs, tag = 'smem constant byte address 0x4 - core index']
  #allocation1 [shape = 'u32[144,128]{1,0:T(1,128)}', space=vmem, size = 0x12000, scoped, tag = 'internal scratch']
  %s0 = inlined_call_operand.vmem [shape: f32[2,20,896], index: 0, kind: input, shape index: {}]
  %s1 = inlined_call_operand.vmem [shape: f32[2,20,896], index: 1, kind: input, shape index: {}]
  %s2 = inlined_call_operand.vmem [shape: f32[20,20], index: 2, kind: input, shape index: {}]
  %s3 = inlined_call_operand.vmem [shape: f32[20,1], index: 3, kind: input, shape index: {}]
  %s4 = inlined_call_operand.vmem [shape: f32[2,20,896], index: 4, kind: output, shape index: {}]
  %s5 = sld [smem:[#allocation0]]
  $region49: #{fno3d_forward.11} parent=0
    _
  %s7 = ssub.s32 1, %s5
  %s8 = scalar_select 0, %s7, %s5
  loop: start=0, step=1, limit=4
  $region2: #{fno3d_forward.11} parent=0 // loop_pre_header
    _
  $region3: #{fno3d_forward.11} parent=0 // loop_header
    %s10 = sphi 0, %s14
    %p11 = scmp.ge.s32.totalorder %s10, 4
    %s17 = sphi 0, %s29
    %s18 = sphi 0, %s25
    %s19 = sphi 0, %s17
    %s20 = sphi 0, %s18
    %s21 = sphi 0, %s19
    %s22 = sphi 0, %s20
    %s34 = sphi 0, %s36
    %s37 = sphi 0, %s34
    %s38 = sphi 0, %s37
    %s54 = sphi 0, %s38
    %s62 = sphi 0, %s64
    %s65 = sphi 0, %s62
    %s66 = sphi 0, %s65
    %s82 = sphi 0, %s66
    %s86 = sphi 0, %s86
    %s88 = sphi 0, %s86
    %s89 = sphi 0, %s88
    %s103 = sphi 0, %s89
    %s107 = sphi 0, %s107
    %s109 = sphi 0, %s107
    %s110 = sphi 0, %s109
    %s124 = sphi 0, %s110
    %s132 = sphi 0, %s134
    %s135 = sphi 0, %s132
    %s136 = sphi 0, %s135
    %s152 = sphi 0, %s136
  $region4: #{fno3d_forward.11} parent=0 // loop_header_branch
    %13 = sbr.rel (%p11) target = $region8
  $region5: #{fno3d_forward.11} parent=0 // loop_body
    %s15 = ssub.s32 %s10, 1
    %s16 = ssub.s32 %s10, 2
    %s23 = sadd.s32 1, %s18
    %p24 = scmp.ge.s32.totalorder %s23, 1
    %s25 = scalar_select %p24, 0, %s23
    %s26 = sadd.s32 1, %s17
    %s27 = scalar_select %p24, %s26, %s17
    %p28 = scmp.ge.s32.totalorder %s27, 2
    %s29 = scalar_select %p28, 0, %s27
    %s30 = ssub.s32 %s17, %s29
    %s31 = ssub.s32 %s18, %s25
    %s32 = sor.u32 %s30, %s31
    %p33 = scmp.eq.s32.totalorder %s32, 0
    %s35 = sadd.s32 %s34, 1
    %s36 = scalar_select %p33, %s34, %s35
    %p39 = pneg %p33
    %p40 = scmp.eq.s32.totalorder %s10, 1
    %p41 = por %p39, %p40
    %p42 = scmp.ne.s32.totalorder %s34, %s37
    %p43 = scmp.eq.s32.totalorder %s10, 0
    %p44 = por %p42, %p43
    %p45 = scmp.ne.s32.totalorder %s34, %s37
    %p46 = scmp.eq.s32.totalorder %s15, 1
    %p47 = por %p45, %p46
    %p48 = scmp.ne.s32.totalorder %s37, %s38
    %p49 = scmp.eq.s32.totalorder %s15, 0
    %p50 = por %p48, %p49
    %p51 = scmp.ne.s32.totalorder %s37, %s38
    %p52 = scmp.eq.s32.totalorder %s16, 1
    %p53 = por %p51, %p52
    %p55 = scmp.ne.s32.totalorder %s38, %s54
    %p56 = scmp.eq.s32.totalorder %s16, 0
    %p57 = por %p55, %p56
    %s58 = ssub.s32 %s17, %s29
    %s59 = ssub.s32 %s18, %s25
    %s60 = sor.u32 %s58, %s59
    %p61 = scmp.eq.s32.totalorder %s60, 0
    %s63 = sadd.s32 %s62, 1
    %s64 = scalar_select %p61, %s62, %s63
    %p67 = pneg %p61
    %p68 = scmp.eq.s32.totalorder %s10, 1
    %p69 = por %p67, %p68
    %p70 = scmp.ne.s32.totalorder %s62, %s65
    %p71 = scmp.eq.s32.totalorder %s10, 0
    %p72 = por %p70, %p71
    %p73 = scmp.ne.s32.totalorder %s62, %s65
    %p74 = scmp.eq.s32.totalorder %s15, 1
    %p75 = por %p73, %p74
    %p76 = scmp.ne.s32.totalorder %s65, %s66
    %p77 = scmp.eq.s32.totalorder %s15, 0
    %p78 = por %p76, %p77
    %p79 = scmp.ne.s32.totalorder %s65, %s66
    %p80 = scmp.eq.s32.totalorder %s16, 1
    %p81 = por %p79, %p80
    %p83 = scmp.ne.s32.totalorder %s66, %s82
    %p84 = scmp.eq.s32.totalorder %s16, 0
    %p85 = por %p83, %p84
    %s87 = sadd.s32 %s86, 1
    %p90 = scmp.eq.s32.totalorder %s10, 1
    %p91 = scmp.ne.s32.totalorder %s86, %s88
    %p92 = scmp.eq.s32.totalorder %s10, 0
    %p93 = por %p91, %p92
    %p94 = scmp.ne.s32.totalorder %s86, %s88
    %p95 = scmp.eq.s32.totalorder %s15, 1
    %p96 = por %p94, %p95
    %p97 = scmp.ne.s32.totalorder %s88, %s89
    %p98 = scmp.eq.s32.totalorder %s15, 0
    %p99 = por %p97, %p98
    %p100 = scmp.ne.s32.totalorder %s88, %s89
    %p101 = scmp.eq.s32.totalorder %s16, 1
    %p102 = por %p100, %p101
    %p104 = scmp.ne.s32.totalorder %s89, %s103
    %p105 = scmp.eq.s32.totalorder %s16, 0
    %p106 = por %p104, %p105
    %s108 = sadd.s32 %s107, 1
    %p111 = scmp.eq.s32.totalorder %s10, 1
    %p112 = scmp.ne.s32.totalorder %s107, %s109
    %p113 = scmp.eq.s32.totalorder %s10, 0
    %p114 = por %p112, %p113
    %p115 = scmp.ne.s32.totalorder %s107, %s109
    %p116 = scmp.eq.s32.totalorder %s15, 1
    %p117 = por %p115, %p116
    %p118 = scmp.ne.s32.totalorder %s109, %s110
    %p119 = scmp.eq.s32.totalorder %s15, 0
    %p120 = por %p118, %p119
    %p121 = scmp.ne.s32.totalorder %s109, %s110
    %p122 = scmp.eq.s32.totalorder %s16, 1
    %p123 = por %p121, %p122
    %p125 = scmp.ne.s32.totalorder %s110, %s124
    %p126 = scmp.eq.s32.totalorder %s16, 0
    %p127 = por %p125, %p126
    %s128 = ssub.s32 %s17, %s29
    %s129 = ssub.s32 %s18, %s25
    %s130 = sor.u32 %s128, %s129
    %p131 = scmp.eq.s32.totalorder %s130, 0
    %s133 = sadd.s32 %s132, 1
    %s134 = scalar_select %p131, %s132, %s133
    %p137 = pneg %p131
    %p138 = scmp.eq.s32.totalorder %s10, 1
    %p139 = por %p137, %p138
    %p140 = scmp.ne.s32.totalorder %s132, %s135
    %p141 = scmp.eq.s32.totalorder %s10, 0
    %p142 = por %p140, %p141
    %p143 = scmp.ne.s32.totalorder %s132, %s135
    %p144 = scmp.eq.s32.totalorder %s15, 1
    %p145 = por %p143, %p144
    %p146 = scmp.ne.s32.totalorder %s135, %s136
    %p147 = scmp.eq.s32.totalorder %s15, 0
    %p148 = por %p146, %p147
    %p149 = scmp.ne.s32.totalorder %s135, %s136
    %p150 = scmp.eq.s32.totalorder %s16, 1
    %p151 = por %p149, %p150
    %p153 = scmp.ne.s32.totalorder %s136, %s152
    %p154 = scmp.eq.s32.totalorder %s16, 0
    %p155 = por %p153, %p154
    %p156 = scmp.le.s32.totalorder 1, %s10
    %p157 = scmp.lt.s32.totalorder %s10, 3
    %p158 = pnand %p156, %p157
    %p159 = pneg %p158
    // Predicated region
    $region9: #{fno3d_forward.11} parent=5 // pred_check
      _
    $region10: #{fno3d_forward.11} parent=5 // pred_check_branch
      %161 = sbr.rel (%p158) target = $region12
    $region11: #{fno3d_forward.11} parent=5 // pred_region
      %s162 = ssub.s32 %s10, 1
      // Predicated region
      $region13: #{fno3d_forward.11} parent=11 // pred_check
        %p163 = pneg %p99
      $region14: #{fno3d_forward.11} parent=11 // pred_check_branch
        %165 = sbr.rel (%p163) target = $region16
      $region15: #{fno3d_forward.11} parent=11 // pred_region
        _
      $region16: #{fno3d_forward.11} parent=11 // pred_fallthru
        _
      // Predicated region
      $region17: #{fno3d_forward.11} parent=11 // pred_check
        %p166 = pneg %p120
      $region18: #{fno3d_forward.11} parent=11 // pred_check_branch
        %168 = sbr.rel (%p166) target = $region20
      $region19: #{fno3d_forward.11} parent=11 // pred_region
        _
      $region20: #{fno3d_forward.11} parent=11 // pred_fallthru
        _
    $region12: #{fno3d_forward.11} parent=5 // pred_fallthru
      _
    %p169 = scmp.lt.s32.totalorder %s10, 2
    // Predicated region
    $region21: #{fno3d_forward.11} parent=5 // pred_check
      %p170 = pneg %p169
    $region22: #{fno3d_forward.11} parent=5 // pred_check_branch
      %172 = sbr.rel (%p170) target = $region24
    $region23: #{fno3d_forward.11} parent=5 // pred_region
      // Predicated region
      $region25: #{fno3d_forward.11} parent=23 // pred_check
        %p173 = pneg %p44
      $region26: #{fno3d_forward.11} parent=23 // pred_check_branch
        %175 = sbr.rel (%p173) target = $region28
      $region27: #{fno3d_forward.11} parent=23 // pred_region
        %s176 = smul.u32 7, %s18
        %p177 = scmp.lt.s32.totalorder %s17, 1
        %s178 = scalar_select %p177, %s17, 1
        %p179 = scmp.lt.s32.totalorder %s176, 6
        %s180 = scalar_select %p179, %s176, 6
        %s181 = smul.addr %s178, 21
        %s182 = sadd.s32 %s180, %s181
        %s183 = smul.addr %s182, 8
        %s184 = scalar_lea.vmem %s0, %s183
        %s185 = smul.u32 7, %s18
      $region28: #{fno3d_forward.11} parent=23 // pred_fallthru
        _
      // Predicated region
      $region29: #{fno3d_forward.11} parent=23 // pred_check
        %p186 = pneg %p72
      $region30: #{fno3d_forward.11} parent=23 // pred_check_branch
        %188 = sbr.rel (%p186) target = $region32
      $region31: #{fno3d_forward.11} parent=23 // pred_region
        %s189 = smul.u32 7, %s18
        %p190 = scmp.lt.s32.totalorder %s17, 1
        %s191 = scalar_select %p190, %s17, 1
        %p192 = scmp.lt.s32.totalorder %s189, 6
        %s193 = scalar_select %p192, %s189, 6
        %s194 = smul.addr %s191, 21
        %s195 = sadd.s32 %s193, %s194
        %s196 = smul.addr %s195, 8
        %s197 = scalar_lea.vmem %s1, %s196
        %s198 = smul.u32 7, %s18
      $region32: #{fno3d_forward.11} parent=23 // pred_fallthru
        _
    $region24: #{fno3d_forward.11} parent=5 // pred_fallthru
      _
    %p199 = scmp.le.s32.totalorder 1, %s10
    %p200 = scmp.lt.s32.totalorder %s10, 3
    %p201 = pnand %p199, %p200
    %p202 = pneg %p201
    // Predicated region
    $region33: #{fno3d_forward.11} parent=5 // pred_check
      _
    $region34: #{fno3d_forward.11} parent=5 // pred_check_branch
      %204 = sbr.rel (%p201) target = $region36
    $region35: #{fno3d_forward.11} parent=5 // pred_region
      %s205 = ssub.s32 %s10, 1
      %s206 = smul.u32 7, %s20
      %p207 = scmp.lt.s32.totalorder %s19, 1
      %s208 = scalar_select %p207, %s19, 1
      %p209 = scmp.lt.s32.totalorder %s206, 6
      %s210 = scalar_select %p209, %s206, 6
      %s211 = smul.addr %s208, 21
      %s212 = sadd.s32 %s210, %s211
      %s213 = smul.addr %s212, 8
      %s214 = scalar_lea.vmem %s0, %s213
      %p215 = pneg %p50
      %p216 = pneg %p47
      %s217 = smul.u32 7, %s20
      %p218 = scmp.lt.s32.totalorder %s19, 1
      %s219 = scalar_select %p218, %s19, 1
      %p220 = scmp.lt.s32.totalorder %s217, 6
      %s221 = scalar_select %p220, %s217, 6
      %s222 = smul.addr %s219, 21
      %s223 = sadd.s32 %s221, %s222
      %s224 = smul.addr %s223, 8
      %s225 = scalar_lea.vmem %s1, %s224
      %p226 = pneg %p78
      %p227 = pneg %p75
      %p228 = pneg %p99
      %p229 = pneg %p96
      %p230 = pneg %p120
      %p231 = pneg %p117
      %p232 = pneg %p148
      %p233 = pneg %p145
      %s234 = smul.u32 7, %s20
      %p235 = scmp.lt.s32.totalorder %s19, 1
      %s236 = scalar_select %p235, %s19, 1
      %p237 = scmp.lt.s32.totalorder %s234, 6
      %s238 = scalar_select %p237, %s234, 6
      %s239 = smul.addr %s236, 21
      %s240 = sadd.s32 %s238, %s239
      %s241 = smul.addr %s240, 8
      %s242 = scalar_lea.vmem %s4, %s241
      %s243 = smul.u32 7, %s20
      %p244 = scmp.lt.s32.totalorder %s19, 1
      %s245 = scalar_select %p244, %s19, 1
      %p246 = scmp.lt.s32.totalorder %s243, 6
      %s247 = scalar_select %p246, %s243, 6
      %s248 = smul.addr %s245, 21
      %s249 = sadd.s32 %s247, %s248
      %s250 = smul.addr %s249, 8
      %s251 = scalar_lea.vmem %s0, %s250
      %s252 = smul.u32 7, %s20
      %s253 = smul.u32 7, %s20
      %p254 = scmp.lt.s32.totalorder %s19, 1
      %s255 = scalar_select %p254, %s19, 1
      %p256 = scmp.lt.s32.totalorder %s253, 6
      %s257 = scalar_select %p256, %s253, 6
      %s258 = smul.addr %s255, 21
      %s259 = sadd.s32 %s257, %s258
      %s260 = smul.addr %s259, 8
      %s261 = scalar_lea.vmem %s1, %s260
      %s262 = smul.u32 7, %s20
      %s263 = smul.u32 7, %s20
      %p264 = scmp.lt.s32.totalorder %s19, 1
      %s265 = scalar_select %p264, %s19, 1
      %p266 = scmp.lt.s32.totalorder %s263, 6
      %s267 = scalar_select %p266, %s263, 6
      %s268 = smul.addr %s265, 21
      %s269 = sadd.s32 %s267, %s268
      %s270 = smul.addr %s269, 8
      %s271 = scalar_lea.vmem %s4, %s270
      %s272 = smul.u32 7, %s20
      %v273 = vld [vmem:[%s2] sm:$0xff]
      %v274 = vld [vmem:[%s2 + $0x8] sm:$0xff]
      %v275 = vld [vmem:[%s2 + $0x10] sm:$0xf]
      %v276 = vld [vmem:[%s251] sm:$0xff]
      %v277 = vld [vmem:[%s251 + $0x8] sm:$0xff]
      %v278 = vld [vmem:[%s251 + $0x10] sm:$0xff]
      %v279 = vld [vmem:[%s251 + $0x18] sm:$0xff]
      %v280 = vld [vmem:[%s251 + $0x20] sm:$0xff]
      %v281 = vld [vmem:[%s251 + $0x28] sm:$0xff]
      %v282 = vld [vmem:[%s251 + $0x30] sm:$0xff]
      %v283 = vld [vmem:[%s251 + $0x38] sm:$0xff]
      %v284 = vld [vmem:[%s251 + $0x40] sm:$0xff]
      %v285 = vld [vmem:[%s251 + $0x48] sm:$0xff]
      %v286 = vld [vmem:[%s251 + $0x50] sm:$0xff]
      %v287 = vld [vmem:[%s251 + $0x58] sm:$0xff]
      %v288 = vld [vmem:[%s251 + $0x60] sm:$0xff]
      %v289 = vld [vmem:[%s251 + $0x68] sm:$0xff]
      %v290 = vld [vmem:[%s251 + $0x70] sm:$0xf]
      %v291 = vld [vmem:[%s251 + $0x78] sm:$0xf]
      %v292 = vld [vmem:[%s251 + $0x80] sm:$0xf]
      %v293 = vld [vmem:[%s251 + $0x88] sm:$0xf]
      %v294 = vld [vmem:[%s251 + $0x90] sm:$0xf]
      %v295 = vld [vmem:[%s251 + $0x98] sm:$0xf]
      %v296 = vld [vmem:[%s251 + $0xa0] sm:$0xf]
      %v297 = vld [vmem:[%s3] sm:$0xff]
      %v298 = vld [vmem:[%s3 + $0x8] sm:$0xff]
      %v299 = vld [vmem:[%s3 + $0x10] sm:$0xf]
      %301 = vset.pattern.permute.xlu0 0
      %302 = vperm.xlu0 %301, %v297
      %v303 = vpop.permute.xlu0 %302
      %306 = vset.pattern.permute.xlu0 0
      %307 = vperm.xlu0 %306, %v298
      %v308 = vpop.permute.xlu0 %307
      %311 = vset.pattern.permute.xlu0 0
      %312 = vperm.xlu0 %311, %v299
      %v313 = vpop.permute.xlu0 %312
      %vm315 = vcmask 162816
      %v317 = vsel %vm315, %v273, 0
      %v320 = vsel %vm315, %v274, 0
      %v323 = vsel %vm315, %v275, 0
      %vm325 = vcmask 1043456
      %v327 = vsel %vm325, %v290, 0
      %v330 = vsel %vm325, %v291, 0
      %v333 = vsel %vm325, %v292, 0
      %v336 = vsel %vm325, %v293, 0
      %v339 = vsel %vm325, %v294, 0
      %v342 = vsel %vm325, %v295, 0
      %v345 = vsel %vm325, %v296, 0
      %347 = vmatprep.subr.mxu0 %v277
      %348 = vmatpush1.msra.mxu0 %v276
      %349 = vmatprep.subr.mxu0 %v284
      %350 = vmatpush1.msra.mxu0 %v283
      %351 = vmatprep.subr.mxu0 %v330
      %352 = vmatpush1.msra.mxu0 %v327
      %353 = vmatprep.subr.mxu0 0.0
      %354 = vmatpush1.msra.mxu0 0.0
      %355 = vmatprep.subr.mxu0 0.0
      %356 = vmatpush1.msra.mxu0 0.0
      %357 = vmatprep.subr.mxu0 0.0
      %358 = vmatpush1.msra.mxu0 0.0
      %359 = vmatprep.subr.mxu0 0.0
      %360 = vmatpush1.msra.mxu0 0.0
      %361 = vmatprep.subr.mxu0 0.0
      %362 = vmatpush1.msra.mxu0 0.0
      %363 = vmatprep.subr.mxu0 0.0
      %364 = vmatpush1.msra.mxu0 0.0
      %365 = vmatprep.subr.mxu0 0.0
      %366 = vmatpush1.msra.mxu0 0.0
      %367 = vmatprep.subr.mxu0 0.0
      %368 = vmatpush1.msra.mxu0 0.0
      %369 = vmatprep.subr.mxu0 0.0
      %370 = vmatpush1.msra.mxu0 0.0
      %371 = vmatprep.subr.mxu0 0.0
      %372 = vmatpush1.msra.mxu0 0.0
      %373 = vmatprep.subr.mxu0 0.0
      %374 = vmatpush1.msra.mxu0 0.0
      %375 = vmatprep.subr.mxu0 0.0
      %376 = vmatpush1.msra.mxu0 0.0
      %377 = vmatprep.subr.mxu0 0.0
      %378 = vmatpush1.msra.mxu0 0.0
      %379 = vmatprep.subr.mxu0 0.0
      %380 = vmatpush1.msra.mxu0 0.0
      %381 = vmatprep.subr.mxu0 0.0
      %382 = vmatpush1.msra.mxu0 0.0
      %383 = vmatprep.subr.mxu0 0.0
      %384 = vmatpush1.msra.mxu0 0.0
      %385 = vmatprep.subr.mxu0 0.0
      %386 = vmatpush1.msra.mxu0 0.0
      %387 = vmatprep.subr.mxu0 0.0
      %388 = vmatpush1.msra.mxu0 0.0
      %389 = vmatprep.subr.mxu0 0.0
      %390 = vmatpush1.msra.mxu0 0.0
      %391 = vmatprep.subr.mxu0 0.0
      %392 = vmatpush1.msra.mxu0 0.0
      %393 = vmatprep.subr.mxu0 0.0
      %394 = vmatpush1.msra.mxu0 0.0
      %395 = vmatprep.subr.mxu0 0.0
      %396 = vmatpush1.msra.mxu0 0.0
      %397 = vmatprep.subr.mxu0 0.0
      %398 = vmatpush1.msra.mxu0 0.0
      %399 = vmatprep.subr.mxu0 0.0
      %400 = vmatpush1.msra.mxu0 0.0
      %401 = vmatprep.subr.mxu0 0.0
      %402 = vmatpush1.msra.mxu0 0.0
      %403 = vmatprep.subr.mxu0 0.0
      %404 = vmatpush1.msra.mxu0 0.0
      %405 = vmatprep.subr.mxu0 0.0
      %406 = vmatpush1.msra.mxu0 0.0
      %407 = vmatprep.subr.mxu0 0.0
      %408 = vmatpush1.msra.mxu0 0.0
      %409 = vmatprep.subr.mxu0 0.0
      %410 = vmatpush1.msra.mxu0 0.0
      %411 = vmatprep.mubr.f32.mxu0 0.0
      %412 = vmatmul.mubr.f32.gmra.mrb[0].mxu0 %v317
      %v413 = vpop.f32.mrb[0].mxu0
      %v414 = vadd.f32 %v303, %v413
      %v415 = vpop.f32.mrb[0].mxu0
      %v416 = vadd.f32 %v303, %v415
      %417 = vmatprep.mubr.f32.mxu0 0.0
      %418 = vmatmul.mubr.f32.gmra.mrb[0].mxu0 %v320
      %v419 = vpop.f32.mrb[0].mxu0
      %v420 = vadd.f32 %v308, %v419
      %v421 = vpop.f32.mrb[0].mxu0
      %v422 = vadd.f32 %v308, %v421
      %423 = vmatprep.mubr.f32.mxu0 0.0
      %424 = vmatmul.mubr.f32.gmra.mrb[0].mxu0 %v323
      %v425 = vpop.f32.mrb[0].mxu0
      %v426 = vadd.f32 %v313, %v425
      %v427 = vpop.f32.mrb[0].mxu0
      %v428 = vadd.f32 %v313, %v427
      %429 = vdwg.mxu0
      %430 = vmatprep.subr.mxu0 %v279
      %431 = vmatpush1.msra.mxu0 %v278
      %432 = vmatprep.subr.mxu0 %v286
      %433 = vmatpush1.msra.mxu0 %v285
      %434 = vmatprep.subr.mxu0 %v336
      %435 = vmatpush1.msra.mxu0 %v333
      %436 = vmatprep.subr.mxu0 0.0
      %437 = vmatpush1.msra.mxu0 0.0
      %438 = vmatprep.subr.mxu0 0.0
      %439 = vmatpush1.msra.mxu0 0.0
      %440 = vmatprep.subr.mxu0 0.0
      %441 = vmatpush1.msra.mxu0 0.0
      %442 = vmatprep.subr.mxu0 0.0
      %443 = vmatpush1.msra.mxu0 0.0
      %444 = vmatprep.subr.mxu0 0.0
      %445 = vmatpush1.msra.mxu0 0.0
      %446 = vmatprep.subr.mxu0 0.0
      %447 = vmatpush1.msra.mxu0 0.0
      %448 = vmatprep.subr.mxu0 0.0
      %449 = vmatpush1.msra.mxu0 0.0
      %450 = vmatprep.subr.mxu0 0.0
      %451 = vmatpush1.msra.mxu0 0.0
      %452 = vmatprep.subr.mxu0 0.0
      %453 = vmatpush1.msra.mxu0 0.0
      %454 = vmatprep.subr.mxu0 0.0
      %455 = vmatpush1.msra.mxu0 0.0
      %456 = vmatprep.subr.mxu0 0.0
      %457 = vmatpush1.msra.mxu0 0.0
      %458 = vmatprep.subr.mxu0 0.0
      %459 = vmatpush1.msra.mxu0 0.0
      %460 = vmatprep.subr.mxu0 0.0
      %461 = vmatpush1.msra.mxu0 0.0
      %462 = vmatprep.subr.mxu0 0.0
      %463 = vmatpush1.msra.mxu0 0.0
      %464 = vmatprep.subr.mxu0 0.0
      %465 = vmatpush1.msra.mxu0 0.0
      %466 = vmatprep.subr.mxu0 0.0
      %467 = vmatpush1.msra.mxu0 0.0
      %468 = vmatprep.subr.mxu0 0.0
      %469 = vmatpush1.msra.mxu0 0.0
      %470 = vmatprep.subr.mxu0 0.0
      %471 = vmatpush1.msra.mxu0 0.0
      %472 = vmatprep.subr.mxu0 0.0
      %473 = vmatpush1.msra.mxu0 0.0
      %474 = vmatprep.subr.mxu0 0.0
      %475 = vmatpush1.msra.mxu0 0.0
      %476 = vmatprep.subr.mxu0 0.0
      %477 = vmatpush1.msra.mxu0 0.0
      %478 = vmatprep.subr.mxu0 0.0
      %479 = vmatpush1.msra.mxu0 0.0
      %480 = vmatprep.subr.mxu0 0.0
      %481 = vmatpush1.msra.mxu0 0.0
      %482 = vmatprep.subr.mxu0 0.0
      %483 = vmatpush1.msra.mxu0 0.0
      %484 = vmatprep.subr.mxu0 0.0
      %485 = vmatpush1.msra.mxu0 0.0
      %486 = vmatprep.subr.mxu0 0.0
      %487 = vmatpush1.msra.mxu0 0.0
      %488 = vmatprep.subr.mxu0 0.0
      %489 = vmatpush1.msra.mxu0 0.0
      %490 = vmatprep.subr.mxu0 0.0
      %491 = vmatpush1.msra.mxu0 0.0
      %492 = vmatprep.subr.mxu0 0.0
      %493 = vmatpush1.msra.mxu0 0.0
      %494 = vmatprep.mubr.f32.mxu0 0.0
      %495 = vmatmul.mubr.f32.gmra.mrb[0].mxu0 %v317
      %v496 = vpop.f32.mrb[0].mxu0
      %v497 = vadd.f32 %v303, %v496
      %v498 = vpop.f32.mrb[0].mxu0
      %v499 = vadd.f32 %v303, %v498
      %500 = vmatprep.mubr.f32.mxu0 0.0
      %501 = vmatmul.mubr.f32.gmra.mrb[0].mxu0 %v320
      %v502 = vpop.f32.mrb[0].mxu0
      %v503 = vadd.f32 %v308, %v502
      %v504 = vpop.f32.mrb[0].mxu0
      %v505 = vadd.f32 %v308, %v504
      %506 = vmatprep.mubr.f32.mxu0 0.0
      %507 = vmatmul.mubr.f32.gmra.mrb[0].mxu0 %v323
      %v508 = vpop.f32.mrb[0].mxu0
      %v509 = vadd.f32 %v313, %v508
      %v510 = vpop.f32.mrb[0].mxu0
      %v511 = vadd.f32 %v313, %v510
      %512 = vdwg.mxu0
      %513 = vmatprep.subr.mxu0 %v281
      %514 = vmatpush1.msra.mxu0 %v280
      %515 = vmatprep.subr.mxu0 %v288
      %516 = vmatpush1.msra.mxu0 %v287
      %517 = vmatprep.subr.mxu0 %v342
      %518 = vmatpush1.msra.mxu0 %v339
      %519 = vmatprep.subr.mxu0 0.0
      %520 = vmatpush1.msra.mxu0 0.0
      %521 = vmatprep.subr.mxu0 0.0
      %522 = vmatpush1.msra.mxu0 0.0
      %523 = vmatprep.subr.mxu0 0.0
      %524 = vmatpush1.msra.mxu0 0.0
      %525 = vmatprep.subr.mxu0 0.0
      %526 = vmatpush1.msra.mxu0 0.0
      %527 = vmatprep.subr.mxu0 0.0
      %528 = vmatpush1.msra.mxu0 0.0
      %529 = vmatprep.subr.mxu0 0.0
      %530 = vmatpush1.msra.mxu0 0.0
      %531 = vmatprep.subr.mxu0 0.0
      %532 = vmatpush1.msra.mxu0 0.0
      %533 = vmatprep.subr.mxu0 0.0
      %534 = vmatpush1.msra.mxu0 0.0
      %535 = vmatprep.subr.mxu0 0.0
      %536 = vmatpush1.msra.mxu0 0.0
      %537 = vmatprep.subr.mxu0 0.0
      %538 = vmatpush1.msra.mxu0 0.0
      %539 = vmatprep.subr.mxu0 0.0
      %540 = vmatpush1.msra.mxu0 0.0
      %541 = vmatprep.subr.mxu0 0.0
      %542 = vmatpush1.msra.mxu0 0.0
      %543 = vmatprep.subr.mxu0 0.0
      %544 = vmatpush1.msra.mxu0 0.0
      %545 = vmatprep.subr.mxu0 0.0
      %546 = vmatpush1.msra.mxu0 0.0
      %547 = vmatprep.subr.mxu0 0.0
      %548 = vmatpush1.msra.mxu0 0.0
      %549 = vmatprep.subr.mxu0 0.0
      %550 = vmatpush1.msra.mxu0 0.0
      %551 = vmatprep.subr.mxu0 0.0
      %552 = vmatpush1.msra.mxu0 0.0
      %553 = vmatprep.subr.mxu0 0.0
      %554 = vmatpush1.msra.mxu0 0.0
      %555 = vmatprep.subr.mxu0 0.0
      %556 = vmatpush1.msra.mxu0 0.0
      %557 = vmatprep.subr.mxu0 0.0
      %558 = vmatpush1.msra.mxu0 0.0
      %559 = vmatprep.subr.mxu0 0.0
      %560 = vmatpush1.msra.mxu0 0.0
      %561 = vmatprep.subr.mxu0 0.0
      %562 = vmatpush1.msra.mxu0 0.0
      %563 = vmatprep.subr.mxu0 0.0
      %564 = vmatpush1.msra.mxu0 0.0
      %565 = vmatprep.subr.mxu0 0.0
      %566 = vmatpush1.msra.mxu0 0.0
      %567 = vmatprep.subr.mxu0 0.0
      %568 = vmatpush1.msra.mxu0 0.0
      %569 = vmatprep.subr.mxu0 0.0
      %570 = vmatpush1.msra.mxu0 0.0
      %571 = vmatprep.subr.mxu0 0.0
      %572 = vmatpush1.msra.mxu0 0.0
      %573 = vmatprep.subr.mxu0 0.0
      %574 = vmatpush1.msra.mxu0 0.0
      %575 = vmatprep.subr.mxu0 0.0
      %576 = vmatpush1.msra.mxu0 0.0
      %577 = vmatprep.mubr.f32.mxu0 0.0
      %578 = vmatmul.mubr.f32.gmra.mrb[0].mxu0 %v317
      %v579 = vpop.f32.mrb[0].mxu0
      %v580 = vadd.f32 %v303, %v579
      %v581 = vpop.f32.mrb[0].mxu0
      %v582 = vadd.f32 %v303, %v581
      %583 = vmatprep.mubr.f32.mxu0 0.0
      %584 = vmatmul.mubr.f32.gmra.mrb[0].mxu0 %v320
      %v585 = vpop.f32.mrb[0].mxu0
      %v586 = vadd.f32 %v308, %v585
      %v587 = vpop.f32.mrb[0].mxu0
      %v588 = vadd.f32 %v308, %v587
      %589 = vmatprep.mubr.f32.mxu0 0.0
      %590 = vmatmul.mubr.f32.gmra.mrb[0].mxu0 %v323
      %v591 = vpop.f32.mrb[0].mxu0
      %v592 = vadd.f32 %v313, %v591
      %v593 = vpop.f32.mrb[0].mxu0
      %v594 = vadd.f32 %v313, %v593
      %595 = vdwg.mxu0
      %596 = vmatprep.subr.mxu0 0.0
      %597 = vmatpush1.msra.mxu0 %v282
      %598 = vmatprep.subr.mxu0 0.0
      %599 = vmatpush1.msra.mxu0 %v289
      %600 = vmatprep.subr.mxu0 0.0
      %601 = vmatpush1.msra.mxu0 %v345
      %602 = vmatprep.subr.mxu0 0.0
      %603 = vmatpush1.msra.mxu0 0.0
      %604 = vmatprep.subr.mxu0 0.0
      %605 = vmatpush1.msra.mxu0 0.0
      %606 = vmatprep.subr.mxu0 0.0
      %607 = vmatpush1.msra.mxu0 0.0
      %608 = vmatprep.subr.mxu0 0.0
      %609 = vmatpush1.msra.mxu0 0.0
      %610 = vmatprep.subr.mxu0 0.0
      %611 = vmatpush1.msra.mxu0 0.0
      %612 = vmatprep.subr.mxu0 0.0
      %613 = vmatpush1.msra.mxu0 0.0
      %614 = vmatprep.subr.mxu0 0.0
      %615 = vmatpush1.msra.mxu0 0.0
      %616 = vmatprep.subr.mxu0 0.0
      %617 = vmatpush1.msra.mxu0 0.0
      %618 = vmatprep.subr.mxu0 0.0
      %619 = vmatpush1.msra.mxu0 0.0
      %620 = vmatprep.subr.mxu0 0.0
      %621 = vmatpush1.msra.mxu0 0.0
      %622 = vmatprep.subr.mxu0 0.0
      %623 = vmatpush1.msra.mxu0 0.0
      %624 = vmatprep.subr.mxu0 0.0
      %625 = vmatpush1.msra.mxu0 0.0
      %626 = vmatprep.subr.mxu0 0.0
      %627 = vmatpush1.msra.mxu0 0.0
      %628 = vmatprep.subr.mxu0 0.0
      %629 = vmatpush1.msra.mxu0 0.0
      %630 = vmatprep.subr.mxu0 0.0
      %631 = vmatpush1.msra.mxu0 0.0
      %632 = vmatprep.subr.mxu0 0.0
      %633 = vmatpush1.msra.mxu0 0.0
      %634 = vmatprep.subr.mxu0 0.0
      %635 = vmatpush1.msra.mxu0 0.0
      %636 = vmatprep.subr.mxu0 0.0
      %637 = vmatpush1.msra.mxu0 0.0
      %638 = vmatprep.subr.mxu0 0.0
      %639 = vmatpush1.msra.mxu0 0.0
      %640 = vmatprep.subr.mxu0 0.0
      %641 = vmatpush1.msra.mxu0 0.0
      %642 = vmatprep.subr.mxu0 0.0
      %643 = vmatpush1.msra.mxu0 0.0
      %644 = vmatprep.subr.mxu0 0.0
      %645 = vmatpush1.msra.mxu0 0.0
      %646 = vmatprep.subr.mxu0 0.0
      %647 = vmatpush1.msra.mxu0 0.0
      %648 = vmatprep.subr.mxu0 0.0
      %649 = vmatpush1.msra.mxu0 0.0
      %650 = vmatprep.subr.mxu0 0.0
      %651 = vmatpush1.msra.mxu0 0.0
      %652 = vmatprep.subr.mxu0 0.0
      %653 = vmatpush1.msra.mxu0 0.0
      %654 = vmatprep.subr.mxu0 0.0
      %655 = vmatpush1.msra.mxu0 0.0
      %656 = vmatprep.subr.mxu0 0.0
      %657 = vmatpush1.msra.mxu0 0.0
      %658 = vmatprep.subr.mxu0 0.0
      %659 = vmatpush1.msra.mxu0 0.0
      %660 = vmatprep.mubr.f32.mxu0 0.0
      %661 = vmatmul.mubr.f32.gmra.mrb[0].mxu0 %v317
      %v662 = vpop.f32.mrb[0].mxu0
      %v663 = vadd.f32 %v303, %v662
      %v664 = vpop.f32.mrb[0].mxu0
      %665 = vmatprep.mubr.f32.mxu0 0.0
      %666 = vmatmul.mubr.f32.gmra.mrb[0].mxu0 %v320
      %v667 = vpop.f32.mrb[0].mxu0
      %v668 = vadd.f32 %v308, %v667
      %v669 = vpop.f32.mrb[0].mxu0
      %670 = vmatprep.mubr.f32.mxu0 0.0
      %671 = vmatmul.mubr.f32.gmra.mrb[0].mxu0 %v323
      %v672 = vpop.f32.mrb[0].mxu0
      %v673 = vadd.f32 %v313, %v672
      %v674 = vpop.f32.mrb[0].mxu0
      %675 = vdwg.mxu0
      %v676 = vld [vmem:[%s261] sm:$0xff]
      %v677 = vld [vmem:[%s261 + $0x8] sm:$0xff]
      %v678 = vld [vmem:[%s261 + $0x10] sm:$0xff]
      %v679 = vld [vmem:[%s261 + $0x18] sm:$0xff]
      %v680 = vld [vmem:[%s261 + $0x20] sm:$0xff]
      %v681 = vld [vmem:[%s261 + $0x28] sm:$0xff]
      %v682 = vld [vmem:[%s261 + $0x30] sm:$0xff]
      %v683 = vld [vmem:[%s261 + $0x38] sm:$0xff]
      %v684 = vld [vmem:[%s261 + $0x40] sm:$0xff]
      %v685 = vld [vmem:[%s261 + $0x48] sm:$0xff]
      %v686 = vld [vmem:[%s261 + $0x50] sm:$0xff]
      %v687 = vld [vmem:[%s261 + $0x58] sm:$0xff]
      %v688 = vld [vmem:[%s261 + $0x60] sm:$0xff]
      %v689 = vld [vmem:[%s261 + $0x68] sm:$0xff]
      %v690 = vld [vmem:[%s261 + $0x70] sm:$0xf]
      %v691 = vld [vmem:[%s261 + $0x78] sm:$0xf]
      %v692 = vld [vmem:[%s261 + $0x80] sm:$0xf]
      %v693 = vld [vmem:[%s261 + $0x88] sm:$0xf]
      %v694 = vld [vmem:[%s261 + $0x90] sm:$0xf]
      %v695 = vld [vmem:[%s261 + $0x98] sm:$0xf]
      %v696 = vld [vmem:[%s261 + $0xa0] sm:$0xf]
      %v697 = vadd.f32 %v414, %v676
      %v698 = vadd.f32 %v416, %v677
      %v699 = vadd.f32 %v497, %v678
      %v700 = vadd.f32 %v499, %v679
      %v701 = vadd.f32 %v580, %v680
      %v702 = vadd.f32 %v582, %v681
      %v703 = vadd.f32 %v663, %v682
      %v704 = vadd.f32 %v420, %v683
      %v705 = vadd.f32 %v422, %v684
      %v706 = vadd.f32 %v503, %v685
      %v707 = vadd.f32 %v505, %v686
      %v708 = vadd.f32 %v586, %v687
      %v709 = vadd.f32 %v588, %v688
      %v710 = vadd.f32 %v668, %v689
      %v711 = vadd.f32 %v426, %v690
      %v712 = vadd.f32 %v428, %v691
      %v713 = vadd.f32 %v509, %v692
      %v714 = vadd.f32 %v511, %v693
      %v715 = vadd.f32 %v592, %v694
      %v716 = vadd.f32 %v594, %v695
      %v717 = vadd.f32 %v673, %v696
      %718 = vst [vmem:[%s271] sm:$0xff] %v697
      %719 = vst [vmem:[%s271 + $0x8] sm:$0xff] %v698
      %720 = vst [vmem:[%s271 + $0x10] sm:$0xff] %v699
      %721 = vst [vmem:[%s271 + $0x18] sm:$0xff] %v700
      %722 = vst [vmem:[%s271 + $0x20] sm:$0xff] %v701
      %723 = vst [vmem:[%s271 + $0x28] sm:$0xff] %v702
      %724 = vst [vmem:[%s271 + $0x30] sm:$0xff] %v703
      %725 = vst [vmem:[%s271 + $0x38] sm:$0xff] %v704
      %726 = vst [vmem:[%s271 + $0x40] sm:$0xff] %v705
      %727 = vst [vmem:[%s271 + $0x48] sm:$0xff] %v706
      %728 = vst [vmem:[%s271 + $0x50] sm:$0xff] %v707
      %729 = vst [vmem:[%s271 + $0x58] sm:$0xff] %v708
      %730 = vst [vmem:[%s271 + $0x60] sm:$0xff] %v709
      %731 = vst [vmem:[%s271 + $0x68] sm:$0xff] %v710
      %732 = vst [vmem:[%s271 + $0x70] sm:$0xf] %v711
      %733 = vst [vmem:[%s271 + $0x78] sm:$0xf] %v712
      %734 = vst [vmem:[%s271 + $0x80] sm:$0xf] %v713
      %735 = vst [vmem:[%s271 + $0x88] sm:$0xf] %v714
      %736 = vst [vmem:[%s271 + $0x90] sm:$0xf] %v715
      %737 = vst [vmem:[%s271 + $0x98] sm:$0xf] %v716
      %738 = vst [vmem:[%s271 + $0xa0] sm:$0xf] %v717
      %s739 = smul.u32 7, %s20
      %p740 = scmp.lt.s32.totalorder %s19, 1
      %s741 = scalar_select %p740, %s19, 1
      %p742 = scmp.lt.s32.totalorder %s739, 6
      %s743 = scalar_select %p742, %s739, 6
      %s744 = smul.addr %s741, 21
      %s745 = sadd.s32 %s743, %s744
      %s746 = smul.addr %s745, 8
      %s747 = scalar_lea.vmem %s4, %s746
      // Predicated region
      $region37: #{fno3d_forward.11} parent=35 // pred_check
        %p748 = pneg %p145
      $region38: #{fno3d_forward.11} parent=35 // pred_check_branch
        %750 = sbr.rel (%p748) target = $region40
      $region39: #{fno3d_forward.11} parent=35 // pred_region
        %s751 = smul.u32 7, %s20
      $region40: #{fno3d_forward.11} parent=35 // pred_fallthru
        _
    $region36: #{fno3d_forward.11} parent=5 // pred_fallthru
      _
    %p752 = scmp.le.s32.totalorder 2, %s10
    // Predicated region
    $region41: #{fno3d_forward.11} parent=5 // pred_check
      %p753 = pneg %p752
    $region42: #{fno3d_forward.11} parent=5 // pred_check_branch
      %755 = sbr.rel (%p753) target = $region44
    $region43: #{fno3d_forward.11} parent=5 // pred_region
      %s756 = ssub.s32 %s10, 2
      // Predicated region
      $region45: #{fno3d_forward.11} parent=43 // pred_check
        %p757 = pneg %p151
      $region46: #{fno3d_forward.11} parent=43 // pred_check_branch
        %759 = sbr.rel (%p757) target = $region48
      $region47: #{fno3d_forward.11} parent=43 // pred_region
        %s760 = smul.u32 7, %s22
        %p761 = scmp.lt.s32.totalorder %s21, 1
        %s762 = scalar_select %p761, %s21, 1
        %p763 = scmp.lt.s32.totalorder %s760, 6
        %s764 = scalar_select %p763, %s760, 6
        %s765 = smul.addr %s762, 21
        %s766 = sadd.s32 %s764, %s765
        %s767 = smul.addr %s766, 8
        %s768 = scalar_lea.vmem %s4, %s767
      $region48: #{fno3d_forward.11} parent=43 // pred_fallthru
        _
    $region44: #{fno3d_forward.11} parent=5 // pred_fallthru
      _
  $region6: #{fno3d_forward.11} parent=0 // loop_footer
    %s14 = sadd.s32 1, %s10
  $region7: #{fno3d_forward.11} parent=0 // loop_footer_branch
    %9 = sbr.rel target = $region3
  $region8: #{fno3d_forward.11} parent=0 // loop_exit
    _

// kernel: fno3d_forward.12
$region0: #{fno3d_forward.12}
  #allocation0 [shape = 'u32[]', space=smem, size = 0x4, offset = 0x4, fixed_abs, tag = 'smem constant byte address 0x4 - core index']
  #allocation1 [shape = 'u32[144,128]{1,0:T(1,128)}', space=vmem, size = 0x12000, scoped, tag = 'internal scratch']
  %s0 = inlined_call_operand.vmem [shape: f32[2,20,512], index: 0, kind: input, shape index: {}]
  %s1 = inlined_call_operand.vmem [shape: f32[128,20], index: 1, kind: input, shape index: {}]
  %s2 = inlined_call_operand.vmem [shape: f32[128,1], index: 2, kind: input, shape index: {}]
  %s3 = inlined_call_operand.vmem [shape: f32[2,128,512], index: 3, kind: output, shape index: {}]
  %s4 = sld [smem:[#allocation0]]
  $region45: #{fno3d_forward.12} parent=0
    _
  %s6 = ssub.s32 1, %s4
  %s7 = scalar_select 0, %s6, %s4
  loop: start=0, step=1, limit=4
  $region2: #{fno3d_forward.12} parent=0 // loop_pre_header
    _
  $region3: #{fno3d_forward.12} parent=0 // loop_header
    %s9 = sphi 0, %s13
    %p10 = scmp.ge.s32.totalorder %s9, 4
    %s16 = sphi 0, %s28
    %s17 = sphi 0, %s24
    %s18 = sphi 0, %s16
    %s19 = sphi 0, %s17
    %s20 = sphi 0, %s18
    %s21 = sphi 0, %s19
    %s33 = sphi 0, %s35
    %s36 = sphi 0, %s33
    %s37 = sphi 0, %s36
    %s53 = sphi 0, %s37
    %s57 = sphi 0, %s57
    %s59 = sphi 0, %s57
    %s60 = sphi 0, %s59
    %s74 = sphi 0, %s60
    %s78 = sphi 0, %s78
    %s80 = sphi 0, %s78
    %s81 = sphi 0, %s80
    %s95 = sphi 0, %s81
    %s103 = sphi 0, %s105
    %s106 = sphi 0, %s103
    %s107 = sphi 0, %s106
    %s123 = sphi 0, %s107
  $region4: #{fno3d_forward.12} parent=0 // loop_header_branch
    %12 = sbr.rel (%p10) target = $region8
  $region5: #{fno3d_forward.12} parent=0 // loop_body
    %s14 = ssub.s32 %s9, 1
    %s15 = ssub.s32 %s9, 2
    %s22 = sadd.s32 1, %s17
    %p23 = scmp.ge.s32.totalorder %s22, 1
    %s24 = scalar_select %p23, 0, %s22
    %s25 = sadd.s32 1, %s16
    %s26 = scalar_select %p23, %s25, %s16
    %p27 = scmp.ge.s32.totalorder %s26, 2
    %s28 = scalar_select %p27, 0, %s26
    %s29 = ssub.s32 %s16, %s28
    %s30 = ssub.s32 %s17, %s24
    %s31 = sor.u32 %s29, %s30
    %p32 = scmp.eq.s32.totalorder %s31, 0
    %s34 = sadd.s32 %s33, 1
    %s35 = scalar_select %p32, %s33, %s34
    %p38 = pneg %p32
    %p39 = scmp.eq.s32.totalorder %s9, 1
    %p40 = por %p38, %p39
    %p41 = scmp.ne.s32.totalorder %s33, %s36
    %p42 = scmp.eq.s32.totalorder %s9, 0
    %p43 = por %p41, %p42
    %p44 = scmp.ne.s32.totalorder %s33, %s36
    %p45 = scmp.eq.s32.totalorder %s14, 1
    %p46 = por %p44, %p45
    %p47 = scmp.ne.s32.totalorder %s36, %s37
    %p48 = scmp.eq.s32.totalorder %s14, 0
    %p49 = por %p47, %p48
    %p50 = scmp.ne.s32.totalorder %s36, %s37
    %p51 = scmp.eq.s32.totalorder %s15, 1
    %p52 = por %p50, %p51
    %p54 = scmp.ne.s32.totalorder %s37, %s53
    %p55 = scmp.eq.s32.totalorder %s15, 0
    %p56 = por %p54, %p55
    %s58 = sadd.s32 %s57, 1
    %p61 = scmp.eq.s32.totalorder %s9, 1
    %p62 = scmp.ne.s32.totalorder %s57, %s59
    %p63 = scmp.eq.s32.totalorder %s9, 0
    %p64 = por %p62, %p63
    %p65 = scmp.ne.s32.totalorder %s57, %s59
    %p66 = scmp.eq.s32.totalorder %s14, 1
    %p67 = por %p65, %p66
    %p68 = scmp.ne.s32.totalorder %s59, %s60
    %p69 = scmp.eq.s32.totalorder %s14, 0
    %p70 = por %p68, %p69
    %p71 = scmp.ne.s32.totalorder %s59, %s60
    %p72 = scmp.eq.s32.totalorder %s15, 1
    %p73 = por %p71, %p72
    %p75 = scmp.ne.s32.totalorder %s60, %s74
    %p76 = scmp.eq.s32.totalorder %s15, 0
    %p77 = por %p75, %p76
    %s79 = sadd.s32 %s78, 1
    %p82 = scmp.eq.s32.totalorder %s9, 1
    %p83 = scmp.ne.s32.totalorder %s78, %s80
    %p84 = scmp.eq.s32.totalorder %s9, 0
    %p85 = por %p83, %p84
    %p86 = scmp.ne.s32.totalorder %s78, %s80
    %p87 = scmp.eq.s32.totalorder %s14, 1
    %p88 = por %p86, %p87
    %p89 = scmp.ne.s32.totalorder %s80, %s81
    %p90 = scmp.eq.s32.totalorder %s14, 0
    %p91 = por %p89, %p90
    %p92 = scmp.ne.s32.totalorder %s80, %s81
    %p93 = scmp.eq.s32.totalorder %s15, 1
    %p94 = por %p92, %p93
    %p96 = scmp.ne.s32.totalorder %s81, %s95
    %p97 = scmp.eq.s32.totalorder %s15, 0
    %p98 = por %p96, %p97
    %s99 = ssub.s32 %s16, %s28
    %s100 = ssub.s32 %s17, %s24
    %s101 = sor.u32 %s99, %s100
    %p102 = scmp.eq.s32.totalorder %s101, 0
    %s104 = sadd.s32 %s103, 1
    %s105 = scalar_select %p102, %s103, %s104
    %p108 = pneg %p102
    %p109 = scmp.eq.s32.totalorder %s9, 1
    %p110 = por %p108, %p109
    %p111 = scmp.ne.s32.totalorder %s103, %s106
    %p112 = scmp.eq.s32.totalorder %s9, 0
    %p113 = por %p111, %p112
    %p114 = scmp.ne.s32.totalorder %s103, %s106
    %p115 = scmp.eq.s32.totalorder %s14, 1
    %p116 = por %p114, %p115
    %p117 = scmp.ne.s32.totalorder %s106, %s107
    %p118 = scmp.eq.s32.totalorder %s14, 0
    %p119 = por %p117, %p118
    %p120 = scmp.ne.s32.totalorder %s106, %s107
    %p121 = scmp.eq.s32.totalorder %s15, 1
    %p122 = por %p120, %p121
    %p124 = scmp.ne.s32.totalorder %s107, %s123
    %p125 = scmp.eq.s32.totalorder %s15, 0
    %p126 = por %p124, %p125
    %p127 = scmp.le.s32.totalorder 1, %s9
    %p128 = scmp.lt.s32.totalorder %s9, 3
    %p129 = pnand %p127, %p128
    %p130 = pneg %p129
    // Predicated region
    $region9: #{fno3d_forward.12} parent=5 // pred_check
      _
    $region10: #{fno3d_forward.12} parent=5 // pred_check_branch
      %132 = sbr.rel (%p129) target = $region12
    $region11: #{fno3d_forward.12} parent=5 // pred_region
      %s133 = ssub.s32 %s9, 1
      // Predicated region
      $region13: #{fno3d_forward.12} parent=11 // pred_check
        %p134 = pneg %p70
      $region14: #{fno3d_forward.12} parent=11 // pred_check_branch
        %136 = sbr.rel (%p134) target = $region16
      $region15: #{fno3d_forward.12} parent=11 // pred_region
        _
      $region16: #{fno3d_forward.12} parent=11 // pred_fallthru
        _
      // Predicated region
      $region17: #{fno3d_forward.12} parent=11 // pred_check
        %p137 = pneg %p91
      $region18: #{fno3d_forward.12} parent=11 // pred_check_branch
        %139 = sbr.rel (%p137) target = $region20
      $region19: #{fno3d_forward.12} parent=11 // pred_region
        _
      $region20: #{fno3d_forward.12} parent=11 // pred_fallthru
        _
    $region12: #{fno3d_forward.12} parent=5 // pred_fallthru
      _
    %p140 = scmp.lt.s32.totalorder %s9, 2
    // Predicated region
    $region21: #{fno3d_forward.12} parent=5 // pred_check
      %p141 = pneg %p140
    $region22: #{fno3d_forward.12} parent=5 // pred_check_branch
      %143 = sbr.rel (%p141) target = $region24
    $region23: #{fno3d_forward.12} parent=5 // pred_region
      // Predicated region
      $region25: #{fno3d_forward.12} parent=23 // pred_check
        %p144 = pneg %p43
      $region26: #{fno3d_forward.12} parent=23 // pred_check_branch
        %146 = sbr.rel (%p144) target = $region28
      $region27: #{fno3d_forward.12} parent=23 // pred_region
        %s147 = smul.u32 4, %s17
        %p148 = scmp.lt.s32.totalorder %s16, 1
        %s149 = scalar_select %p148, %s16, 1
        %p150 = scmp.lt.s32.totalorder %s147, 3
        %s151 = scalar_select %p150, %s147, 3
        %s152 = smul.addr %s149, 12
        %s153 = sadd.s32 %s151, %s152
        %s154 = smul.addr %s153, 8
        %s155 = scalar_lea.vmem %s0, %s154
        %s156 = smul.u32 4, %s17
      $region28: #{fno3d_forward.12} parent=23 // pred_fallthru
        _
    $region24: #{fno3d_forward.12} parent=5 // pred_fallthru
      _
    %p157 = scmp.le.s32.totalorder 1, %s9
    %p158 = scmp.lt.s32.totalorder %s9, 3
    %p159 = pnand %p157, %p158
    %p160 = pneg %p159
    // Predicated region
    $region29: #{fno3d_forward.12} parent=5 // pred_check
      _
    $region30: #{fno3d_forward.12} parent=5 // pred_check_branch
      %162 = sbr.rel (%p159) target = $region32
    $region31: #{fno3d_forward.12} parent=5 // pred_region
      %s163 = ssub.s32 %s9, 1
      %s164 = smul.u32 4, %s19
      %p165 = scmp.lt.s32.totalorder %s18, 1
      %s166 = scalar_select %p165, %s18, 1
      %p167 = scmp.lt.s32.totalorder %s164, 3
      %s168 = scalar_select %p167, %s164, 3
      %s169 = smul.addr %s166, 12
      %s170 = sadd.s32 %s168, %s169
      %s171 = smul.addr %s170, 8
      %s172 = scalar_lea.vmem %s0, %s171
      %p173 = pneg %p49
      %p174 = pneg %p46
      %p175 = pneg %p70
      %p176 = pneg %p67
      %p177 = pneg %p91
      %p178 = pneg %p88
      %p179 = pneg %p119
      %p180 = pneg %p116
      %s181 = smul.u32 4, %s19
      %p182 = scmp.lt.s32.totalorder %s18, 1
      %s183 = scalar_select %p182, %s18, 1
      %p184 = scmp.lt.s32.totalorder %s181, 3
      %s185 = scalar_select %p184, %s181, 3
      %s186 = smul.addr %s183, 64
      %s187 = sadd.s32 %s185, %s186
      %s188 = smul.addr %s187, 8
      %s189 = scalar_lea.vmem %s3, %s188
      %s190 = smul.u32 4, %s19
      %p191 = scmp.lt.s32.totalorder %s18, 1
      %s192 = scalar_select %p191, %s18, 1
      %p193 = scmp.lt.s32.totalorder %s190, 3
      %s194 = scalar_select %p193, %s190, 3
      %s195 = smul.addr %s192, 12
      %s196 = sadd.s32 %s194, %s195
      %s197 = smul.addr %s196, 8
      %s198 = scalar_lea.vmem %s0, %s197
      %s199 = smul.u32 4, %s19
      %s200 = smul.u32 4, %s19
      %p201 = scmp.lt.s32.totalorder %s18, 1
      %s202 = scalar_select %p201, %s18, 1
      %p203 = scmp.lt.s32.totalorder %s200, 3
      %s204 = scalar_select %p203, %s200, 3
      %s205 = smul.addr %s202, 64
      %s206 = sadd.s32 %s204, %s205
      %s207 = smul.addr %s206, 8
      %s208 = scalar_lea.vmem %s3, %s207
      %s209 = smul.u32 4, %s19
      %v210 = vld [vmem:[%s1] sm:$0xff]
      %v211 = vld [vmem:[%s1 + $0x8] sm:$0xff]
      %v212 = vld [vmem:[%s1 + $0x10] sm:$0xff]
      %v213 = vld [vmem:[%s1 + $0x18] sm:$0xff]
      %v214 = vld [vmem:[%s1 + $0x20] sm:$0xff]
      %v215 = vld [vmem:[%s1 + $0x28] sm:$0xff]
      %v216 = vld [vmem:[%s1 + $0x30] sm:$0xff]
      %v217 = vld [vmem:[%s1 + $0x38] sm:$0xff]
      %v218 = vld [vmem:[%s1 + $0x40] sm:$0xff]
      %v219 = vld [vmem:[%s1 + $0x48] sm:$0xff]
      %v220 = vld [vmem:[%s1 + $0x50] sm:$0xff]
      %v221 = vld [vmem:[%s1 + $0x58] sm:$0xff]
      %v222 = vld [vmem:[%s1 + $0x60] sm:$0xff]
      %v223 = vld [vmem:[%s1 + $0x68] sm:$0xff]
      %v224 = vld [vmem:[%s1 + $0x70] sm:$0xff]
      %v225 = vld [vmem:[%s1 + $0x78] sm:$0xff]
      %v226 = vld [vmem:[%s198] sm:$0xff]
      %v227 = vld [vmem:[%s198 + $0x8] sm:$0xff]
      %v228 = vld [vmem:[%s198 + $0x10] sm:$0xff]
      %v229 = vld [vmem:[%s198 + $0x18] sm:$0xff]
      %v230 = vld [vmem:[%s198 + $0x20] sm:$0xff]
      %v231 = vld [vmem:[%s198 + $0x28] sm:$0xff]
      %v232 = vld [vmem:[%s198 + $0x30] sm:$0xff]
      %v233 = vld [vmem:[%s198 + $0x38] sm:$0xff]
      %v234 = vld [vmem:[%s198 + $0x40] sm:$0xf]
      %v235 = vld [vmem:[%s198 + $0x48] sm:$0xf]
      %v236 = vld [vmem:[%s198 + $0x50] sm:$0xf]
      %v237 = vld [vmem:[%s198 + $0x58] sm:$0xf]
      %v238 = vld [vmem:[%s2] sm:$0xff]
      %v239 = vld [vmem:[%s2 + $0x8] sm:$0xff]
      %v240 = vld [vmem:[%s2 + $0x10] sm:$0xff]
      %v241 = vld [vmem:[%s2 + $0x18] sm:$0xff]
      %v242 = vld [vmem:[%s2 + $0x20] sm:$0xff]
      %v243 = vld [vmem:[%s2 + $0x28] sm:$0xff]
      %v244 = vld [vmem:[%s2 + $0x30] sm:$0xff]
      %v245 = vld [vmem:[%s2 + $0x38] sm:$0xff]
      %v246 = vld [vmem:[%s2 + $0x40] sm:$0xff]
      %v247 = vld [vmem:[%s2 + $0x48] sm:$0xff]
      %v248 = vld [vmem:[%s2 + $0x50] sm:$0xff]
      %v249 = vld [vmem:[%s2 + $0x58] sm:$0xff]
      %v250 = vld [vmem:[%s2 + $0x60] sm:$0xff]
      %v251 = vld [vmem:[%s2 + $0x68] sm:$0xff]
      %v252 = vld [vmem:[%s2 + $0x70] sm:$0xff]
      %v253 = vld [vmem:[%s2 + $0x78] sm:$0xff]
      %255 = vset.pattern.permute.xlu0 0
      %256 = vperm.xlu0 %255, %v238
      %v257 = vpop.permute.xlu0 %256
      %260 = vset.pattern.permute.xlu0 0
      %261 = vperm.xlu0 %260, %v239
      %v262 = vpop.permute.xlu0 %261
      %265 = vset.pattern.permute.xlu0 0
      %266 = vperm.xlu0 %265, %v240
      %v267 = vpop.permute.xlu0 %266
      %270 = vset.pattern.permute.xlu0 0
      %271 = vperm.xlu0 %270, %v241
      %v272 = vpop.permute.xlu0 %271
      %275 = vset.pattern.permute.xlu0 0
      %276 = vperm.xlu0 %275, %v242
      %v277 = vpop.permute.xlu0 %276
      %280 = vset.pattern.permute.xlu0 0
      %281 = vperm.xlu0 %280, %v243
      %v282 = vpop.permute.xlu0 %281
      %285 = vset.pattern.permute.xlu0 0
      %286 = vperm.xlu0 %285, %v244
      %v287 = vpop.permute.xlu0 %286
      %290 = vset.pattern.permute.xlu0 0
      %291 = vperm.xlu0 %290, %v245
      %v292 = vpop.permute.xlu0 %291
      %295 = vset.pattern.permute.xlu0 0
      %296 = vperm.xlu0 %295, %v246
      %v297 = vpop.permute.xlu0 %296
      %300 = vset.pattern.permute.xlu0 0
      %301 = vperm.xlu0 %300, %v247
      %v302 = vpop.permute.xlu0 %301
      %305 = vset.pattern.permute.xlu0 0
      %306 = vperm.xlu0 %305, %v248
      %v307 = vpop.permute.xlu0 %306
      %310 = vset.pattern.permute.xlu0 0
      %311 = vperm.xlu0 %310, %v249
      %v312 = vpop.permute.xlu0 %311
      %315 = vset.pattern.permute.xlu0 0
      %316 = vperm.xlu0 %315, %v250
      %v317 = vpop.permute.xlu0 %316
      %320 = vset.pattern.permute.xlu0 0
      %321 = vperm.xlu0 %320, %v251
      %v322 = vpop.permute.xlu0 %321
      %325 = vset.pattern.permute.xlu0 0
      %326 = vperm.xlu0 %325, %v252
      %v327 = vpop.permute.xlu0 %326
      %330 = vset.pattern.permute.xlu0 0
      %331 = vperm.xlu0 %330, %v253
      %v332 = vpop.permute.xlu0 %331
      %vm334 = vcmask 162816
      %v336 = vsel %vm334, %v210, 0
      %v339 = vsel %vm334, %v211, 0
      %v342 = vsel %vm334, %v212, 0
      %v345 = vsel %vm334, %v213, 0
      %v348 = vsel %vm334, %v214, 0
      %v351 = vsel %vm334, %v215, 0
      %v354 = vsel %vm334, %v216, 0
      %v357 = vsel %vm334, %v217, 0
      %v360 = vsel %vm334, %v218, 0
      %v363 = vsel %vm334, %v219, 0
      %v366 = vsel %vm334, %v220, 0
      %v369 = vsel %vm334, %v221, 0
      %v372 = vsel %vm334, %v222, 0
      %v375 = vsel %vm334, %v223, 0
      %v378 = vsel %vm334, %v224, 0
      %v381 = vsel %vm334, %v225, 0
      %vm383 = vcmask 1043456
      %v385 = vsel %vm383, %v234, 0
      %v388 = vsel %vm383, %v235, 0
      %v391 = vsel %vm383, %v236, 0
      %v394 = vsel %vm383, %v237, 0
      %396 = vmatprep.subr.mxu0 %v227
      %397 = vmatpush1.msra.mxu0 %v226
      %398 = vmatprep.subr.mxu0 %v231
      %399 = vmatpush1.msra.mxu0 %v230
      %400 = vmatprep.subr.mxu0 %v388
      %401 = vmatpush1.msra.mxu0 %v385
      %402 = vmatprep.subr.mxu0 0.0
      %403 = vmatpush1.msra.mxu0 0.0
      %404 = vmatprep.subr.mxu0 0.0
      %405 = vmatpush1.msra.mxu0 0.0
      %406 = vmatprep.subr.mxu0 0.0
      %407 = vmatpush1.msra.mxu0 0.0
      %408 = vmatprep.subr.mxu0 0.0
      %409 = vmatpush1.msra.mxu0 0.0
      %410 = vmatprep.subr.mxu0 0.0
      %411 = vmatpush1.msra.mxu0 0.0
      %412 = vmatprep.subr.mxu0 0.0
      %413 = vmatpush1.msra.mxu0 0.0
      %414 = vmatprep.subr.mxu0 0.0
      %415 = vmatpush1.msra.mxu0 0.0
      %416 = vmatprep.subr.mxu0 0.0
      %417 = vmatpush1.msra.mxu0 0.0
      %418 = vmatprep.subr.mxu0 0.0
      %419 = vmatpush1.msra.mxu0 0.0
      %420 = vmatprep.subr.mxu0 0.0
      %421 = vmatpush1.msra.mxu0 0.0
      %422 = vmatprep.subr.mxu0 0.0
      %423 = vmatpush1.msra.mxu0 0.0
      %424 = vmatprep.subr.mxu0 0.0
      %425 = vmatpush1.msra.mxu0 0.0
      %426 = vmatprep.subr.mxu0 0.0
      %427 = vmatpush1.msra.mxu0 0.0
      %428 = vmatprep.subr.mxu0 0.0
      %429 = vmatpush1.msra.mxu0 0.0
      %430 = vmatprep.subr.mxu0 0.0
      %431 = vmatpush1.msra.mxu0 0.0
      %432 = vmatprep.subr.mxu0 0.0
      %433 = vmatpush1.msra.mxu0 0.0
      %434 = vmatprep.subr.mxu0 0.0
      %435 = vmatpush1.msra.mxu0 0.0
      %436 = vmatprep.subr.mxu0 0.0
      %437 = vmatpush1.msra.mxu0 0.0
      %438 = vmatprep.subr.mxu0 0.0
      %439 = vmatpush1.msra.mxu0 0.0
      %440 = vmatprep.subr.mxu0 0.0
      %441 = vmatpush1.msra.mxu0 0.0
      %442 = vmatprep.subr.mxu0 0.0
      %443 = vmatpush1.msra.mxu0 0.0
      %444 = vmatprep.subr.mxu0 0.0
      %445 = vmatpush1.msra.mxu0 0.0
      %446 = vmatprep.subr.mxu0 0.0
      %447 = vmatpush1.msra.mxu0 0.0
      %448 = vmatprep.subr.mxu0 0.0
      %449 = vmatpush1.msra.mxu0 0.0
      %450 = vmatprep.subr.mxu0 0.0
      %451 = vmatpush1.msra.mxu0 0.0
      %452 = vmatprep.subr.mxu0 0.0
      %453 = vmatpush1.msra.mxu0 0.0
      %454 = vmatprep.subr.mxu0 0.0
      %455 = vmatpush1.msra.mxu0 0.0
      %456 = vmatprep.subr.mxu0 0.0
      %457 = vmatpush1.msra.mxu0 0.0
      %458 = vmatprep.subr.mxu0 0.0
      %459 = vmatpush1.msra.mxu0 0.0
      %460 = vmatprep.mubr.f32.mxu0 0.0
      %461 = vmatmul.mubr.f32.gmra.mrb[0].mxu0 %v336
      %v462 = vpop.f32.mrb[0].mxu0
      %v463 = vadd.f32 %v257, %v462
      %v464 = vpop.f32.mrb[0].mxu0
      %v465 = vadd.f32 %v257, %v464
      %466 = vmatprep.mubr.f32.mxu0 0.0
      %467 = vmatmul.mubr.f32.gmra.mrb[0].mxu0 %v339
      %v468 = vpop.f32.mrb[0].mxu0
      %v469 = vadd.f32 %v262, %v468
      %v470 = vpop.f32.mrb[0].mxu0
      %v471 = vadd.f32 %v262, %v470
      %472 = vmatprep.mubr.f32.mxu0 0.0
      %473 = vmatmul.mubr.f32.gmra.mrb[0].mxu0 %v342
      %v474 = vpop.f32.mrb[0].mxu0
      %v475 = vadd.f32 %v267, %v474
      %v476 = vpop.f32.mrb[0].mxu0
      %v477 = vadd.f32 %v267, %v476
      %478 = vmatprep.mubr.f32.mxu0 0.0
      %479 = vmatmul.mubr.f32.gmra.mrb[0].mxu0 %v345
      %v480 = vpop.f32.mrb[0].mxu0
      %v481 = vadd.f32 %v272, %v480
      %v482 = vpop.f32.mrb[0].mxu0
      %v483 = vadd.f32 %v272, %v482
      %484 = vmatprep.mubr.f32.mxu0 0.0
      %485 = vmatmul.mubr.f32.gmra.mrb[0].mxu0 %v348
      %v486 = vpop.f32.mrb[0].mxu0
      %v487 = vadd.f32 %v277, %v486
      %v488 = vpop.f32.mrb[0].mxu0
      %v489 = vadd.f32 %v277, %v488
      %490 = vmatprep.mubr.f32.mxu0 0.0
      %491 = vmatmul.mubr.f32.gmra.mrb[0].mxu0 %v351
      %v492 = vpop.f32.mrb[0].mxu0
      %v493 = vadd.f32 %v282, %v492
      %v494 = vpop.f32.mrb[0].mxu0
      %v495 = vadd.f32 %v282, %v494
      %496 = vmatprep.mubr.f32.mxu0 0.0
      %497 = vmatmul.mubr.f32.gmra.mrb[0].mxu0 %v354
      %v498 = vpop.f32.mrb[0].mxu0
      %v499 = vadd.f32 %v287, %v498
      %v500 = vpop.f32.mrb[0].mxu0
      %v501 = vadd.f32 %v287, %v500
      %502 = vmatprep.mubr.f32.mxu0 0.0
      %503 = vmatmul.mubr.f32.gmra.mrb[0].mxu0 %v357
      %v504 = vpop.f32.mrb[0].mxu0
      %v505 = vadd.f32 %v292, %v504
      %v506 = vpop.f32.mrb[0].mxu0
      %v507 = vadd.f32 %v292, %v506
      %508 = vmatprep.mubr.f32.mxu0 0.0
      %509 = vmatmul.mubr.f32.gmra.mrb[0].mxu0 %v360
      %v510 = vpop.f32.mrb[0].mxu0
      %v511 = vadd.f32 %v297, %v510
      %v512 = vpop.f32.mrb[0].mxu0
      %v513 = vadd.f32 %v297, %v512
      %514 = vmatprep.mubr.f32.mxu0 0.0
      %515 = vmatmul.mubr.f32.gmra.mrb[0].mxu0 %v363
      %v516 = vpop.f32.mrb[0].mxu0
      %v517 = vadd.f32 %v302, %v516
      %v518 = vpop.f32.mrb[0].mxu0
      %v519 = vadd.f32 %v302, %v518
      %520 = vmatprep.mubr.f32.mxu0 0.0
      %521 = vmatmul.mubr.f32.gmra.mrb[0].mxu0 %v366
      %v522 = vpop.f32.mrb[0].mxu0
      %v523 = vadd.f32 %v307, %v522
      %v524 = vpop.f32.mrb[0].mxu0
      %v525 = vadd.f32 %v307, %v524
      %526 = vmatprep.mubr.f32.mxu0 0.0
      %527 = vmatmul.mubr.f32.gmra.mrb[0].mxu0 %v369
      %v528 = vpop.f32.mrb[0].mxu0
      %v529 = vadd.f32 %v312, %v528
      %v530 = vpop.f32.mrb[0].mxu0
      %v531 = vadd.f32 %v312, %v530
      %532 = vmatprep.mubr.f32.mxu0 0.0
      %533 = vmatmul.mubr.f32.gmra.mrb[0].mxu0 %v372
      %v534 = vpop.f32.mrb[0].mxu0
      %v535 = vadd.f32 %v317, %v534
      %v536 = vpop.f32.mrb[0].mxu0
      %v537 = vadd.f32 %v317, %v536
      %538 = vmatprep.mubr.f32.mxu0 0.0
      %539 = vmatmul.mubr.f32.gmra.mrb[0].mxu0 %v375
      %v540 = vpop.f32.mrb[0].mxu0
      %v541 = vadd.f32 %v322, %v540
      %v542 = vpop.f32.mrb[0].mxu0
      %v543 = vadd.f32 %v322, %v542
      %544 = vmatprep.mubr.f32.mxu0 0.0
      %545 = vmatmul.mubr.f32.gmra.mrb[0].mxu0 %v378
      %v546 = vpop.f32.mrb[0].mxu0
      %v547 = vadd.f32 %v327, %v546
      %v548 = vpop.f32.mrb[0].mxu0
      %v549 = vadd.f32 %v327, %v548
      %550 = vmatprep.mubr.f32.mxu0 0.0
      %551 = vmatmul.mubr.f32.gmra.mrb[0].mxu0 %v381
      %v552 = vpop.f32.mrb[0].mxu0
      %v553 = vadd.f32 %v332, %v552
      %v554 = vpop.f32.mrb[0].mxu0
      %v555 = vadd.f32 %v332, %v554
      %556 = vdwg.mxu0
      %557 = vmatprep.subr.mxu0 %v229
      %558 = vmatpush1.msra.mxu0 %v228
      %559 = vmatprep.subr.mxu0 %v233
      %560 = vmatpush1.msra.mxu0 %v232
      %561 = vmatprep.subr.mxu0 %v394
      %562 = vmatpush1.msra.mxu0 %v391
      %563 = vmatprep.subr.mxu0 0.0
      %564 = vmatpush1.msra.mxu0 0.0
      %565 = vmatprep.subr.mxu0 0.0
      %566 = vmatpush1.msra.mxu0 0.0
      %567 = vmatprep.subr.mxu0 0.0
      %568 = vmatpush1.msra.mxu0 0.0
      %569 = vmatprep.subr.mxu0 0.0
      %570 = vmatpush1.msra.mxu0 0.0
      %571 = vmatprep.subr.mxu0 0.0
      %572 = vmatpush1.msra.mxu0 0.0
      %573 = vmatprep.subr.mxu0 0.0
      %574 = vmatpush1.msra.mxu0 0.0
      %575 = vmatprep.subr.mxu0 0.0
      %576 = vmatpush1.msra.mxu0 0.0
      %577 = vmatprep.subr.mxu0 0.0
      %578 = vmatpush1.msra.mxu0 0.0
      %579 = vmatprep.subr.mxu0 0.0
      %580 = vmatpush1.msra.mxu0 0.0
      %581 = vmatprep.subr.mxu0 0.0
      %582 = vmatpush1.msra.mxu0 0.0
      %583 = vmatprep.subr.mxu0 0.0
      %584 = vmatpush1.msra.mxu0 0.0
      %585 = vmatprep.subr.mxu0 0.0
      %586 = vmatpush1.msra.mxu0 0.0
      %587 = vmatprep.subr.mxu0 0.0
      %588 = vmatpush1.msra.mxu0 0.0
      %589 = vmatprep.subr.mxu0 0.0
      %590 = vmatpush1.msra.mxu0 0.0
      %591 = vmatprep.subr.mxu0 0.0
      %592 = vmatpush1.msra.mxu0 0.0
      %593 = vmatprep.subr.mxu0 0.0
      %594 = vmatpush1.msra.mxu0 0.0
      %595 = vmatprep.subr.mxu0 0.0
      %596 = vmatpush1.msra.mxu0 0.0
      %597 = vmatprep.subr.mxu0 0.0
      %598 = vmatpush1.msra.mxu0 0.0
      %599 = vmatprep.subr.mxu0 0.0
      %600 = vmatpush1.msra.mxu0 0.0
      %601 = vmatprep.subr.mxu0 0.0
      %602 = vmatpush1.msra.mxu0 0.0
      %603 = vmatprep.subr.mxu0 0.0
      %604 = vmatpush1.msra.mxu0 0.0
      %605 = vmatprep.subr.mxu0 0.0
      %606 = vmatpush1.msra.mxu0 0.0
      %607 = vmatprep.subr.mxu0 0.0
      %608 = vmatpush1.msra.mxu0 0.0
      %609 = vmatprep.subr.mxu0 0.0
      %610 = vmatpush1.msra.mxu0 0.0
      %611 = vmatprep.subr.mxu0 0.0
      %612 = vmatpush1.msra.mxu0 0.0
      %613 = vmatprep.subr.mxu0 0.0
      %614 = vmatpush1.msra.mxu0 0.0
      %615 = vmatprep.subr.mxu0 0.0
      %616 = vmatpush1.msra.mxu0 0.0
      %617 = vmatprep.subr.mxu0 0.0
      %618 = vmatpush1.msra.mxu0 0.0
      %619 = vmatprep.subr.mxu0 0.0
      %620 = vmatpush1.msra.mxu0 0.0
      %621 = vmatprep.mubr.f32.mxu0 0.0
      %622 = vmatmul.mubr.f32.gmra.mrb[0].mxu0 %v336
      %v623 = vpop.f32.mrb[0].mxu0
      %v624 = vadd.f32 %v257, %v623
      %v625 = vpop.f32.mrb[0].mxu0
      %v626 = vadd.f32 %v257, %v625
      %627 = vmatprep.mubr.f32.mxu0 0.0
      %628 = vmatmul.mubr.f32.gmra.mrb[0].mxu0 %v339
      %v629 = vpop.f32.mrb[0].mxu0
      %v630 = vadd.f32 %v262, %v629
      %v631 = vpop.f32.mrb[0].mxu0
      %v632 = vadd.f32 %v262, %v631
      %633 = vmatprep.mubr.f32.mxu0 0.0
      %634 = vmatmul.mubr.f32.gmra.mrb[0].mxu0 %v342
      %v635 = vpop.f32.mrb[0].mxu0
      %v636 = vadd.f32 %v267, %v635
      %v637 = vpop.f32.mrb[0].mxu0
      %v638 = vadd.f32 %v267, %v637
      %639 = vmatprep.mubr.f32.mxu0 0.0
      %640 = vmatmul.mubr.f32.gmra.mrb[0].mxu0 %v345
      %v641 = vpop.f32.mrb[0].mxu0
      %v642 = vadd.f32 %v272, %v641
      %v643 = vpop.f32.mrb[0].mxu0
      %v644 = vadd.f32 %v272, %v643
      %645 = vmatprep.mubr.f32.mxu0 0.0
      %646 = vmatmul.mubr.f32.gmra.mrb[0].mxu0 %v348
      %v647 = vpop.f32.mrb[0].mxu0
      %v648 = vadd.f32 %v277, %v647
      %v649 = vpop.f32.mrb[0].mxu0
      %v650 = vadd.f32 %v277, %v649
      %651 = vmatprep.mubr.f32.mxu0 0.0
      %652 = vmatmul.mubr.f32.gmra.mrb[0].mxu0 %v351
      %v653 = vpop.f32.mrb[0].mxu0
      %v654 = vadd.f32 %v282, %v653
      %v655 = vpop.f32.mrb[0].mxu0
      %v656 = vadd.f32 %v282, %v655
      %657 = vmatprep.mubr.f32.mxu0 0.0
      %658 = vmatmul.mubr.f32.gmra.mrb[0].mxu0 %v354
      %v659 = vpop.f32.mrb[0].mxu0
      %v660 = vadd.f32 %v287, %v659
      %v661 = vpop.f32.mrb[0].mxu0
      %v662 = vadd.f32 %v287, %v661
      %663 = vmatprep.mubr.f32.mxu0 0.0
      %664 = vmatmul.mubr.f32.gmra.mrb[0].mxu0 %v357
      %v665 = vpop.f32.mrb[0].mxu0
      %v666 = vadd.f32 %v292, %v665
      %v667 = vpop.f32.mrb[0].mxu0
      %v668 = vadd.f32 %v292, %v667
      %669 = vmatprep.mubr.f32.mxu0 0.0
      %670 = vmatmul.mubr.f32.gmra.mrb[0].mxu0 %v360
      %v671 = vpop.f32.mrb[0].mxu0
      %v672 = vadd.f32 %v297, %v671
      %v673 = vpop.f32.mrb[0].mxu0
      %v674 = vadd.f32 %v297, %v673
      %675 = vmatprep.mubr.f32.mxu0 0.0
      %676 = vmatmul.mubr.f32.gmra.mrb[0].mxu0 %v363
      %v677 = vpop.f32.mrb[0].mxu0
      %v678 = vadd.f32 %v302, %v677
      %v679 = vpop.f32.mrb[0].mxu0
      %v680 = vadd.f32 %v302, %v679
      %681 = vmatprep.mubr.f32.mxu0 0.0
      %682 = vmatmul.mubr.f32.gmra.mrb[0].mxu0 %v366
      %v683 = vpop.f32.mrb[0].mxu0
      %v684 = vadd.f32 %v307, %v683
      %v685 = vpop.f32.mrb[0].mxu0
      %v686 = vadd.f32 %v307, %v685
      %687 = vmatprep.mubr.f32.mxu0 0.0
      %688 = vmatmul.mubr.f32.gmra.mrb[0].mxu0 %v369
      %v689 = vpop.f32.mrb[0].mxu0
      %v690 = vadd.f32 %v312, %v689
      %v691 = vpop.f32.mrb[0].mxu0
      %v692 = vadd.f32 %v312, %v691
      %693 = vmatprep.mubr.f32.mxu0 0.0
      %694 = vmatmul.mubr.f32.gmra.mrb[0].mxu0 %v372
      %v695 = vpop.f32.mrb[0].mxu0
      %v696 = vadd.f32 %v317, %v695
      %v697 = vpop.f32.mrb[0].mxu0
      %v698 = vadd.f32 %v317, %v697
      %699 = vmatprep.mubr.f32.mxu0 0.0
      %700 = vmatmul.mubr.f32.gmra.mrb[0].mxu0 %v375
      %v701 = vpop.f32.mrb[0].mxu0
      %v702 = vadd.f32 %v322, %v701
      %v703 = vpop.f32.mrb[0].mxu0
      %v704 = vadd.f32 %v322, %v703
      %705 = vmatprep.mubr.f32.mxu0 0.0
      %706 = vmatmul.mubr.f32.gmra.mrb[0].mxu0 %v378
      %v707 = vpop.f32.mrb[0].mxu0
      %v708 = vadd.f32 %v327, %v707
      %v709 = vpop.f32.mrb[0].mxu0
      %v710 = vadd.f32 %v327, %v709
      %711 = vmatprep.mubr.f32.mxu0 0.0
      %712 = vmatmul.mubr.f32.gmra.mrb[0].mxu0 %v381
      %v713 = vpop.f32.mrb[0].mxu0
      %v714 = vadd.f32 %v332, %v713
      %v715 = vpop.f32.mrb[0].mxu0
      %v716 = vadd.f32 %v332, %v715
      %717 = vdwg.mxu0
      %v718 = vmul.f32 %v463, 0.5
      %v719 = vmul.f32 %v465, 0.5
      %v720 = vmul.f32 %v624, 0.5
      %v721 = vmul.f32 %v626, 0.5
      %v722 = vmul.f32 %v469, 0.5
      %v723 = vmul.f32 %v471, 0.5
      %v724 = vmul.f32 %v630, 0.5
      %v725 = vmul.f32 %v632, 0.5
      %v726 = vmul.f32 %v475, 0.5
      %v727 = vmul.f32 %v477, 0.5
      %v728 = vmul.f32 %v636, 0.5
      %v729 = vmul.f32 %v638, 0.5
      %v730 = vmul.f32 %v481, 0.5
      %v731 = vmul.f32 %v483, 0.5
      %v732 = vmul.f32 %v642, 0.5
      %v733 = vmul.f32 %v644, 0.5
      %v734 = vmul.f32 %v487, 0.5
      %v735 = vmul.f32 %v489, 0.5
      %v736 = vmul.f32 %v648, 0.5
      %v737 = vmul.f32 %v650, 0.5
      %v738 = vmul.f32 %v493, 0.5
      %v739 = vmul.f32 %v495, 0.5
      %v740 = vmul.f32 %v654, 0.5
      %v741 = vmul.f32 %v656, 0.5
      %v742 = vmul.f32 %v499, 0.5
      %v743 = vmul.f32 %v501, 0.5
      %v744 = vmul.f32 %v660, 0.5
      %v745 = vmul.f32 %v662, 0.5
      %v746 = vmul.f32 %v505, 0.5
      %v747 = vmul.f32 %v507, 0.5
      %v748 = vmul.f32 %v666, 0.5
      %v749 = vmul.f32 %v668, 0.5
      %v750 = vmul.f32 %v511, 0.5
      %v751 = vmul.f32 %v513, 0.5
      %v752 = vmul.f32 %v672, 0.5
      %v753 = vmul.f32 %v674, 0.5
      %v754 = vmul.f32 %v517, 0.5
      %v755 = vmul.f32 %v519, 0.5
      %v756 = vmul.f32 %v678, 0.5
      %v757 = vmul.f32 %v680, 0.5
      %v758 = vmul.f32 %v523, 0.5
      %v759 = vmul.f32 %v525, 0.5
      %v760 = vmul.f32 %v684, 0.5
      %v761 = vmul.f32 %v686, 0.5
      %v762 = vmul.f32 %v529, 0.5
      %v763 = vmul.f32 %v531, 0.5
      %v764 = vmul.f32 %v690, 0.5
      %v765 = vmul.f32 %v692, 0.5
      %v766 = vmul.f32 %v535, 0.5
      %v767 = vmul.f32 %v537, 0.5
      %v768 = vmul.f32 %v696, 0.5
      %v769 = vmul.f32 %v698, 0.5
      %v770 = vmul.f32 %v541, 0.5
      %v771 = vmul.f32 %v543, 0.5
      %v772 = vmul.f32 %v702, 0.5
      %v773 = vmul.f32 %v704, 0.5
      %v774 = vmul.f32 %v547, 0.5
      %v775 = vmul.f32 %v549, 0.5
      %v776 = vmul.f32 %v708, 0.5
      %v777 = vmul.f32 %v710, 0.5
      %v778 = vmul.f32 %v553, 0.5
      %v779 = vmul.f32 %v555, 0.5
      %v780 = vmul.f32 %v714, 0.5
      %v781 = vmul.f32 %v716, 0.5
      %v782 = vmul.f32 %v463, 0.70710677
      %v783 = vmul.f32 %v465, 0.70710677
      %v784 = vmul.f32 %v624, 0.70710677
      %v785 = vmul.f32 %v626, 0.70710677
      %v786 = vmul.f32 %v469, 0.70710677
      %v787 = vmul.f32 %v471, 0.70710677
      %v788 = vmul.f32 %v630, 0.70710677
      %v789 = vmul.f32 %v632, 0.70710677
      %v790 = vmul.f32 %v475, 0.70710677
      %v791 = vmul.f32 %v477, 0.70710677
      %v792 = vmul.f32 %v636, 0.70710677
      %v793 = vmul.f32 %v638, 0.70710677
      %v794 = vmul.f32 %v481, 0.70710677
      %v795 = vmul.f32 %v483, 0.70710677
      %v796 = vmul.f32 %v642, 0.70710677
      %v797 = vmul.f32 %v644, 0.70710677
      %v798 = vmul.f32 %v487, 0.70710677
      %v799 = vmul.f32 %v489, 0.70710677
      %v800 = vmul.f32 %v648, 0.70710677
      %v801 = vmul.f32 %v650, 0.70710677
      %v802 = vmul.f32 %v493, 0.70710677
      %v803 = vmul.f32 %v495, 0.70710677
      %v804 = vmul.f32 %v654, 0.70710677
      %v805 = vmul.f32 %v656, 0.70710677
      %v806 = vmul.f32 %v499, 0.70710677
      %v807 = vmul.f32 %v501, 0.70710677
      %v808 = vmul.f32 %v660, 0.70710677
      %v809 = vmul.f32 %v662, 0.70710677
      %v810 = vmul.f32 %v505, 0.70710677
      %v811 = vmul.f32 %v507, 0.70710677
      %v812 = vmul.f32 %v666, 0.70710677
      %v813 = vmul.f32 %v668, 0.70710677
      %v814 = vmul.f32 %v511, 0.70710677
      %v815 = vmul.f32 %v513, 0.70710677
      %v816 = vmul.f32 %v672, 0.70710677
      %v817 = vmul.f32 %v674, 0.70710677
      %v818 = vmul.f32 %v517, 0.70710677
      %v819 = vmul.f32 %v519, 0.70710677
      %v820 = vmul.f32 %v678, 0.70710677
      %v821 = vmul.f32 %v680, 0.70710677
      %v822 = vmul.f32 %v523, 0.70710677
      %v823 = vmul.f32 %v525, 0.70710677
      %v824 = vmul.f32 %v684, 0.70710677
      %v825 = vmul.f32 %v686, 0.70710677
      %v826 = vmul.f32 %v529, 0.70710677
      %v827 = vmul.f32 %v531, 0.70710677
      %v828 = vmul.f32 %v690, 0.70710677
      %v829 = vmul.f32 %v692, 0.70710677
      %v830 = vmul.f32 %v535, 0.70710677
      %v831 = vmul.f32 %v537, 0.70710677
      %v832 = vmul.f32 %v696, 0.70710677
      %v833 = vmul.f32 %v698, 0.70710677
      %v834 = vmul.f32 %v541, 0.70710677
      %v835 = vmul.f32 %v543, 0.70710677
      %v836 = vmul.f32 %v702, 0.70710677
      %v837 = vmul.f32 %v704, 0.70710677
      %v838 = vmul.f32 %v547, 0.70710677
      %v839 = vmul.f32 %v549, 0.70710677
      %v840 = vmul.f32 %v708, 0.70710677
      %v841 = vmul.f32 %v710, 0.70710677
      %v842 = vmul.f32 %v553, 0.70710677
      %v843 = vmul.f32 %v555, 0.70710677
      %v844 = vmul.f32 %v714, 0.70710677
      %v845 = vmul.f32 %v716, 0.70710677
      %v846 = verf.f32.pop %v782
      %v847 = verf.f32.pop %v783
      %v848 = verf.f32.pop %v784
      %v849 = verf.f32.pop %v785
      %v850 = verf.f32.pop %v786
      %v851 = verf.f32.pop %v787
      %v852 = verf.f32.pop %v788
      %v853 = verf.f32.pop %v789
      %v854 = verf.f32.pop %v790
      %v855 = verf.f32.pop %v791
      %v856 = verf.f32.pop %v792
      %v857 = verf.f32.pop %v793
      %v858 = verf.f32.pop %v794
      %v859 = verf.f32.pop %v795
      %v860 = verf.f32.pop %v796
      %v861 = verf.f32.pop %v797
      %v862 = verf.f32.pop %v798
      %v863 = verf.f32.pop %v799
      %v864 = verf.f32.pop %v800
      %v865 = verf.f32.pop %v801
      %v866 = verf.f32.pop %v802
      %v867 = verf.f32.pop %v803
      %v868 = verf.f32.pop %v804
      %v869 = verf.f32.pop %v805
      %v870 = verf.f32.pop %v806
      %v871 = verf.f32.pop %v807
      %v872 = verf.f32.pop %v808
      %v873 = verf.f32.pop %v809
      %v874 = verf.f32.pop %v810
      %v875 = verf.f32.pop %v811
      %v876 = verf.f32.pop %v812
      %v877 = verf.f32.pop %v813
      %v878 = verf.f32.pop %v814
      %v879 = verf.f32.pop %v815
      %v880 = verf.f32.pop %v816
      %v881 = verf.f32.pop %v817
      %v882 = verf.f32.pop %v818
      %v883 = verf.f32.pop %v819
      %v884 = verf.f32.pop %v820
      %v885 = verf.f32.pop %v821
      %v886 = verf.f32.pop %v822
      %v887 = verf.f32.pop %v823
      %v888 = verf.f32.pop %v824
      %v889 = verf.f32.pop %v825
      %v890 = verf.f32.pop %v826
      %v891 = verf.f32.pop %v827
      %v892 = verf.f32.pop %v828
      %v893 = verf.f32.pop %v829
      %v894 = verf.f32.pop %v830
      %v895 = verf.f32.pop %v831
      %v896 = verf.f32.pop %v832
      %v897 = verf.f32.pop %v833
      %v898 = verf.f32.pop %v834
      %v899 = verf.f32.pop %v835
      %v900 = verf.f32.pop %v836
      %v901 = verf.f32.pop %v837
      %v902 = verf.f32.pop %v838
      %v903 = verf.f32.pop %v839
      %v904 = verf.f32.pop %v840
      %v905 = verf.f32.pop %v841
      %v906 = verf.f32.pop %v842
      %v907 = verf.f32.pop %v843
      %v908 = verf.f32.pop %v844
      %v909 = verf.f32.pop %v845
      %v910 = vadd.f32 %v846, 1.0
      %v911 = vadd.f32 %v847, 1.0
      %v912 = vadd.f32 %v848, 1.0
      %v913 = vadd.f32 %v849, 1.0
      %v914 = vadd.f32 %v850, 1.0
      %v915 = vadd.f32 %v851, 1.0
      %v916 = vadd.f32 %v852, 1.0
      %v917 = vadd.f32 %v853, 1.0
      %v918 = vadd.f32 %v854, 1.0
      %v919 = vadd.f32 %v855, 1.0
      %v920 = vadd.f32 %v856, 1.0
      %v921 = vadd.f32 %v857, 1.0
      %v922 = vadd.f32 %v858, 1.0
      %v923 = vadd.f32 %v859, 1.0
      %v924 = vadd.f32 %v860, 1.0
      %v925 = vadd.f32 %v861, 1.0
      %v926 = vadd.f32 %v862, 1.0
      %v927 = vadd.f32 %v863, 1.0
      %v928 = vadd.f32 %v864, 1.0
      %v929 = vadd.f32 %v865, 1.0
      %v930 = vadd.f32 %v866, 1.0
      %v931 = vadd.f32 %v867, 1.0
      %v932 = vadd.f32 %v868, 1.0
      %v933 = vadd.f32 %v869, 1.0
      %v934 = vadd.f32 %v870, 1.0
      %v935 = vadd.f32 %v871, 1.0
      %v936 = vadd.f32 %v872, 1.0
      %v937 = vadd.f32 %v873, 1.0
      %v938 = vadd.f32 %v874, 1.0
      %v939 = vadd.f32 %v875, 1.0
      %v940 = vadd.f32 %v876, 1.0
      %v941 = vadd.f32 %v877, 1.0
      %v942 = vadd.f32 %v878, 1.0
      %v943 = vadd.f32 %v879, 1.0
      %v944 = vadd.f32 %v880, 1.0
      %v945 = vadd.f32 %v881, 1.0
      %v946 = vadd.f32 %v882, 1.0
      %v947 = vadd.f32 %v883, 1.0
      %v948 = vadd.f32 %v884, 1.0
      %v949 = vadd.f32 %v885, 1.0
      %v950 = vadd.f32 %v886, 1.0
      %v951 = vadd.f32 %v887, 1.0
      %v952 = vadd.f32 %v888, 1.0
      %v953 = vadd.f32 %v889, 1.0
      %v954 = vadd.f32 %v890, 1.0
      %v955 = vadd.f32 %v891, 1.0
      %v956 = vadd.f32 %v892, 1.0
      %v957 = vadd.f32 %v893, 1.0
      %v958 = vadd.f32 %v894, 1.0
      %v959 = vadd.f32 %v895, 1.0
      %v960 = vadd.f32 %v896, 1.0
      %v961 = vadd.f32 %v897, 1.0
      %v962 = vadd.f32 %v898, 1.0
      %v963 = vadd.f32 %v899, 1.0
      %v964 = vadd.f32 %v900, 1.0
      %v965 = vadd.f32 %v901, 1.0
      %v966 = vadd.f32 %v902, 1.0
      %v967 = vadd.f32 %v903, 1.0
      %v968 = vadd.f32 %v904, 1.0
      %v969 = vadd.f32 %v905, 1.0
      %v970 = vadd.f32 %v906, 1.0
      %v971 = vadd.f32 %v907, 1.0
      %v972 = vadd.f32 %v908, 1.0
      %v973 = vadd.f32 %v909, 1.0
      %v974 = vmul.f32 %v718, %v910
      %v975 = vmul.f32 %v719, %v911
      %v976 = vmul.f32 %v720, %v912
      %v977 = vmul.f32 %v721, %v913
      %v978 = vmul.f32 %v722, %v914
      %v979 = vmul.f32 %v723, %v915
      %v980 = vmul.f32 %v724, %v916
      %v981 = vmul.f32 %v725, %v917
      %v982 = vmul.f32 %v726, %v918
      %v983 = vmul.f32 %v727, %v919
      %v984 = vmul.f32 %v728, %v920
      %v985 = vmul.f32 %v729, %v921
      %v986 = vmul.f32 %v730, %v922
      %v987 = vmul.f32 %v731, %v923
      %v988 = vmul.f32 %v732, %v924
      %v989 = vmul.f32 %v733, %v925
      %v990 = vmul.f32 %v734, %v926
      %v991 = vmul.f32 %v735, %v927
      %v992 = vmul.f32 %v736, %v928
      %v993 = vmul.f32 %v737, %v929
      %v994 = vmul.f32 %v738, %v930
      %v995 = vmul.f32 %v739, %v931
      %v996 = vmul.f32 %v740, %v932
      %v997 = vmul.f32 %v741, %v933
      %v998 = vmul.f32 %v742, %v934
      %v999 = vmul.f32 %v743, %v935
      %v1000 = vmul.f32 %v744, %v936
      %v1001 = vmul.f32 %v745, %v937
      %v1002 = vmul.f32 %v746, %v938
      %v1003 = vmul.f32 %v747, %v939
      %v1004 = vmul.f32 %v748, %v940
      %v1005 = vmul.f32 %v749, %v941
      %v1006 = vmul.f32 %v750, %v942
      %v1007 = vmul.f32 %v751, %v943
      %v1008 = vmul.f32 %v752, %v944
      %v1009 = vmul.f32 %v753, %v945
      %v1010 = vmul.f32 %v754, %v946
      %v1011 = vmul.f32 %v755, %v947
      %v1012 = vmul.f32 %v756, %v948
      %v1013 = vmul.f32 %v757, %v949
      %v1014 = vmul.f32 %v758, %v950
      %v1015 = vmul.f32 %v759, %v951
      %v1016 = vmul.f32 %v760, %v952
      %v1017 = vmul.f32 %v761, %v953
      %v1018 = vmul.f32 %v762, %v954
      %v1019 = vmul.f32 %v763, %v955
      %v1020 = vmul.f32 %v764, %v956
      %v1021 = vmul.f32 %v765, %v957
      %v1022 = vmul.f32 %v766, %v958
      %v1023 = vmul.f32 %v767, %v959
      %v1024 = vmul.f32 %v768, %v960
      %v1025 = vmul.f32 %v769, %v961
      %v1026 = vmul.f32 %v770, %v962
      %v1027 = vmul.f32 %v771, %v963
      %v1028 = vmul.f32 %v772, %v964
      %v1029 = vmul.f32 %v773, %v965
      %v1030 = vmul.f32 %v774, %v966
      %v1031 = vmul.f32 %v775, %v967
      %v1032 = vmul.f32 %v776, %v968
      %v1033 = vmul.f32 %v777, %v969
      %v1034 = vmul.f32 %v778, %v970
      %v1035 = vmul.f32 %v779, %v971
      %v1036 = vmul.f32 %v780, %v972
      %v1037 = vmul.f32 %v781, %v973
      %1038 = vst [vmem:[%s208] sm:$0xff] %v974
      %1039 = vst [vmem:[%s208 + $0x8] sm:$0xff] %v975
      %1040 = vst [vmem:[%s208 + $0x10] sm:$0xff] %v976
      %1041 = vst [vmem:[%s208 + $0x18] sm:$0xff] %v977
      %1042 = vst [vmem:[%s208 + $0x20] sm:$0xff] %v978
      %1043 = vst [vmem:[%s208 + $0x28] sm:$0xff] %v979
      %1044 = vst [vmem:[%s208 + $0x30] sm:$0xff] %v980
      %1045 = vst [vmem:[%s208 + $0x38] sm:$0xff] %v981
      %1046 = vst [vmem:[%s208 + $0x40] sm:$0xff] %v982
      %1047 = vst [vmem:[%s208 + $0x48] sm:$0xff] %v983
      %1048 = vst [vmem:[%s208 + $0x50] sm:$0xff] %v984
      %1049 = vst [vmem:[%s208 + $0x58] sm:$0xff] %v985
      %1050 = vst [vmem:[%s208 + $0x60] sm:$0xff] %v986
      %1051 = vst [vmem:[%s208 + $0x68] sm:$0xff] %v987
      %1052 = vst [vmem:[%s208 + $0x70] sm:$0xff] %v988
      %1053 = vst [vmem:[%s208 + $0x78] sm:$0xff] %v989
      %1054 = vst [vmem:[%s208 + $0x80] sm:$0xff] %v990
      %1055 = vst [vmem:[%s208 + $0x88] sm:$0xff] %v991
      %1056 = vst [vmem:[%s208 + $0x90] sm:$0xff] %v992
      %1057 = vst [vmem:[%s208 + $0x98] sm:$0xff] %v993
      %1058 = vst [vmem:[%s208 + $0xa0] sm:$0xff] %v994
      %1059 = vst [vmem:[%s208 + $0xa8] sm:$0xff] %v995
      %1060 = vst [vmem:[%s208 + $0xb0] sm:$0xff] %v996
      %1061 = vst [vmem:[%s208 + $0xb8] sm:$0xff] %v997
      %1062 = vst [vmem:[%s208 + $0xc0] sm:$0xff] %v998
      %1063 = vst [vmem:[%s208 + $0xc8] sm:$0xff] %v999
      %1064 = vst [vmem:[%s208 + $0xd0] sm:$0xff] %v1000
      %1065 = vst [vmem:[%s208 + $0xd8] sm:$0xff] %v1001
      %1066 = vst [vmem:[%s208 + $0xe0] sm:$0xff] %v1002
      %1067 = vst [vmem:[%s208 + $0xe8] sm:$0xff] %v1003
      %1068 = vst [vmem:[%s208 + $0xf0] sm:$0xff] %v1004
      %1069 = vst [vmem:[%s208 + $0xf8] sm:$0xff] %v1005
      %1070 = vst [vmem:[%s208 + $0x100] sm:$0xff] %v1006
      %1071 = vst [vmem:[%s208 + $0x108] sm:$0xff] %v1007
      %1072 = vst [vmem:[%s208 + $0x110] sm:$0xff] %v1008
      %1073 = vst [vmem:[%s208 + $0x118] sm:$0xff] %v1009
      %1074 = vst [vmem:[%s208 + $0x120] sm:$0xff] %v1010
      %1075 = vst [vmem:[%s208 + $0x128] sm:$0xff] %v1011
      %1076 = vst [vmem:[%s208 + $0x130] sm:$0xff] %v1012
      %1077 = vst [vmem:[%s208 + $0x138] sm:$0xff] %v1013
      %1078 = vst [vmem:[%s208 + $0x140] sm:$0xff] %v1014
      %1079 = vst [vmem:[%s208 + $0x148] sm:$0xff] %v1015
      %1080 = vst [vmem:[%s208 + $0x150] sm:$0xff] %v1016
      %1081 = vst [vmem:[%s208 + $0x158] sm:$0xff] %v1017
      %1082 = vst [vmem:[%s208 + $0x160] sm:$0xff] %v1018
      %1083 = vst [vmem:[%s208 + $0x168] sm:$0xff] %v1019
      %1084 = vst [vmem:[%s208 + $0x170] sm:$0xff] %v1020
      %1085 = vst [vmem:[%s208 + $0x178] sm:$0xff] %v1021
      %1086 = vst [vmem:[%s208 + $0x180] sm:$0xff] %v1022
      %1087 = vst [vmem:[%s208 + $0x188] sm:$0xff] %v1023
      %1088 = vst [vmem:[%s208 + $0x190] sm:$0xff] %v1024
      %1089 = vst [vmem:[%s208 + $0x198] sm:$0xff] %v1025
      %1090 = vst [vmem:[%s208 + $0x1a0] sm:$0xff] %v1026
      %1091 = vst [vmem:[%s208 + $0x1a8] sm:$0xff] %v1027
      %1092 = vst [vmem:[%s208 + $0x1b0] sm:$0xff] %v1028
      %1093 = vst [vmem:[%s208 + $0x1b8] sm:$0xff] %v1029
      %1094 = vst [vmem:[%s208 + $0x1c0] sm:$0xff] %v1030
      %1095 = vst [vmem:[%s208 + $0x1c8] sm:$0xff] %v1031
      %1096 = vst [vmem:[%s208 + $0x1d0] sm:$0xff] %v1032
      %1097 = vst [vmem:[%s208 + $0x1d8] sm:$0xff] %v1033
      %1098 = vst [vmem:[%s208 + $0x1e0] sm:$0xff] %v1034
      %1099 = vst [vmem:[%s208 + $0x1e8] sm:$0xff] %v1035
      %1100 = vst [vmem:[%s208 + $0x1f0] sm:$0xff] %v1036
      %1101 = vst [vmem:[%s208 + $0x1f8] sm:$0xff] %v1037
      %s1102 = smul.u32 4, %s19
      %p1103 = scmp.lt.s32.totalorder %s18, 1
      %s1104 = scalar_select %p1103, %s18, 1
      %p1105 = scmp.lt.s32.totalorder %s1102, 3
      %s1106 = scalar_select %p1105, %s1102, 3
      %s1107 = smul.addr %s1104, 64
      %s1108 = sadd.s32 %s1106, %s1107
      %s1109 = smul.addr %s1108, 8
      %s1110 = scalar_lea.vmem %s3, %s1109
      // Predicated region
      $region33: #{fno3d_forward.12} parent=31 // pred_check
        %p1111 = pneg %p116
      $region34: #{fno3d_forward.12} parent=31 // pred_check_branch
        %1113 = sbr.rel (%p1111) target = $region36
      $region35: #{fno3d_forward.12} parent=31 // pred_region
        %s1114 = smul.u32 4, %s19
      $region36: #{fno3d_forward.12} parent=31 // pred_fallthru
        _
    $region32: #{fno3d_forward.12} parent=5 // pred_fallthru
      _
    %p1115 = scmp.le.s32.totalorder 2, %s9
    // Predicated region
    $region37: #{fno3d_forward.12} parent=5 // pred_check
      %p1116 = pneg %p1115
    $region38: #{fno3d_forward.12} parent=5 // pred_check_branch
      %1118 = sbr.rel (%p1116) target = $region40
    $region39: #{fno3d_forward.12} parent=5 // pred_region
      %s1119 = ssub.s32 %s9, 2
      // Predicated region
      $region41: #{fno3d_forward.12} parent=39 // pred_check
        %p1120 = pneg %p122
      $region42: #{fno3d_forward.12} parent=39 // pred_check_branch
        %1122 = sbr.rel (%p1120) target = $region44
      $region43: #{fno3d_forward.12} parent=39 // pred_region
        %s1123 = smul.u32 4, %s21
        %p1124 = scmp.lt.s32.totalorder %s20, 1
        %s1125 = scalar_select %p1124, %s20, 1
        %p1126 = scmp.lt.s32.totalorder %s1123, 3
        %s1127 = scalar_select %p1126, %s1123, 3
        %s1128 = smul.addr %s1125, 64
        %s1129 = sadd.s32 %s1127, %s1128
        %s1130 = smul.addr %s1129, 8
        %s1131 = scalar_lea.vmem %s3, %s1130
      $region44: #{fno3d_forward.12} parent=39 // pred_fallthru
        _
    $region40: #{fno3d_forward.12} parent=5 // pred_fallthru
      _
  $region6: #{fno3d_forward.12} parent=0 // loop_footer
    %s13 = sadd.s32 1, %s9
  $region7: #{fno3d_forward.12} parent=0 // loop_footer_branch
    %8 = sbr.rel target = $region3
  $region8: #{fno3d_forward.12} parent=0 // loop_exit
    _

// kernel: fno3d_forward.13
$region0: #{fno3d_forward.13}
  #allocation0 [shape = 'u32[]', space=smem, size = 0x4, offset = 0x4, fixed_abs, tag = 'smem constant byte address 0x4 - core index']
  #allocation1 [shape = 'u32[144,128]{1,0:T(1,128)}', space=vmem, size = 0x12000, scoped, tag = 'internal scratch']
  %s0 = inlined_call_operand.vmem [shape: f32[2,128,512], index: 0, kind: input, shape index: {}]
  %s1 = inlined_call_operand.vmem [shape: f32[4,128], index: 1, kind: input, shape index: {}]
  %s2 = inlined_call_operand.vmem [shape: f32[4,1], index: 2, kind: input, shape index: {}]
  %s3 = inlined_call_operand.vmem [shape: f32[2,4,512], index: 3, kind: output, shape index: {}]
  %s4 = sld [smem:[#allocation0]]
  $region45: #{fno3d_forward.13} parent=0
    _
  %s6 = ssub.s32 1, %s4
  %s7 = scalar_select 0, %s6, %s4
  loop: start=0, step=1, limit=4
  $region2: #{fno3d_forward.13} parent=0 // loop_pre_header
    _
  $region3: #{fno3d_forward.13} parent=0 // loop_header
    %s9 = sphi 0, %s13
    %p10 = scmp.ge.s32.totalorder %s9, 4
    %s16 = sphi 0, %s28
    %s17 = sphi 0, %s24
    %s18 = sphi 0, %s16
    %s19 = sphi 0, %s17
    %s20 = sphi 0, %s18
    %s21 = sphi 0, %s19
    %s33 = sphi 0, %s35
    %s36 = sphi 0, %s33
    %s37 = sphi 0, %s36
    %s53 = sphi 0, %s37
    %s57 = sphi 0, %s57
    %s59 = sphi 0, %s57
    %s60 = sphi 0, %s59
    %s74 = sphi 0, %s60
    %s78 = sphi 0, %s78
    %s80 = sphi 0, %s78
    %s81 = sphi 0, %s80
    %s95 = sphi 0, %s81
    %s103 = sphi 0, %s105
    %s106 = sphi 0, %s103
    %s107 = sphi 0, %s106
    %s123 = sphi 0, %s107
  $region4: #{fno3d_forward.13} parent=0 // loop_header_branch
    %12 = sbr.rel (%p10) target = $region8
  $region5: #{fno3d_forward.13} parent=0 // loop_body
    %s14 = ssub.s32 %s9, 1
    %s15 = ssub.s32 %s9, 2
    %s22 = sadd.s32 1, %s17
    %p23 = scmp.ge.s32.totalorder %s22, 1
    %s24 = scalar_select %p23, 0, %s22
    %s25 = sadd.s32 1, %s16
    %s26 = scalar_select %p23, %s25, %s16
    %p27 = scmp.ge.s32.totalorder %s26, 2
    %s28 = scalar_select %p27, 0, %s26
    %s29 = ssub.s32 %s16, %s28
    %s30 = ssub.s32 %s17, %s24
    %s31 = sor.u32 %s29, %s30
    %p32 = scmp.eq.s32.totalorder %s31, 0
    %s34 = sadd.s32 %s33, 1
    %s35 = scalar_select %p32, %s33, %s34
    %p38 = pneg %p32
    %p39 = scmp.eq.s32.totalorder %s9, 1
    %p40 = por %p38, %p39
    %p41 = scmp.ne.s32.totalorder %s33, %s36
    %p42 = scmp.eq.s32.totalorder %s9, 0
    %p43 = por %p41, %p42
    %p44 = scmp.ne.s32.totalorder %s33, %s36
    %p45 = scmp.eq.s32.totalorder %s14, 1
    %p46 = por %p44, %p45
    %p47 = scmp.ne.s32.totalorder %s36, %s37
    %p48 = scmp.eq.s32.totalorder %s14, 0
    %p49 = por %p47, %p48
    %p50 = scmp.ne.s32.totalorder %s36, %s37
    %p51 = scmp.eq.s32.totalorder %s15, 1
    %p52 = por %p50, %p51
    %p54 = scmp.ne.s32.totalorder %s37, %s53
    %p55 = scmp.eq.s32.totalorder %s15, 0
    %p56 = por %p54, %p55
    %s58 = sadd.s32 %s57, 1
    %p61 = scmp.eq.s32.totalorder %s9, 1
    %p62 = scmp.ne.s32.totalorder %s57, %s59
    %p63 = scmp.eq.s32.totalorder %s9, 0
    %p64 = por %p62, %p63
    %p65 = scmp.ne.s32.totalorder %s57, %s59
    %p66 = scmp.eq.s32.totalorder %s14, 1
    %p67 = por %p65, %p66
    %p68 = scmp.ne.s32.totalorder %s59, %s60
    %p69 = scmp.eq.s32.totalorder %s14, 0
    %p70 = por %p68, %p69
    %p71 = scmp.ne.s32.totalorder %s59, %s60
    %p72 = scmp.eq.s32.totalorder %s15, 1
    %p73 = por %p71, %p72
    %p75 = scmp.ne.s32.totalorder %s60, %s74
    %p76 = scmp.eq.s32.totalorder %s15, 0
    %p77 = por %p75, %p76
    %s79 = sadd.s32 %s78, 1
    %p82 = scmp.eq.s32.totalorder %s9, 1
    %p83 = scmp.ne.s32.totalorder %s78, %s80
    %p84 = scmp.eq.s32.totalorder %s9, 0
    %p85 = por %p83, %p84
    %p86 = scmp.ne.s32.totalorder %s78, %s80
    %p87 = scmp.eq.s32.totalorder %s14, 1
    %p88 = por %p86, %p87
    %p89 = scmp.ne.s32.totalorder %s80, %s81
    %p90 = scmp.eq.s32.totalorder %s14, 0
    %p91 = por %p89, %p90
    %p92 = scmp.ne.s32.totalorder %s80, %s81
    %p93 = scmp.eq.s32.totalorder %s15, 1
    %p94 = por %p92, %p93
    %p96 = scmp.ne.s32.totalorder %s81, %s95
    %p97 = scmp.eq.s32.totalorder %s15, 0
    %p98 = por %p96, %p97
    %s99 = ssub.s32 %s16, %s28
    %s100 = ssub.s32 %s17, %s24
    %s101 = sor.u32 %s99, %s100
    %p102 = scmp.eq.s32.totalorder %s101, 0
    %s104 = sadd.s32 %s103, 1
    %s105 = scalar_select %p102, %s103, %s104
    %p108 = pneg %p102
    %p109 = scmp.eq.s32.totalorder %s9, 1
    %p110 = por %p108, %p109
    %p111 = scmp.ne.s32.totalorder %s103, %s106
    %p112 = scmp.eq.s32.totalorder %s9, 0
    %p113 = por %p111, %p112
    %p114 = scmp.ne.s32.totalorder %s103, %s106
    %p115 = scmp.eq.s32.totalorder %s14, 1
    %p116 = por %p114, %p115
    %p117 = scmp.ne.s32.totalorder %s106, %s107
    %p118 = scmp.eq.s32.totalorder %s14, 0
    %p119 = por %p117, %p118
    %p120 = scmp.ne.s32.totalorder %s106, %s107
    %p121 = scmp.eq.s32.totalorder %s15, 1
    %p122 = por %p120, %p121
    %p124 = scmp.ne.s32.totalorder %s107, %s123
    %p125 = scmp.eq.s32.totalorder %s15, 0
    %p126 = por %p124, %p125
    %p127 = scmp.le.s32.totalorder 1, %s9
    %p128 = scmp.lt.s32.totalorder %s9, 3
    %p129 = pnand %p127, %p128
    %p130 = pneg %p129
    // Predicated region
    $region9: #{fno3d_forward.13} parent=5 // pred_check
      _
    $region10: #{fno3d_forward.13} parent=5 // pred_check_branch
      %132 = sbr.rel (%p129) target = $region12
    $region11: #{fno3d_forward.13} parent=5 // pred_region
      %s133 = ssub.s32 %s9, 1
      // Predicated region
      $region13: #{fno3d_forward.13} parent=11 // pred_check
        %p134 = pneg %p70
      $region14: #{fno3d_forward.13} parent=11 // pred_check_branch
        %136 = sbr.rel (%p134) target = $region16
      $region15: #{fno3d_forward.13} parent=11 // pred_region
        _
      $region16: #{fno3d_forward.13} parent=11 // pred_fallthru
        _
      // Predicated region
      $region17: #{fno3d_forward.13} parent=11 // pred_check
        %p137 = pneg %p91
      $region18: #{fno3d_forward.13} parent=11 // pred_check_branch
        %139 = sbr.rel (%p137) target = $region20
      $region19: #{fno3d_forward.13} parent=11 // pred_region
        _
      $region20: #{fno3d_forward.13} parent=11 // pred_fallthru
        _
    $region12: #{fno3d_forward.13} parent=5 // pred_fallthru
      _
    %p140 = scmp.lt.s32.totalorder %s9, 2
    // Predicated region
    $region21: #{fno3d_forward.13} parent=5 // pred_check
      %p141 = pneg %p140
    $region22: #{fno3d_forward.13} parent=5 // pred_check_branch
      %143 = sbr.rel (%p141) target = $region24
    $region23: #{fno3d_forward.13} parent=5 // pred_region
      // Predicated region
      $region25: #{fno3d_forward.13} parent=23 // pred_check
        %p144 = pneg %p43
      $region26: #{fno3d_forward.13} parent=23 // pred_check_branch
        %146 = sbr.rel (%p144) target = $region28
      $region27: #{fno3d_forward.13} parent=23 // pred_region
        %s147 = smul.u32 4, %s17
        %p148 = scmp.lt.s32.totalorder %s16, 1
        %s149 = scalar_select %p148, %s16, 1
        %p150 = scmp.lt.s32.totalorder %s147, 3
        %s151 = scalar_select %p150, %s147, 3
        %s152 = smul.addr %s149, 64
        %s153 = sadd.s32 %s151, %s152
        %s154 = smul.addr %s153, 8
        %s155 = scalar_lea.vmem %s0, %s154
        %s156 = smul.u32 4, %s17
      $region28: #{fno3d_forward.13} parent=23 // pred_fallthru
        _
    $region24: #{fno3d_forward.13} parent=5 // pred_fallthru
      _
    %p157 = scmp.le.s32.totalorder 1, %s9
    %p158 = scmp.lt.s32.totalorder %s9, 3
    %p159 = pnand %p157, %p158
    %p160 = pneg %p159
    // Predicated region
    $region29: #{fno3d_forward.13} parent=5 // pred_check
      _
    $region30: #{fno3d_forward.13} parent=5 // pred_check_branch
      %162 = sbr.rel (%p159) target = $region32
    $region31: #{fno3d_forward.13} parent=5 // pred_region
      %s163 = ssub.s32 %s9, 1
      %s164 = smul.u32 4, %s19
      %p165 = scmp.lt.s32.totalorder %s18, 1
      %s166 = scalar_select %p165, %s18, 1
      %p167 = scmp.lt.s32.totalorder %s164, 3
      %s168 = scalar_select %p167, %s164, 3
      %s169 = smul.addr %s166, 64
      %s170 = sadd.s32 %s168, %s169
      %s171 = smul.addr %s170, 8
      %s172 = scalar_lea.vmem %s0, %s171
      %p173 = pneg %p49
      %p174 = pneg %p46
      %p175 = pneg %p70
      %p176 = pneg %p67
      %p177 = pneg %p91
      %p178 = pneg %p88
      %p179 = pneg %p119
      %p180 = pneg %p116
      %s181 = smul.u32 4, %s19
      %p182 = scmp.lt.s32.totalorder %s18, 1
      %s183 = scalar_select %p182, %s18, 1
      %p184 = scmp.lt.s32.totalorder %s181, 3
      %s185 = scalar_select %p184, %s181, 3
      %s186 = smul.addr %s183, 4
      %s187 = sadd.s32 %s185, %s186
      %s188 = smul.addr %s187, 4
      %s189 = scalar_lea.vmem %s3, %s188
      %s190 = smul.u32 4, %s19
      %p191 = scmp.lt.s32.totalorder %s18, 1
      %s192 = scalar_select %p191, %s18, 1
      %p193 = scmp.lt.s32.totalorder %s190, 3
      %s194 = scalar_select %p193, %s190, 3
      %s195 = smul.addr %s192, 64
      %s196 = sadd.s32 %s194, %s195
      %s197 = smul.addr %s196, 8
      %s198 = scalar_lea.vmem %s0, %s197
      %s199 = smul.u32 4, %s19
      %s200 = smul.u32 4, %s19
      %p201 = scmp.lt.s32.totalorder %s18, 1
      %s202 = scalar_select %p201, %s18, 1
      %p203 = scmp.lt.s32.totalorder %s200, 3
      %s204 = scalar_select %p203, %s200, 3
      %s205 = smul.addr %s202, 4
      %s206 = sadd.s32 %s204, %s205
      %s207 = smul.addr %s206, 4
      %s208 = scalar_lea.vmem %s3, %s207
      %s209 = smul.u32 4, %s19
      %v210 = vld [vmem:[%s1] sm:$0xf]
      %v211 = vld [vmem:[%s198] sm:$0xff]
      %v212 = vld [vmem:[%s198 + $0x8] sm:$0xff]
      %v213 = vld [vmem:[%s198 + $0x10] sm:$0xff]
      %v214 = vld [vmem:[%s198 + $0x18] sm:$0xff]
      %v215 = vld [vmem:[%s198 + $0x20] sm:$0xff]
      %v216 = vld [vmem:[%s198 + $0x28] sm:$0xff]
      %v217 = vld [vmem:[%s198 + $0x30] sm:$0xff]
      %v218 = vld [vmem:[%s198 + $0x38] sm:$0xff]
      %v219 = vld [vmem:[%s198 + $0x40] sm:$0xff]
      %v220 = vld [vmem:[%s198 + $0x48] sm:$0xff]
      %v221 = vld [vmem:[%s198 + $0x50] sm:$0xff]
      %v222 = vld [vmem:[%s198 + $0x58] sm:$0xff]
      %v223 = vld [vmem:[%s198 + $0x60] sm:$0xff]
      %v224 = vld [vmem:[%s198 + $0x68] sm:$0xff]
      %v225 = vld [vmem:[%s198 + $0x70] sm:$0xff]
      %v226 = vld [vmem:[%s198 + $0x78] sm:$0xff]
      %v227 = vld [vmem:[%s198 + $0x80] sm:$0xff]
      %v228 = vld [vmem:[%s198 + $0x88] sm:$0xff]
      %v229 = vld [vmem:[%s198 + $0x90] sm:$0xff]
      %v230 = vld [vmem:[%s198 + $0x98] sm:$0xff]
      %v231 = vld [vmem:[%s198 + $0xa0] sm:$0xff]
      %v232 = vld [vmem:[%s198 + $0xa8] sm:$0xff]
      %v233 = vld [vmem:[%s198 + $0xb0] sm:$0xff]
      %v234 = vld [vmem:[%s198 + $0xb8] sm:$0xff]
      %v235 = vld [vmem:[%s198 + $0xc0] sm:$0xff]
      %v236 = vld [vmem:[%s198 + $0xc8] sm:$0xff]
      %v237 = vld [vmem:[%s198 + $0xd0] sm:$0xff]
      %v238 = vld [vmem:[%s198 + $0xd8] sm:$0xff]
      %v239 = vld [vmem:[%s198 + $0xe0] sm:$0xff]
      %v240 = vld [vmem:[%s198 + $0xe8] sm:$0xff]
      %v241 = vld [vmem:[%s198 + $0xf0] sm:$0xff]
      %v242 = vld [vmem:[%s198 + $0xf8] sm:$0xff]
      %v243 = vld [vmem:[%s198 + $0x100] sm:$0xff]
      %v244 = vld [vmem:[%s198 + $0x108] sm:$0xff]
      %v245 = vld [vmem:[%s198 + $0x110] sm:$0xff]
      %v246 = vld [vmem:[%s198 + $0x118] sm:$0xff]
      %v247 = vld [vmem:[%s198 + $0x120] sm:$0xff]
      %v248 = vld [vmem:[%s198 + $0x128] sm:$0xff]
      %v249 = vld [vmem:[%s198 + $0x130] sm:$0xff]
      %v250 = vld [vmem:[%s198 + $0x138] sm:$0xff]
      %v251 = vld [vmem:[%s198 + $0x140] sm:$0xff]
      %v252 = vld [vmem:[%s198 + $0x148] sm:$0xff]
      %v253 = vld [vmem:[%s198 + $0x150] sm:$0xff]
      %v254 = vld [vmem:[%s198 + $0x158] sm:$0xff]
      %v255 = vld [vmem:[%s198 + $0x160] sm:$0xff]
      %v256 = vld [vmem:[%s198 + $0x168] sm:$0xff]
      %v257 = vld [vmem:[%s198 + $0x170] sm:$0xff]
      %v258 = vld [vmem:[%s198 + $0x178] sm:$0xff]
      %v259 = vld [vmem:[%s198 + $0x180] sm:$0xff]
      %v260 = vld [vmem:[%s198 + $0x188] sm:$0xff]
      %v261 = vld [vmem:[%s198 + $0x190] sm:$0xff]
      %v262 = vld [vmem:[%s198 + $0x198] sm:$0xff]
      %v263 = vld [vmem:[%s198 + $0x1a0] sm:$0xff]
      %v264 = vld [vmem:[%s198 + $0x1a8] sm:$0xff]
      %v265 = vld [vmem:[%s198 + $0x1b0] sm:$0xff]
      %v266 = vld [vmem:[%s198 + $0x1b8] sm:$0xff]
      %v267 = vld [vmem:[%s198 + $0x1c0] sm:$0xff]
      %v268 = vld [vmem:[%s198 + $0x1c8] sm:$0xff]
      %v269 = vld [vmem:[%s198 + $0x1d0] sm:$0xff]
      %v270 = vld [vmem:[%s198 + $0x1d8] sm:$0xff]
      %v271 = vld [vmem:[%s198 + $0x1e0] sm:$0xff]
      %v272 = vld [vmem:[%s198 + $0x1e8] sm:$0xff]
      %v273 = vld [vmem:[%s198 + $0x1f0] sm:$0xff]
      %v274 = vld [vmem:[%s198 + $0x1f8] sm:$0xff]
      %v275 = vld [vmem:[%s2] sm:$0xf]
      %277 = vset.pattern.permute.xlu0 0
      %278 = vperm.xlu0 %277, %v275
      %v279 = vpop.permute.xlu0 %278
      %281 = vmatprep.subr.mxu0 %v212
      %282 = vmatpush1.msra.mxu0 %v211
      %283 = vmatprep.subr.mxu0 %v216
      %284 = vmatpush1.msra.mxu0 %v215
      %285 = vmatprep.subr.mxu0 %v220
      %286 = vmatpush1.msra.mxu0 %v219
      %287 = vmatprep.subr.mxu0 %v224
      %288 = vmatpush1.msra.mxu0 %v223
      %289 = vmatprep.subr.mxu0 %v228
      %290 = vmatpush1.msra.mxu0 %v227
      %291 = vmatprep.subr.mxu0 %v232
      %292 = vmatpush1.msra.mxu0 %v231
      %293 = vmatprep.subr.mxu0 %v236
      %294 = vmatpush1.msra.mxu0 %v235
      %295 = vmatprep.subr.mxu0 %v240
      %296 = vmatpush1.msra.mxu0 %v239
      %297 = vmatprep.subr.mxu0 %v244
      %298 = vmatpush1.msra.mxu0 %v243
      %299 = vmatprep.subr.mxu0 %v248
      %300 = vmatpush1.msra.mxu0 %v247
      %301 = vmatprep.subr.mxu0 %v252
      %302 = vmatpush1.msra.mxu0 %v251
      %303 = vmatprep.subr.mxu0 %v256
      %304 = vmatpush1.msra.mxu0 %v255
      %305 = vmatprep.subr.mxu0 %v260
      %306 = vmatpush1.msra.mxu0 %v259
      %307 = vmatprep.subr.mxu0 %v264
      %308 = vmatpush1.msra.mxu0 %v263
      %309 = vmatprep.subr.mxu0 %v268
      %310 = vmatpush1.msra.mxu0 %v267
      %311 = vmatprep.subr.mxu0 %v272
      %312 = vmatpush1.msra.mxu0 %v271
      %313 = vmatprep.subr.mxu0 0.0
      %314 = vmatpush1.msra.mxu0 0.0
      %315 = vmatprep.subr.mxu0 0.0
      %316 = vmatpush1.msra.mxu0 0.0
      %317 = vmatprep.subr.mxu0 0.0
      %318 = vmatpush1.msra.mxu0 0.0
      %319 = vmatprep.subr.mxu0 0.0
      %320 = vmatpush1.msra.mxu0 0.0
      %321 = vmatprep.subr.mxu0 0.0
      %322 = vmatpush1.msra.mxu0 0.0
      %323 = vmatprep.subr.mxu0 0.0
      %324 = vmatpush1.msra.mxu0 0.0
      %325 = vmatprep.subr.mxu0 0.0
      %326 = vmatpush1.msra.mxu0 0.0
      %327 = vmatprep.subr.mxu0 0.0
      %328 = vmatpush1.msra.mxu0 0.0
      %329 = vmatprep.subr.mxu0 0.0
      %330 = vmatpush1.msra.mxu0 0.0
      %331 = vmatprep.subr.mxu0 0.0
      %332 = vmatpush1.msra.mxu0 0.0
      %333 = vmatprep.subr.mxu0 0.0
      %334 = vmatpush1.msra.mxu0 0.0
      %335 = vmatprep.subr.mxu0 0.0
      %336 = vmatpush1.msra.mxu0 0.0
      %337 = vmatprep.subr.mxu0 0.0
      %338 = vmatpush1.msra.mxu0 0.0
      %339 = vmatprep.subr.mxu0 0.0
      %340 = vmatpush1.msra.mxu0 0.0
      %341 = vmatprep.subr.mxu0 0.0
      %342 = vmatpush1.msra.mxu0 0.0
      %343 = vmatprep.subr.mxu0 0.0
      %344 = vmatpush1.msra.mxu0 0.0
      %345 = vmatprep.mubr.f32.mxu0 0.0
      %346 = vmatmul.mubr.f32.gmra.mrb[0].mxu0 %v210
      %v347 = vpop.f32.mrb[0].mxu0
      %v348 = vadd.f32 %v279, %v347
      %v349 = vpop.f32.mrb[0].mxu0
      %v350 = vadd.f32 %v279, %v349
      %351 = vdwg.mxu0
      %352 = vmatprep.subr.mxu0 %v214
      %353 = vmatpush1.msra.mxu0 %v213
      %354 = vmatprep.subr.mxu0 %v218
      %355 = vmatpush1.msra.mxu0 %v217
      %356 = vmatprep.subr.mxu0 %v222
      %357 = vmatpush1.msra.mxu0 %v221
      %358 = vmatprep.subr.mxu0 %v226
      %359 = vmatpush1.msra.mxu0 %v225
      %360 = vmatprep.subr.mxu0 %v230
      %361 = vmatpush1.msra.mxu0 %v229
      %362 = vmatprep.subr.mxu0 %v234
      %363 = vmatpush1.msra.mxu0 %v233
      %364 = vmatprep.subr.mxu0 %v238
      %365 = vmatpush1.msra.mxu0 %v237
      %366 = vmatprep.subr.mxu0 %v242
      %367 = vmatpush1.msra.mxu0 %v241
      %368 = vmatprep.subr.mxu0 %v246
      %369 = vmatpush1.msra.mxu0 %v245
      %370 = vmatprep.subr.mxu0 %v250
      %371 = vmatpush1.msra.mxu0 %v249
      %372 = vmatprep.subr.mxu0 %v254
      %373 = vmatpush1.msra.mxu0 %v253
      %374 = vmatprep.subr.mxu0 %v258
      %375 = vmatpush1.msra.mxu0 %v257
      %376 = vmatprep.subr.mxu0 %v262
      %377 = vmatpush1.msra.mxu0 %v261
      %378 = vmatprep.subr.mxu0 %v266
      %379 = vmatpush1.msra.mxu0 %v265
      %380 = vmatprep.subr.mxu0 %v270
      %381 = vmatpush1.msra.mxu0 %v269
      %382 = vmatprep.subr.mxu0 %v274
      %383 = vmatpush1.msra.mxu0 %v273
      %384 = vmatprep.subr.mxu0 0.0
      %385 = vmatpush1.msra.mxu0 0.0
      %386 = vmatprep.subr.mxu0 0.0
      %387 = vmatpush1.msra.mxu0 0.0
      %388 = vmatprep.subr.mxu0 0.0
      %389 = vmatpush1.msra.mxu0 0.0
      %390 = vmatprep.subr.mxu0 0.0
      %391 = vmatpush1.msra.mxu0 0.0
      %392 = vmatprep.subr.mxu0 0.0
      %393 = vmatpush1.msra.mxu0 0.0
      %394 = vmatprep.subr.mxu0 0.0
      %395 = vmatpush1.msra.mxu0 0.0
      %396 = vmatprep.subr.mxu0 0.0
      %397 = vmatpush1.msra.mxu0 0.0
      %398 = vmatprep.subr.mxu0 0.0
      %399 = vmatpush1.msra.mxu0 0.0
      %400 = vmatprep.subr.mxu0 0.0
      %401 = vmatpush1.msra.mxu0 0.0
      %402 = vmatprep.subr.mxu0 0.0
      %403 = vmatpush1.msra.mxu0 0.0
      %404 = vmatprep.subr.mxu0 0.0
      %405 = vmatpush1.msra.mxu0 0.0
      %406 = vmatprep.subr.mxu0 0.0
      %407 = vmatpush1.msra.mxu0 0.0
      %408 = vmatprep.subr.mxu0 0.0
      %409 = vmatpush1.msra.mxu0 0.0
      %410 = vmatprep.subr.mxu0 0.0
      %411 = vmatpush1.msra.mxu0 0.0
      %412 = vmatprep.subr.mxu0 0.0
      %413 = vmatpush1.msra.mxu0 0.0
      %414 = vmatprep.subr.mxu0 0.0
      %415 = vmatpush1.msra.mxu0 0.0
      %416 = vmatprep.mubr.f32.mxu0 0.0
      %417 = vmatmul.mubr.f32.gmra.mrb[0].mxu0 %v210
      %v418 = vpop.f32.mrb[0].mxu0
      %v419 = vadd.f32 %v279, %v418
      %v420 = vpop.f32.mrb[0].mxu0
      %v421 = vadd.f32 %v279, %v420
      %422 = vdwg.mxu0
      %v427 = vcombine.low %v348, %v350
      %v428 = vcombine.low %v419, %v421
      %431 = vst [vmem:[%s208] sm:$0xff] %v427
      %432 = vst [vmem:[%s208 + $0x8] sm:$0xff] %v428
      %s433 = smul.u32 4, %s19
      %p434 = scmp.lt.s32.totalorder %s18, 1
      %s435 = scalar_select %p434, %s18, 1
      %p436 = scmp.lt.s32.totalorder %s433, 3
      %s437 = scalar_select %p436, %s433, 3
      %s438 = smul.addr %s435, 4
      %s439 = sadd.s32 %s437, %s438
      %s440 = smul.addr %s439, 4
      %s441 = scalar_lea.vmem %s3, %s440
      // Predicated region
      $region33: #{fno3d_forward.13} parent=31 // pred_check
        %p442 = pneg %p116
      $region34: #{fno3d_forward.13} parent=31 // pred_check_branch
        %444 = sbr.rel (%p442) target = $region36
      $region35: #{fno3d_forward.13} parent=31 // pred_region
        %s445 = smul.u32 4, %s19
      $region36: #{fno3d_forward.13} parent=31 // pred_fallthru
        _
    $region32: #{fno3d_forward.13} parent=5 // pred_fallthru
      _
    %p446 = scmp.le.s32.totalorder 2, %s9
    // Predicated region
    $region37: #{fno3d_forward.13} parent=5 // pred_check
      %p447 = pneg %p446
    $region38: #{fno3d_forward.13} parent=5 // pred_check_branch
      %449 = sbr.rel (%p447) target = $region40
    $region39: #{fno3d_forward.13} parent=5 // pred_region
      %s450 = ssub.s32 %s9, 2
      // Predicated region
      $region41: #{fno3d_forward.13} parent=39 // pred_check
        %p451 = pneg %p122
      $region42: #{fno3d_forward.13} parent=39 // pred_check_branch
        %453 = sbr.rel (%p451) target = $region44
      $region43: #{fno3d_forward.13} parent=39 // pred_region
        %s454 = smul.u32 4, %s21
        %p455 = scmp.lt.s32.totalorder %s20, 1
        %s456 = scalar_select %p455, %s20, 1
        %p457 = scmp.lt.s32.totalorder %s454, 3
        %s458 = scalar_select %p457, %s454, 3
        %s459 = smul.addr %s456, 4
        %s460 = sadd.s32 %s458, %s459
        %s461 = smul.addr %s460, 4
        %s462 = scalar_lea.vmem %s3, %s461
      $region44: #{fno3d_forward.13} parent=39 // pred_fallthru
        _
    $region40: #{fno3d_forward.13} parent=5 // pred_fallthru
      _
  $region6: #{fno3d_forward.13} parent=0 // loop_footer
    %s13 = sadd.s32 1, %s9
  $region7: #{fno3d_forward.13} parent=0 // loop_footer_branch
    %8 = sbr.rel target = $region3
  $region8: #{fno3d_forward.13} parent=0 // loop_exit
    _

</llo_original>
